<compile_context>
chip_gen: v6e
topology: v6e:2x2x1
jax: 0.10.0
libtpu: 0.0.40
codegen_flags: <defaults>
</compile_context>

<pallas_src>
import functools

import jax
import jax.numpy as jnp
from jax.experimental import pallas as pl
from jax.experimental.pallas import tpu as pltpu

LANE = 128


# ------------------------------ small helpers --------------------------------

def _round_up(x, m):
    return (x + m - 1) // m * m


def _pad2d(x, rows, cols):
    return jnp.pad(x, ((0, rows - x.shape[0]), (0, cols - x.shape[1])))


def _vmem_capacity_bytes():
    """Per-core VMEM capacity (generation aware) with a conservative fallback."""
    try:
        info = pltpu.get_tpu_info()
        cap = getattr(info, "vmem_capacity_bytes", None)
        if cap:
            return int(min(int(cap), 128 << 20))
    except Exception:
        pass
    return 64 << 20            # v7x per-core figure: the safe lower bound


def _resident_spec(block_shape, index_map):
    """BlockSpec for a grid-invariant operand: single-buffered (halves VMEM).

    Falls back to a plain BlockSpec if this jax build lacks pipeline_mode.
    """
    try:
        return pl.BlockSpec(block_shape, index_map, pipeline_mode=pl.Buffered(1))
    except Exception:
        return pl.BlockSpec(block_shape, index_map)


def _fused_vmem_bytes(n_pad, f_pad, hid_pad, n_conv):
    """Rough VMEM footprint of the fused single-launch path (with headroom)."""
    return (2 * n_pad * n_pad              # adj bf16 (single buffered)
            + 2 * n_pad * f_pad            # x bf16
            + 2 * n_conv * f_pad * f_pad   # W stack bf16
            + 4 * n_conv * f_pad           # biases f32
            + 2 * 4 * n_pad * hid_pad      # f32 output (assume double buffer)
            + 2 * n_pad * f_pad            # H scratch bf16
            + 4 * n_pad * f_pad)           # f32 temporaries headroom


def _choose_tiles(n, tile_n_req=None):
    """Generation-aware tile sizes; N is padded up instead of shrinking tiles."""
    cap = _vmem_capacity_bytes()
    tile_n = tile_n_req if tile_n_req is not None else (
        512 if cap >= (96 << 20) else 256)          # 512 on v5e/v6e, 256 on v7x
    tile_n = min(tile_n, _round_up(n, LANE))
    tile_n = max(LANE, _round_up(tile_n, LANE))
    tile_k = 256 if tile_n % 256 == 0 else LANE
    tile_k = min(tile_k, tile_n)
    n_pad = _round_up(n, tile_n)                    # tile_k divides tile_n
    return n_pad, tile_n, tile_k


# ------------------------- fused whole-encoder kernel -------------------------

def fused_encoder_kernel(adj_ref, x_ref, w_ref, b_ref, o_ref, h_ref, *,
                         n_conv, hid_pad):
    """Entire GCN stack in one grid step; H stays resident in VMEM scratch.

    adj_ref : (Np, Np)        bf16  normalized adjacency (zero padded)
    x_ref   : (Np, F)         bf16  padded input features
    w_ref   : (L, F, F)       bf16  stacked, padded layer weights
    b_ref   : (L, 1, F)       f32   stacked, padded layer biases
    o_ref   : (Np, hid_pad)   f32   padded output (only the hidden width)
    h_ref   : (Np, F)         bf16  VMEM scratch holding the current layer input
    """
    h_ref[...] = x_ref[...]
    a = adj_ref[...]
    for li in range(n_conv):                       # static, unrolled layer loop
        # AH-first (same rounding order as the tiled path); MXU f32 accumulation.
        ah = jnp.dot(a, h_ref[...], preferred_element_type=jnp.float32)
        h = jnp.dot(ah.astype(jnp.bfloat16), w_ref[li],
                    preferred_element_type=jnp.float32)
        h = h + b_ref[li]                          # bias + activation in f32
        if li != n_conv - 1:
            h_ref[...] = jnp.maximum(h, 0.0).astype(jnp.bfloat16)
        else:
            o_ref[...] = h[:, :hid_pad]            # last GraphConv: no activation


def encoder_forward_fused(adj_norm, features, params):
    """Single-launch path for problems that are trivially small vs VMEM."""
    n, in_feats = features.shape
    n_hidden = params[0][0].shape[1]
    f_pad = max(_round_up(in_feats, LANE), _round_up(n_hidden, LANE))
    hid_pad = _round_up(n_hidden, LANE)
    n_pad = _round_up(n, LANE)
    n_conv = len(params)

    adj_b = _pad2d(adj_norm, n_pad, n_pad).astype(jnp.bfloat16)
    x_p = _pad2d(features, n_pad, f_pad).astype(jnp.bfloat16)
    w_stack = jnp.stack([_pad2d(w, f_pad, f_pad) for (w, _) in params]
                        ).astype(jnp.bfloat16)
    b_stack = jnp.stack([jnp.pad(b, (0, f_pad - b.shape[0])).reshape(1, f_pad)
                         for (_, b) in params]).astype(jnp.float32)

    cap = _vmem_capacity_bytes()
    fused_bytes = _fused_vmem_bytes(n_pad, f_pad, hid_pad, n_conv)
    vmem_limit = int(min(cap - (8 << 20), max(32 << 20, 2 * fused_bytes)))

    kernel = functools.partial(fused_encoder_kernel, n_conv=n_conv,
                               hid_pad=hid_pad)
    out = pl.pallas_call(
        kernel,
        out_shape=jax.ShapeDtypeStruct((n_pad, hid_pad), jnp.float32),
        grid_spec=pltpu.PrefetchScalarGridSpec(
            num_scalar_prefetch=0,
            grid=(1,),
            in_specs=[
                _resident_spec((n_pad, n_pad), lambda i: (0, 0)),
                _resident_spec((n_pad, f_pad), lambda i: (0, 0)),
                _resident_spec((n_conv, f_pad, f_pad), lambda i: (0, 0, 0)),
                _resident_spec((n_conv, 1, f_pad), lambda i: (0, 0, 0)),
            ],
            out_specs=pl.BlockSpec((n_pad, hid_pad), lambda i: (0, 0)),
            scratch_shapes=[pltpu.VMEM((n_pad, f_pad), jnp.bfloat16)],
        ),
        compiler_params=pltpu.CompilerParams(
            dimension_semantics=("arbitrary",),
            vmem_limit_bytes=vmem_limit),
    )(adj_b, x_p, w_stack, b_stack)
    return out[:n, :n_hidden]


# ------------------------------- tiled path -----------------------------------
# One fused kernel per layer: adjacency (tile_n, tile_k) blocks x resident-free
# H (tile_k, F) blocks stream into an f32 accumulator over the K grid axis;
# @W + bias (+ ReLU) run once per row tile at the last K step.  No XW
# intermediate ever hits HBM, VMEM use is constant in N.

def gcn_layer_kernel(adj_ref, h_ref, w_ref, b_ref, o_ref, acc_ref, *, apply_relu):
    k = pl.program_id(1)

    @pl.when(k == 0)
    def _():
        acc_ref[...] = jnp.zeros_like(acc_ref)

    acc_ref[...] += jnp.dot(adj_ref[...], h_ref[...],
                            preferred_element_type=jnp.float32)

    @pl.when(k == pl.num_programs(1) - 1)
    def _():
        h = jnp.dot(acc_ref[...].astype(jnp.bfloat16), w_ref[...],
                    preferred_element_type=jnp.float32)
        h = h + b_ref[...]
        if apply_relu:
            h = jnp.maximum(h, 0.0)
        o_ref[...] = h.astype(o_ref.dtype)


def gcn_layer_tiled(adj_b, h_b, w_p, b_p, *, apply_relu, tile_n, tile_k,
                    out_dtype):
    n_pad, f_in = h_b.shape
    f_out = w_p.shape[1]
    out_bytes = jnp.dtype(out_dtype).itemsize
    grid = (n_pad // tile_n, n_pad // tile_k)

    step_bytes = (2 * tile_n * tile_k * 2       # adj blocks (double buffered)
                  + 2 * tile_k * f_in * 2       # H blocks (double buffered)
                  + f_in * f_out * 2            # resident W (Buffered(1))
                  + 4 * f_out                   # resident bias
                  + 2 * tile_n * f_out * out_bytes
                  + 4 * tile_n * f_in)          # accumulator scratch
    cap = _vmem_capacity_bytes()
    vmem_limit = int(min(cap - (8 << 20),
                         max(32 << 20, 2 * step_bytes + (8 << 20))))

    cost = pl.CostEstimate(
        flops=2 * n_pad * n_pad * f_in + 2 * n_pad * f_in * f_out,
        transcendentals=0,
        bytes_accessed=(2 * n_pad * n_pad
                        + grid[0] * n_pad * f_in * 2
                        + f_in * f_out * 2
                        + n_pad * f_out * out_bytes))

    return pl.pallas_call(
        functools.partial(gcn_layer_kernel, apply_relu=apply_relu),
        out_shape=jax.ShapeDtypeStruct((n_pad, f_out), out_dtype),
        grid_spec=pltpu.PrefetchScalarGridSpec(
            num_scalar_prefetch=0,
            grid=grid,
            in_specs=[
                pl.BlockSpec((tile_n, tile_k), lambda i, k: (i, k)),   # Â blocks
                pl.BlockSpec((tile_k, f_in), lambda i, k: (k, 0)),     # H blocks
                _resident_spec((f_in, f_out), lambda i, k: (0, 0)),    # W
                _resident_spec((1, f_out), lambda i, k: (0, 0)),       # bias
            ],
            out_specs=pl.BlockSpec((tile_n, f_out), lambda i, k: (i, 0)),
            scratch_shapes=[pltpu.VMEM((tile_n, f_in), jnp.float32)],
        ),
        compiler_params=pltpu.CompilerParams(
            dimension_semantics=("parallel", "arbitrary"),
            vmem_limit_bytes=vmem_limit),
        cost_estimate=cost,
    )(adj_b, h_b, w_p, b_p)


def encoder_forward_tiled(adj_norm, features, params, *, tile_n=None):
    n, in_feats = features.shape
    n_hidden = params[0][0].shape[1]
    in_pad = _round_up(in_feats, LANE)
    hid_pad = _round_up(n_hidden, LANE)
    n_conv = len(params)

    n_pad, tile_n, tile_k = _choose_tiles(n, tile_n)

    adj_b = _pad2d(adj_norm, n_pad, n_pad).astype(jnp.bfloat16)
    h = _pad2d(features, n_pad, in_pad).astype(jnp.bfloat16)
    for li, (w, b) in enumerate(params):
        f_in = in_pad if li == 0 else hid_pad
        w_p = _pad2d(w, f_in, hid_pad).astype(jnp.bfloat16)
        b_p = jnp.pad(b, (0, hid_pad - b.shape[0])).reshape(1, hid_pad
                      ).astype(jnp.float32)
        last = li == n_conv - 1
        h = gcn_layer_tiled(adj_b, h, w_p, b_p,
                            apply_relu=not last, tile_n=tile_n, tile_k=tile_k,
                            out_dtype=jnp.float32 if last else jnp.bfloat16)
    return h[:n, :n_hidden]


# ------------------------------ Encoder glue ----------------------------------

def normalize_adjacency(adj):
    """Symmetric normalization with self-loops: D^{-1/2} (A+I) D^{-1/2}."""
    n = adj.shape[0]
    a = adj + jnp.eye(n, dtype=adj.dtype)
    deg = a.sum(axis=1)
    d_inv_sqrt = jnp.where(deg > 0, 1.0 / jnp.sqrt(deg), 0.0)
    return d_inv_sqrt[:, None] * a * d_inv_sqrt[None, :]


def init_encoder_params(key, in_feats, n_hidden, n_layers):
    """Glorot-uniform init matching the DGL GraphConv parameter shapes."""
    dims = [in_feats] + [n_hidden] * n_layers + [n_hidden]  # n_layers+1 GraphConvs
    params = []
    for li in range(len(dims) - 1):
        key, wk = jax.random.split(key)
        fan_in, fan_out = dims[li], dims[li + 1]
        limit = jnp.sqrt(6.0 / (fan_in + fan_out))
        w = jax.random.uniform(wk, (fan_in, fan_out), jnp.float32, -limit, limit)
        b = jnp.zeros((fan_out,), jnp.float32)
        params.append((w, b))
    return params


def encoder_forward(adj_norm, features, params, *, corrupt=False, key=None,
                    force_tiled=False, tile_n=None):
    """Pallas implementation of Encoder.forward (eval mode)."""
    if corrupt:
        perm = jax.random.permutation(key, features.shape[0])
        features = features[perm]
    # TODO(synk): nn.Dropout between GraphConv layers is identity in eval mode; not applied.

    n, in_feats = features.shape
    n_hidden = params[0][0].shape[1]
    f_pad = max(_round_up(in_feats, LANE), _round_up(n_hidden, LANE))
    hid_pad = _round_up(n_hidden, LANE)
    n_pad = _round_up(n, LANE)
    cap = _vmem_capacity_bytes()
    fused_bytes = _fused_vmem_bytes(n_pad, f_pad, hid_pad, len(params))

    # Fused single-launch path only when trivially small relative to per-core
    # VMEM; anything else goes through the tiled path whose "parallel" row
    # axis shards across both v7x TensorCores.
    if (not force_tiled) and fused_bytes <= min(cap // 4, 16 << 20):
        return encoder_forward_fused(adj_norm, features, params)
    return encoder_forward_tiled(adj_norm, features, params, tile_n=tile_n)


# --------------------------------- driver --------------------------------------

if __name__ == "__main__":
    N = 200         # nodes (not a multiple of 128 -> exercises row/K padding)
    IN_FEATS = 160  # pads to 256 lanes (different from the hidden 128 pad)
    N_HIDDEN = 32
    N_LAYERS = 2    # -> 3 GraphConv layers total

    key = jax.random.PRNGKey(0)
    k_feat, k_adj, k_param = jax.random.split(key, 3)

    # Deterministic random features and a random symmetric adjacency.
    features = jax.random.normal(k_feat, (N, IN_FEATS), jnp.float32)
    rand = jax.random.uniform(k_adj, (N, N))
    adj = (rand < 0.05).astype(jnp.float32)
    adj = jnp.maximum(adj, adj.T)            # undirected
    adj = adj * (1.0 - jnp.eye(N))           # self loops added during normalization
    adj_norm = normalize_adjacency(adj)

    params = init_encoder_params(k_param, IN_FEATS, N_HIDDEN, N_LAYERS)

    # Auto dispatch -> fused single-launch kernel for this driver-sized problem.
    out = jax.block_until_ready(encoder_forward(adj_norm, features, params))
    assert out.shape == (N, N_HIDDEN)

    # Tiled path: one fused kernel per layer with a K-split accumulation grid.
    out_tiled = jax.block_until_ready(
        encoder_forward(adj_norm, features, params, force_tiled=True, tile_n=128))
    assert out_tiled.shape == (N, N_HIDDEN)

    # Reference 1: identical AH-first bf16-operand / f32-accumulation ordering.
    def bdot(a, b):
        return jnp.dot(a.astype(jnp.bfloat16), b.astype(jnp.bfloat16),
                       preferred_element_type=jnp.float32)

    ref_bf16 = features
    for i, (w, b) in enumerate(params):
        ref_bf16 = bdot(bdot(adj_norm, ref_bf16), w) + b
        if i != len(params) - 1:
            ref_bf16 = jnp.maximum(ref_bf16, 0.0)

    # Reference 2: pure f32 math (semantic check, looser tolerance for bf16 MXU).
    ref_f32 = features
    for i, (w, b) in enumerate(params):
        ref_f32 = adj_norm @ (ref_f32 @ w) + b
        if i != len(params) - 1:
            ref_f32 = jnp.maximum(ref_f32, 0.0)

    assert jnp.allclose(out, ref_bf16, atol=3e-2, rtol=3e-2)
    assert jnp.allclose(out, ref_f32, atol=1e-1, rtol=1e-1)
    assert jnp.allclose(out, out_tiled, atol=3e-2, rtol=3e-2)

    print("KERNEL_OK")
</pallas_src>

<mosaic_0001>
module attributes {stable_mosaic.version = 11 : i64} {
  func.func @fused_encoder_kernel(%arg0: i32, %arg1: memref<256x256xbf16, #tpu.memory_space<vmem>>, %arg2: memref<256x256xbf16, #tpu.memory_space<vmem>>, %arg3: memref<3x256x256xbf16, #tpu.memory_space<vmem>>, %arg4: memref<3x1x256xf32, #tpu.memory_space<vmem>>, %arg5: memref<256x128xf32, #tpu.memory_space<vmem>>, %arg6: memref<256x256xbf16, #tpu.memory_space<vmem>>) attributes {dimension_semantics = [#tpu.dimension_semantics<arbitrary>], iteration_bounds = array<i64: 1>, scalar_prefetch = 0 : i64, scratch_operands = 1 : i64, tpu.core_type = #tpu.core_type<tc>, window_params = [{pipeline_mode = #tpu.pipeline_mode<synchronous>, transform_indices = @transform_0, window_bounds = array<i64: 256, 256>}, {pipeline_mode = #tpu.pipeline_mode<synchronous>, transform_indices = @transform_1, window_bounds = array<i64: 256, 256>}, {pipeline_mode = #tpu.pipeline_mode<synchronous>, transform_indices = @transform_2, window_bounds = array<i64: 3, 256, 256>}, {pipeline_mode = #tpu.pipeline_mode<synchronous>, transform_indices = @transform_3, window_bounds = array<i64: 3, 1, 256>}, {pipeline_mode = #tpu.pipeline_mode<synchronous>, transform_indices = @transform_4, window_bounds = array<i64: 256, 128>}]} {
    %c0 = arith.constant 0 : index
    %c0_0 = arith.constant 0 : index
    %0 = vector.load %arg2[%c0, %c0_0] : memref<256x256xbf16, #tpu.memory_space<vmem>>, vector<256x256xbf16>
    %c0_1 = arith.constant 0 : index
    %c0_2 = arith.constant 0 : index
    %1 = vector.load %arg6[%c0_1, %c0_2] : memref<256x256xbf16, #tpu.memory_space<vmem>>, vector<256x256xbf16>
    tpu.vector_store %arg6[%c0_1, %c0_2], %0 {strides = array<i32>} : memref<256x256xbf16, #tpu.memory_space<vmem>>, vector<256x256xbf16>,
    %c0_3 = arith.constant 0 : index
    %c0_4 = arith.constant 0 : index
    %2 = vector.load %arg1[%c0_3, %c0_4] : memref<256x256xbf16, #tpu.memory_space<vmem>>, vector<256x256xbf16>
    %c0_5 = arith.constant 0 : index
    %c0_6 = arith.constant 0 : index
    %3 = vector.load %arg6[%c0_5, %c0_6] : memref<256x256xbf16, #tpu.memory_space<vmem>>, vector<256x256xbf16>
    %cst = arith.constant dense<0.000000e+00> : vector<256x256xf32>
    %4 = tpu.matmul %2, %3, %cst {dimension_numbers = #tpu.dot_dimension_numbers<[1], [0], [0], [1], [0, 0, 1, 1], [], []>} : vector<256x256xbf16>, vector<256x256xbf16>, vector<256x256xf32> -> vector<256x256xf32>
    %5 = arith.truncf %4 : vector<256x256xf32> to vector<256x256xbf16>
    %c0_7 = arith.constant 0 : index
    %c0_8 = arith.constant 0 : index
    %c0_9 = arith.constant 0 : index
    %6 = vector.load %arg3[%c0_7, %c0_8, %c0_9] : memref<3x256x256xbf16, #tpu.memory_space<vmem>>, vector<1x256x256xbf16>
    %7 = vector.shape_cast %6 : vector<1x256x256xbf16> to vector<256x256xbf16>
    %cst_10 = arith.constant dense<0.000000e+00> : vector<256x256xf32>
    %8 = tpu.matmul %5, %7, %cst_10 {dimension_numbers = #tpu.dot_dimension_numbers<[1], [0], [0], [1], [0, 0, 1, 1], [], []>} : vector<256x256xbf16>, vector<256x256xbf16>, vector<256x256xf32> -> vector<256x256xf32>
    %c0_11 = arith.constant 0 : index
    %c0_12 = arith.constant 0 : index
    %c0_13 = arith.constant 0 : index
    %9 = vector.load %arg4[%c0_11, %c0_12, %c0_13] : memref<3x1x256xf32, #tpu.memory_space<vmem>>, vector<1x1x256xf32>
    %10 = vector.shape_cast %9 : vector<1x1x256xf32> to vector<1x256xf32>
    %11 = vector.broadcast %10 : vector<1x256xf32> to vector<256x256xf32>
    %12 = arith.addf %8, %11 : vector<256x256xf32>
    %cst_14 = arith.constant 0.000000e+00 : f32
    %13 = vector.broadcast %cst_14 : f32 to vector<256x256xf32>
    %14 = arith.maximumf %12, %13 : vector<256x256xf32>
    %15 = arith.truncf %14 : vector<256x256xf32> to vector<256x256xbf16>
    %c0_15 = arith.constant 0 : index
    %c0_16 = arith.constant 0 : index
    %16 = vector.load %arg6[%c0_15, %c0_16] : memref<256x256xbf16, #tpu.memory_space<vmem>>, vector<256x256xbf16>
    tpu.vector_store %arg6[%c0_15, %c0_16], %15 {strides = array<i32>} : memref<256x256xbf16, #tpu.memory_space<vmem>>, vector<256x256xbf16>,
    %c0_17 = arith.constant 0 : index
    %c0_18 = arith.constant 0 : index
    %17 = vector.load %arg6[%c0_17, %c0_18] : memref<256x256xbf16, #tpu.memory_space<vmem>>, vector<256x256xbf16>
    %cst_19 = arith.constant dense<0.000000e+00> : vector<256x256xf32>
    %18 = tpu.matmul %2, %17, %cst_19 {dimension_numbers = #tpu.dot_dimension_numbers<[1], [0], [0], [1], [0, 0, 1, 1], [], []>} : vector<256x256xbf16>, vector<256x256xbf16>, vector<256x256xf32> -> vector<256x256xf32>
    %19 = arith.truncf %18 : vector<256x256xf32> to vector<256x256xbf16>
    %c1 = arith.constant 1 : index
    %c0_20 = arith.constant 0 : index
    %c0_21 = arith.constant 0 : index
    %20 = vector.load %arg3[%c1, %c0_20, %c0_21] : memref<3x256x256xbf16, #tpu.memory_space<vmem>>, vector<1x256x256xbf16>
    %21 = vector.shape_cast %20 : vector<1x256x256xbf16> to vector<256x256xbf16>
    %cst_22 = arith.constant dense<0.000000e+00> : vector<256x256xf32>
    %22 = tpu.matmul %19, %21, %cst_22 {dimension_numbers = #tpu.dot_dimension_numbers<[1], [0], [0], [1], [0, 0, 1, 1], [], []>} : vector<256x256xbf16>, vector<256x256xbf16>, vector<256x256xf32> -> vector<256x256xf32>
    %c1_23 = arith.constant 1 : index
    %c0_24 = arith.constant 0 : index
    %c0_25 = arith.constant 0 : index
    %23 = vector.load %arg4[%c1_23, %c0_24, %c0_25] : memref<3x1x256xf32, #tpu.memory_space<vmem>>, vector<1x1x256xf32>
    %24 = vector.shape_cast %23 : vector<1x1x256xf32> to vector<1x256xf32>
    %25 = vector.broadcast %24 : vector<1x256xf32> to vector<256x256xf32>
    %26 = arith.addf %22, %25 : vector<256x256xf32>
    %cst_26 = arith.constant 0.000000e+00 : f32
    %27 = vector.broadcast %cst_26 : f32 to vector<256x256xf32>
    %28 = arith.maximumf %26, %27 : vector<256x256xf32>
    %29 = arith.truncf %28 : vector<256x256xf32> to vector<256x256xbf16>
    %c0_27 = arith.constant 0 : index
    %c0_28 = arith.constant 0 : index
    %30 = vector.load %arg6[%c0_27, %c0_28] : memref<256x256xbf16, #tpu.memory_space<vmem>>, vector<256x256xbf16>
    tpu.vector_store %arg6[%c0_27, %c0_28], %29 {strides = array<i32>} : memref<256x256xbf16, #tpu.memory_space<vmem>>, vector<256x256xbf16>,
    %c0_29 = arith.constant 0 : index
    %c0_30 = arith.constant 0 : index
    %31 = vector.load %arg6[%c0_29, %c0_30] : memref<256x256xbf16, #tpu.memory_space<vmem>>, vector<256x256xbf16>
    %cst_31 = arith.constant dense<0.000000e+00> : vector<256x256xf32>
    %32 = tpu.matmul %2, %31, %cst_31 {dimension_numbers = #tpu.dot_dimension_numbers<[1], [0], [0], [1], [0, 0, 1, 1], [], []>} : vector<256x256xbf16>, vector<256x256xbf16>, vector<256x256xf32> -> vector<256x256xf32>
    %33 = arith.truncf %32 : vector<256x256xf32> to vector<256x256xbf16>
    %c2 = arith.constant 2 : index
    %c0_32 = arith.constant 0 : index
    %c0_33 = arith.constant 0 : index
    %34 = vector.load %arg3[%c2, %c0_32, %c0_33] : memref<3x256x256xbf16, #tpu.memory_space<vmem>>, vector<1x256x256xbf16>
    %35 = vector.shape_cast %34 : vector<1x256x256xbf16> to vector<256x256xbf16>
    %cst_34 = arith.constant dense<0.000000e+00> : vector<256x256xf32>
    %36 = tpu.matmul %33, %35, %cst_34 {dimension_numbers = #tpu.dot_dimension_numbers<[1], [0], [0], [1], [0, 0, 1, 1], [], []>} : vector<256x256xbf16>, vector<256x256xbf16>, vector<256x256xf32> -> vector<256x256xf32>
    %c2_35 = arith.constant 2 : index
    %c0_36 = arith.constant 0 : index
    %c0_37 = arith.constant 0 : index
    %37 = vector.load %arg4[%c2_35, %c0_36, %c0_37] : memref<3x1x256xf32, #tpu.memory_space<vmem>>, vector<1x1x256xf32>
    %38 = vector.shape_cast %37 : vector<1x1x256xf32> to vector<1x256xf32>
    %39 = vector.broadcast %38 : vector<1x256xf32> to vector<256x256xf32>
    %40 = arith.addf %36, %39 : vector<256x256xf32>
    %41 = vector.extract_strided_slice %40 {offsets = [0, 0], sizes = [256, 128], strides = [1, 1]} : vector<256x256xf32> to vector<256x128xf32>
    %c0_38 = arith.constant 0 : index
    %c0_39 = arith.constant 0 : index
    %42 = vector.load %arg5[%c0_38, %c0_39] : memref<256x128xf32, #tpu.memory_space<vmem>>, vector<256x128xf32>
    tpu.vector_store %arg5[%c0_38, %c0_39], %41 {strides = array<i32>} : memref<256x128xf32, #tpu.memory_space<vmem>>, vector<256x128xf32>,
    return
  }
  func.func @transform_0(%arg0: i32) -> (i32, i32) {
    %c0_i32 = arith.constant 0 : i32
    %c0_i32_0 = arith.constant 0 : i32
    %c0_i32_1 = arith.constant 0 : i32
    return %c0_i32, %c0_i32_0 : i32, i32
  }
  func.func @transform_1(%arg0: i32) -> (i32, i32) {
    %c0_i32 = arith.constant 0 : i32
    %c0_i32_0 = arith.constant 0 : i32
    %c0_i32_1 = arith.constant 0 : i32
    return %c0_i32, %c0_i32_0 : i32, i32
  }
  func.func @transform_2(%arg0: i32) -> (i32, i32, i32) {
    %c0_i32 = arith.constant 0 : i32
    %c0_i32_0 = arith.constant 0 : i32
    %c0_i32_1 = arith.constant 0 : i32
    %c0_i32_2 = arith.constant 0 : i32
    return %c0_i32, %c0_i32_0, %c0_i32_1 : i32, i32, i32
  }
  func.func @transform_3(%arg0: i32) -> (i32, i32, i32) {
    %c0_i32 = arith.constant 0 : i32
    %c0_i32_0 = arith.constant 0 : i32
    %c0_i32_1 = arith.constant 0 : i32
    %c0_i32_2 = arith.constant 0 : i32
    return %c0_i32, %c0_i32_0, %c0_i32_1 : i32, i32, i32
  }
  func.func @transform_4(%arg0: i32) -> (i32, i32) {
    %c0_i32 = arith.constant 0 : i32
    %c0_i32_0 = arith.constant 0 : i32
    %c0_i32_1 = arith.constant 0 : i32
    return %c0_i32, %c0_i32_0 : i32, i32
  }
}

</mosaic_0001>

<llo_original>
// kernel: tpu_custom_call.1
$region0: #{tpu_custom_call.1}
  #allocation0 [shape = 'u32[]', space=smem, size = 0x4, offset = 0x4, fixed_abs, tag = 'smem constant byte address 0x4 - core index']
  #allocation1 [shape = 'u32[144,128]{1,0:T(1,128)}', space=vmem, size = 0x12000, scoped, tag = 'internal scratch']
  #allocation2 [shape = 'bf16[256,256]{1,0:T(8,128)(2,1)}', space=vmem, size = 0x20000, scoped, tag = 'scratch operand']
  %s0 = inlined_call_operand.hbm [shape: bf16[256,256], index: 0, kind: input, shape index: {}]
  %s1 = inlined_call_operand.hbm [shape: bf16[256,256], index: 1, kind: input, shape index: {}]
  %s2 = inlined_call_operand.hbm [shape: bf16[3,256,256], index: 2, kind: input, shape index: {}]
  %s3 = inlined_call_operand.hbm [shape: f32[3,1,256], index: 3, kind: input, shape index: {}]
  %s4 = inlined_call_operand.hbm [shape: f32[256,128], index: 4, kind: output, shape index: {}]
  %s5 = sld [smem:[#allocation0]]
  $region42: #{tpu_custom_call.1} parent=0
    _
  %s7 = ssub.s32 1, %s5
  %s8 = scalar_select 0, %s7, %s5
  $region1: #{tpu_custom_call.1} parent=0
    #allocation3 [shape = 'u8[131072]{0}', space=vmem, size = 0x20000, scoped, tag = 'input window, operand 0, single buffered']
    #allocation4 [shape = 's32[1]{0}', space=sflag, size = 0x4, scoped, tag = 'scoped memory for tpu_custom_call.1']
    #allocation5 [shape = 's32[1]{0}', space=sflag, size = 0x4, scoped, tag = 'scoped memory for tpu_custom_call.1']
    #allocation6 [shape = 'u8[131072]{0}', space=vmem, size = 0x20000, scoped, tag = 'input window, operand 1, single buffered']
    #allocation7 [shape = 's32[1]{0}', space=sflag, size = 0x4, scoped, tag = 'scoped memory for tpu_custom_call.1']
    #allocation8 [shape = 'u8[393216]{0}', space=vmem, size = 0x60000, scoped, tag = 'input window, operand 2, single buffered']
    #allocation9 [shape = 'u8[3072]{0}', space=vmem, size = 0xc00, scoped, tag = 'input window, operand 3, single buffered']
    #allocation10 [shape = 's32[1]{0}', space=sflag, size = 0x4, scoped, tag = 'scoped memory for tpu_custom_call.1']
    #allocation11 [shape = 'u8[131072]{0}', space=vmem, size = 0x20000, scoped, tag = 'output window, operand 0, single buffered']
    %9 = vsyncpa [#allocation4], 0
    %10 = vsyncpa [#allocation7], 0
    %11 = vsyncpa [#allocation10], 0
    %12 = vsyncpa [#allocation5], 0
    // Predicated region
    $region2: #{tpu_custom_call.1} parent=1 // pred_check
      _
    $region3: #{tpu_custom_call.1} parent=1 // pred_check_branch
      %14 = sbr.rel (0) target = $region5
    $region4: #{tpu_custom_call.1} parent=1 // pred_region
      %s16 = ssub.s32 4096, 4096
      %17 = vsyncadd [#allocation4], %s16
      %s18 = sshll.u32 [#allocation3], 4
      %s19 = int_to_ptr.vmem [resolvable:$true] %s18
      %24 = dma.hbm_to_vmem [thread:$0]  %s0, 4096, %s19, [#allocation4], 128, 128, 8
    $region5: #{tpu_custom_call.1} parent=1 // pred_fallthru
      _
    // Predicated region
    $region6: #{tpu_custom_call.1} parent=1 // pred_check
      _
    $region7: #{tpu_custom_call.1} parent=1 // pred_check_branch
      %26 = sbr.rel (0) target = $region9
    $region8: #{tpu_custom_call.1} parent=1 // pred_region
      %s28 = ssub.s32 4096, 4096
      %29 = vsyncadd [#allocation7], %s28
      %s30 = sshll.u32 [#allocation6], 4
      %s31 = int_to_ptr.vmem [resolvable:$true] %s30
      %36 = dma.hbm_to_vmem [thread:$0]  %s1, 4096, %s31, [#allocation7], 128, 128, 8
    $region9: #{tpu_custom_call.1} parent=1 // pred_fallthru
      _
    // Predicated region
    $region10: #{tpu_custom_call.1} parent=1 // pred_check
      _
    $region11: #{tpu_custom_call.1} parent=1 // pred_check_branch
      %38 = sbr.rel (0) target = $region13
    $region12: #{tpu_custom_call.1} parent=1 // pred_region
      %s40 = ssub.s32 12288, 12288
      %41 = vsyncadd [#allocation7], %s40
      %s42 = sshll.u32 [#allocation8], 4
      %s43 = int_to_ptr.vmem [resolvable:$true] %s42
      %48 = dma.hbm_to_vmem [thread:$0]  %s2, 12288, %s43, [#allocation7], 128, 128, 8
    $region13: #{tpu_custom_call.1} parent=1 // pred_fallthru
      _
    // Predicated region
    $region14: #{tpu_custom_call.1} parent=1 // pred_check
      _
    $region15: #{tpu_custom_call.1} parent=1 // pred_check_branch
      %50 = sbr.rel (0) target = $region17
    $region16: #{tpu_custom_call.1} parent=1 // pred_region
      %s52 = ssub.s32 96, 96
      %53 = vsyncadd [#allocation10], %s52
      %s54 = sshll.u32 [#allocation9], 4
      %s55 = int_to_ptr.vmem [resolvable:$true] %s54
      %60 = dma.hbm_to_vmem [thread:$0]  %s3, 96, %s55, [#allocation10], 32, 32, 2
    $region17: #{tpu_custom_call.1} parent=1 // pred_fallthru
      _
    // Predicated region
    $region18: #{tpu_custom_call.1} parent=1 // pred_check
      _
    $region19: #{tpu_custom_call.1} parent=1 // pred_check_branch
      %62 = sbr.rel (0) target = $region21
    $region20: #{tpu_custom_call.1} parent=1 // pred_region
      %63 = dma.done [#allocation4], 4096
    $region21: #{tpu_custom_call.1} parent=1 // pred_fallthru
      _
    // Predicated region
    $region22: #{tpu_custom_call.1} parent=1 // pred_check
      _
    $region23: #{tpu_custom_call.1} parent=1 // pred_check_branch
      %65 = sbr.rel (0) target = $region25
    $region24: #{tpu_custom_call.1} parent=1 // pred_region
      %66 = dma.done [#allocation7], 4096
    $region25: #{tpu_custom_call.1} parent=1 // pred_fallthru
      _
    // Predicated region
    $region26: #{tpu_custom_call.1} parent=1 // pred_check
      _
    $region27: #{tpu_custom_call.1} parent=1 // pred_check_branch
      %68 = sbr.rel (0) target = $region29
    $region28: #{tpu_custom_call.1} parent=1 // pred_region
      %69 = dma.done [#allocation7], 12288
    $region29: #{tpu_custom_call.1} parent=1 // pred_fallthru
      _
    // Predicated region
    $region30: #{tpu_custom_call.1} parent=1 // pred_check
      _
    $region31: #{tpu_custom_call.1} parent=1 // pred_check_branch
      %71 = sbr.rel (0) target = $region33
    $region32: #{tpu_custom_call.1} parent=1 // pred_region
      %72 = dma.done [#allocation10], 96
    $region33: #{tpu_custom_call.1} parent=1 // pred_fallthru
      _
    %v73 = vld [vmem:[#allocation6] sm:$0xff]
    %v74 = vld [vmem:[#allocation6 + $0x8] sm:$0xff]
    %v75 = vld [vmem:[#allocation6 + $0x10] sm:$0xff]
    %v76 = vld [vmem:[#allocation6 + $0x18] sm:$0xff]
    %v77 = vld [vmem:[#allocation6 + $0x20] sm:$0xff]
    %v78 = vld [vmem:[#allocation6 + $0x28] sm:$0xff]
    %v79 = vld [vmem:[#allocation6 + $0x30] sm:$0xff]
    %v80 = vld [vmem:[#allocation6 + $0x38] sm:$0xff]
    %v81 = vld [vmem:[#allocation6 + $0x40] sm:$0xff]
    %v82 = vld [vmem:[#allocation6 + $0x48] sm:$0xff]
    %v83 = vld [vmem:[#allocation6 + $0x50] sm:$0xff]
    %v84 = vld [vmem:[#allocation6 + $0x58] sm:$0xff]
    %v85 = vld [vmem:[#allocation6 + $0x60] sm:$0xff]
    %v86 = vld [vmem:[#allocation6 + $0x68] sm:$0xff]
    %v87 = vld [vmem:[#allocation6 + $0x70] sm:$0xff]
    %v88 = vld [vmem:[#allocation6 + $0x78] sm:$0xff]
    %v89 = vld [vmem:[#allocation6 + $0x80] sm:$0xff]
    %v90 = vld [vmem:[#allocation6 + $0x88] sm:$0xff]
    %v91 = vld [vmem:[#allocation6 + $0x90] sm:$0xff]
    %v92 = vld [vmem:[#allocation6 + $0x98] sm:$0xff]
    %v93 = vld [vmem:[#allocation6 + $0xa0] sm:$0xff]
    %v94 = vld [vmem:[#allocation6 + $0xa8] sm:$0xff]
    %v95 = vld [vmem:[#allocation6 + $0xb0] sm:$0xff]
    %v96 = vld [vmem:[#allocation6 + $0xb8] sm:$0xff]
    %v97 = vld [vmem:[#allocation6 + $0xc0] sm:$0xff]
    %v98 = vld [vmem:[#allocation6 + $0xc8] sm:$0xff]
    %v99 = vld [vmem:[#allocation6 + $0xd0] sm:$0xff]
    %v100 = vld [vmem:[#allocation6 + $0xd8] sm:$0xff]
    %v101 = vld [vmem:[#allocation6 + $0xe0] sm:$0xff]
    %v102 = vld [vmem:[#allocation6 + $0xe8] sm:$0xff]
    %v103 = vld [vmem:[#allocation6 + $0xf0] sm:$0xff]
    %v104 = vld [vmem:[#allocation6 + $0xf8] sm:$0xff]
    %105 = vst [vmem:[#allocation2] sm:$0xff] %v73
    %106 = vst [vmem:[#allocation2 + $0x8] sm:$0xff] %v74
    %107 = vst [vmem:[#allocation2 + $0x10] sm:$0xff] %v75
    %108 = vst [vmem:[#allocation2 + $0x18] sm:$0xff] %v76
    %109 = vst [vmem:[#allocation2 + $0x20] sm:$0xff] %v77
    %110 = vst [vmem:[#allocation2 + $0x28] sm:$0xff] %v78
    %111 = vst [vmem:[#allocation2 + $0x30] sm:$0xff] %v79
    %112 = vst [vmem:[#allocation2 + $0x38] sm:$0xff] %v80
    %113 = vst [vmem:[#allocation2 + $0x40] sm:$0xff] %v81
    %114 = vst [vmem:[#allocation2 + $0x48] sm:$0xff] %v82
    %115 = vst [vmem:[#allocation2 + $0x50] sm:$0xff] %v83
    %116 = vst [vmem:[#allocation2 + $0x58] sm:$0xff] %v84
    %117 = vst [vmem:[#allocation2 + $0x60] sm:$0xff] %v85
    %118 = vst [vmem:[#allocation2 + $0x68] sm:$0xff] %v86
    %119 = vst [vmem:[#allocation2 + $0x70] sm:$0xff] %v87
    %120 = vst [vmem:[#allocation2 + $0x78] sm:$0xff] %v88
    %121 = vst [vmem:[#allocation2 + $0x80] sm:$0xff] %v89
    %122 = vst [vmem:[#allocation2 + $0x88] sm:$0xff] %v90
    %123 = vst [vmem:[#allocation2 + $0x90] sm:$0xff] %v91
    %124 = vst [vmem:[#allocation2 + $0x98] sm:$0xff] %v92
    %125 = vst [vmem:[#allocation2 + $0xa0] sm:$0xff] %v93
    %126 = vst [vmem:[#allocation2 + $0xa8] sm:$0xff] %v94
    %127 = vst [vmem:[#allocation2 + $0xb0] sm:$0xff] %v95
    %128 = vst [vmem:[#allocation2 + $0xb8] sm:$0xff] %v96
    %129 = vst [vmem:[#allocation2 + $0xc0] sm:$0xff] %v97
    %130 = vst [vmem:[#allocation2 + $0xc8] sm:$0xff] %v98
    %131 = vst [vmem:[#allocation2 + $0xd0] sm:$0xff] %v99
    %132 = vst [vmem:[#allocation2 + $0xd8] sm:$0xff] %v100
    %133 = vst [vmem:[#allocation2 + $0xe0] sm:$0xff] %v101
    %134 = vst [vmem:[#allocation2 + $0xe8] sm:$0xff] %v102
    %135 = vst [vmem:[#allocation2 + $0xf0] sm:$0xff] %v103
    %136 = vst [vmem:[#allocation2 + $0xf8] sm:$0xff] %v104
    %v137 = vld [vmem:[#allocation3] sm:$0xff]
    %v138 = vld [vmem:[#allocation3 + $0x8] sm:$0xff]
    %v139 = vld [vmem:[#allocation3 + $0x10] sm:$0xff]
    %v140 = vld [vmem:[#allocation3 + $0x18] sm:$0xff]
    %v141 = vld [vmem:[#allocation3 + $0x20] sm:$0xff]
    %v142 = vld [vmem:[#allocation3 + $0x28] sm:$0xff]
    %v143 = vld [vmem:[#allocation3 + $0x30] sm:$0xff]
    %v144 = vld [vmem:[#allocation3 + $0x38] sm:$0xff]
    %v145 = vld [vmem:[#allocation3 + $0x40] sm:$0xff]
    %v146 = vld [vmem:[#allocation3 + $0x48] sm:$0xff]
    %v147 = vld [vmem:[#allocation3 + $0x50] sm:$0xff]
    %v148 = vld [vmem:[#allocation3 + $0x58] sm:$0xff]
    %v149 = vld [vmem:[#allocation3 + $0x60] sm:$0xff]
    %v150 = vld [vmem:[#allocation3 + $0x68] sm:$0xff]
    %v151 = vld [vmem:[#allocation3 + $0x70] sm:$0xff]
    %v152 = vld [vmem:[#allocation3 + $0x78] sm:$0xff]
    %v153 = vld [vmem:[#allocation3 + $0x80] sm:$0xff]
    %v154 = vld [vmem:[#allocation3 + $0x88] sm:$0xff]
    %v155 = vld [vmem:[#allocation3 + $0x90] sm:$0xff]
    %v156 = vld [vmem:[#allocation3 + $0x98] sm:$0xff]
    %v157 = vld [vmem:[#allocation3 + $0xa0] sm:$0xff]
    %v158 = vld [vmem:[#allocation3 + $0xa8] sm:$0xff]
    %v159 = vld [vmem:[#allocation3 + $0xb0] sm:$0xff]
    %v160 = vld [vmem:[#allocation3 + $0xb8] sm:$0xff]
    %v161 = vld [vmem:[#allocation3 + $0xc0] sm:$0xff]
    %v162 = vld [vmem:[#allocation3 + $0xc8] sm:$0xff]
    %v163 = vld [vmem:[#allocation3 + $0xd0] sm:$0xff]
    %v164 = vld [vmem:[#allocation3 + $0xd8] sm:$0xff]
    %v165 = vld [vmem:[#allocation3 + $0xe0] sm:$0xff]
    %v166 = vld [vmem:[#allocation3 + $0xe8] sm:$0xff]
    %v167 = vld [vmem:[#allocation3 + $0xf0] sm:$0xff]
    %v168 = vld [vmem:[#allocation3 + $0xf8] sm:$0xff]
    %v169 = vld [vmem:[#allocation2] sm:$0xff]
    %v170 = vld [vmem:[#allocation2 + $0x8] sm:$0xff]
    %v171 = vld [vmem:[#allocation2 + $0x10] sm:$0xff]
    %v172 = vld [vmem:[#allocation2 + $0x18] sm:$0xff]
    %v173 = vld [vmem:[#allocation2 + $0x20] sm:$0xff]
    %v174 = vld [vmem:[#allocation2 + $0x28] sm:$0xff]
    %v175 = vld [vmem:[#allocation2 + $0x30] sm:$0xff]
    %v176 = vld [vmem:[#allocation2 + $0x38] sm:$0xff]
    %v177 = vld [vmem:[#allocation2 + $0x40] sm:$0xff]
    %v178 = vld [vmem:[#allocation2 + $0x48] sm:$0xff]
    %v179 = vld [vmem:[#allocation2 + $0x50] sm:$0xff]
    %v180 = vld [vmem:[#allocation2 + $0x58] sm:$0xff]
    %v181 = vld [vmem:[#allocation2 + $0x60] sm:$0xff]
    %v182 = vld [vmem:[#allocation2 + $0x68] sm:$0xff]
    %v183 = vld [vmem:[#allocation2 + $0x70] sm:$0xff]
    %v184 = vld [vmem:[#allocation2 + $0x78] sm:$0xff]
    %v185 = vld [vmem:[#allocation2 + $0x80] sm:$0xff]
    %v186 = vld [vmem:[#allocation2 + $0x88] sm:$0xff]
    %v187 = vld [vmem:[#allocation2 + $0x90] sm:$0xff]
    %v188 = vld [vmem:[#allocation2 + $0x98] sm:$0xff]
    %v189 = vld [vmem:[#allocation2 + $0xa0] sm:$0xff]
    %v190 = vld [vmem:[#allocation2 + $0xa8] sm:$0xff]
    %v191 = vld [vmem:[#allocation2 + $0xb0] sm:$0xff]
    %v192 = vld [vmem:[#allocation2 + $0xb8] sm:$0xff]
    %v193 = vld [vmem:[#allocation2 + $0xc0] sm:$0xff]
    %v194 = vld [vmem:[#allocation2 + $0xc8] sm:$0xff]
    %v195 = vld [vmem:[#allocation2 + $0xd0] sm:$0xff]
    %v196 = vld [vmem:[#allocation2 + $0xd8] sm:$0xff]
    %v197 = vld [vmem:[#allocation2 + $0xe0] sm:$0xff]
    %v198 = vld [vmem:[#allocation2 + $0xe8] sm:$0xff]
    %v199 = vld [vmem:[#allocation2 + $0xf0] sm:$0xff]
    %v200 = vld [vmem:[#allocation2 + $0xf8] sm:$0xff]
    %v233 = vunpack.c.l.b16 %v137
    %v234 = vunpack.c.h.b16 %v137
    %v235 = vunpack.c.l.b16 %v138
    %v236 = vunpack.c.h.b16 %v138
    %v237 = vunpack.c.l.b16 %v139
    %v238 = vunpack.c.h.b16 %v139
    %v239 = vunpack.c.l.b16 %v140
    %v240 = vunpack.c.h.b16 %v140
    %v241 = vunpack.c.l.b16 %v141
    %v242 = vunpack.c.h.b16 %v141
    %v243 = vunpack.c.l.b16 %v142
    %v244 = vunpack.c.h.b16 %v142
    %v245 = vunpack.c.l.b16 %v143
    %v246 = vunpack.c.h.b16 %v143
    %v247 = vunpack.c.l.b16 %v144
    %v248 = vunpack.c.h.b16 %v144
    %v249 = vunpack.c.l.b16 %v145
    %v250 = vunpack.c.h.b16 %v145
    %v251 = vunpack.c.l.b16 %v146
    %v252 = vunpack.c.h.b16 %v146
    %v253 = vunpack.c.l.b16 %v147
    %v254 = vunpack.c.h.b16 %v147
    %v255 = vunpack.c.l.b16 %v148
    %v256 = vunpack.c.h.b16 %v148
    %v257 = vunpack.c.l.b16 %v149
    %v258 = vunpack.c.h.b16 %v149
    %v259 = vunpack.c.l.b16 %v150
    %v260 = vunpack.c.h.b16 %v150
    %v261 = vunpack.c.l.b16 %v151
    %v262 = vunpack.c.h.b16 %v151
    %v263 = vunpack.c.l.b16 %v152
    %v264 = vunpack.c.h.b16 %v152
    %v265 = vunpack.c.l.b16 %v153
    %v266 = vunpack.c.h.b16 %v153
    %v267 = vunpack.c.l.b16 %v154
    %v268 = vunpack.c.h.b16 %v154
    %v269 = vunpack.c.l.b16 %v155
    %v270 = vunpack.c.h.b16 %v155
    %v271 = vunpack.c.l.b16 %v156
    %v272 = vunpack.c.h.b16 %v156
    %v273 = vunpack.c.l.b16 %v157
    %v274 = vunpack.c.h.b16 %v157
    %v275 = vunpack.c.l.b16 %v158
    %v276 = vunpack.c.h.b16 %v158
    %v277 = vunpack.c.l.b16 %v159
    %v278 = vunpack.c.h.b16 %v159
    %v279 = vunpack.c.l.b16 %v160
    %v280 = vunpack.c.h.b16 %v160
    %v281 = vunpack.c.l.b16 %v161
    %v282 = vunpack.c.h.b16 %v161
    %v283 = vunpack.c.l.b16 %v162
    %v284 = vunpack.c.h.b16 %v162
    %v285 = vunpack.c.l.b16 %v163
    %v286 = vunpack.c.h.b16 %v163
    %v287 = vunpack.c.l.b16 %v164
    %v288 = vunpack.c.h.b16 %v164
    %v289 = vunpack.c.l.b16 %v165
    %v290 = vunpack.c.h.b16 %v165
    %v291 = vunpack.c.l.b16 %v166
    %v292 = vunpack.c.h.b16 %v166
    %v293 = vunpack.c.l.b16 %v167
    %v294 = vunpack.c.h.b16 %v167
    %v295 = vunpack.c.l.b16 %v168
    %v296 = vunpack.c.h.b16 %v168
    %v297 = vpack.c.b16 %v235, %v233
    %v298 = vpack.c.b16 %v236, %v234
    %v299 = vpack.c.b16 %v239, %v237
    %v300 = vpack.c.b16 %v240, %v238
    %v301 = vpack.c.b16 %v243, %v241
    %v302 = vpack.c.b16 %v244, %v242
    %v303 = vpack.c.b16 %v247, %v245
    %v304 = vpack.c.b16 %v248, %v246
    %v305 = vpack.c.b16 %v251, %v249
    %v306 = vpack.c.b16 %v252, %v250
    %v307 = vpack.c.b16 %v255, %v253
    %v308 = vpack.c.b16 %v256, %v254
    %v309 = vpack.c.b16 %v259, %v257
    %v310 = vpack.c.b16 %v260, %v258
    %v311 = vpack.c.b16 %v263, %v261
    %v312 = vpack.c.b16 %v264, %v262
    %v313 = vpack.c.b16 %v267, %v265
    %v314 = vpack.c.b16 %v268, %v266
    %v315 = vpack.c.b16 %v271, %v269
    %v316 = vpack.c.b16 %v272, %v270
    %v317 = vpack.c.b16 %v275, %v273
    %v318 = vpack.c.b16 %v276, %v274
    %v319 = vpack.c.b16 %v279, %v277
    %v320 = vpack.c.b16 %v280, %v278
    %v321 = vpack.c.b16 %v283, %v281
    %v322 = vpack.c.b16 %v284, %v282
    %v323 = vpack.c.b16 %v287, %v285
    %v324 = vpack.c.b16 %v288, %v286
    %v325 = vpack.c.b16 %v291, %v289
    %v326 = vpack.c.b16 %v292, %v290
    %v327 = vpack.c.b16 %v295, %v293
    %v328 = vpack.c.b16 %v296, %v294
    %v393 = vunpack.c.l.b16 %v169
    %v394 = vunpack.c.h.b16 %v169
    %v395 = vunpack.c.l.b16 %v170
    %v396 = vunpack.c.h.b16 %v170
    %v397 = vunpack.c.l.b16 %v171
    %v398 = vunpack.c.h.b16 %v171
    %v399 = vunpack.c.l.b16 %v172
    %v400 = vunpack.c.h.b16 %v172
    %v401 = vunpack.c.l.b16 %v173
    %v402 = vunpack.c.h.b16 %v173
    %v403 = vunpack.c.l.b16 %v174
    %v404 = vunpack.c.h.b16 %v174
    %v405 = vunpack.c.l.b16 %v175
    %v406 = vunpack.c.h.b16 %v175
    %v407 = vunpack.c.l.b16 %v176
    %v408 = vunpack.c.h.b16 %v176
    %v409 = vunpack.c.l.b16 %v177
    %v410 = vunpack.c.h.b16 %v177
    %v411 = vunpack.c.l.b16 %v178
    %v412 = vunpack.c.h.b16 %v178
    %v413 = vunpack.c.l.b16 %v179
    %v414 = vunpack.c.h.b16 %v179
    %v415 = vunpack.c.l.b16 %v180
    %v416 = vunpack.c.h.b16 %v180
    %v417 = vunpack.c.l.b16 %v181
    %v418 = vunpack.c.h.b16 %v181
    %v419 = vunpack.c.l.b16 %v182
    %v420 = vunpack.c.h.b16 %v182
    %v421 = vunpack.c.l.b16 %v183
    %v422 = vunpack.c.h.b16 %v183
    %v423 = vunpack.c.l.b16 %v184
    %v424 = vunpack.c.h.b16 %v184
    %v425 = vunpack.c.l.b16 %v185
    %v426 = vunpack.c.h.b16 %v185
    %v427 = vunpack.c.l.b16 %v186
    %v428 = vunpack.c.h.b16 %v186
    %v429 = vunpack.c.l.b16 %v187
    %v430 = vunpack.c.h.b16 %v187
    %v431 = vunpack.c.l.b16 %v188
    %v432 = vunpack.c.h.b16 %v188
    %v433 = vunpack.c.l.b16 %v189
    %v434 = vunpack.c.h.b16 %v189
    %v435 = vunpack.c.l.b16 %v190
    %v436 = vunpack.c.h.b16 %v190
    %v437 = vunpack.c.l.b16 %v191
    %v438 = vunpack.c.h.b16 %v191
    %v439 = vunpack.c.l.b16 %v192
    %v440 = vunpack.c.h.b16 %v192
    %v441 = vunpack.c.l.b16 %v193
    %v442 = vunpack.c.h.b16 %v193
    %v443 = vunpack.c.l.b16 %v194
    %v444 = vunpack.c.h.b16 %v194
    %v445 = vunpack.c.l.b16 %v195
    %v446 = vunpack.c.h.b16 %v195
    %v447 = vunpack.c.l.b16 %v196
    %v448 = vunpack.c.h.b16 %v196
    %v449 = vunpack.c.l.b16 %v197
    %v450 = vunpack.c.h.b16 %v197
    %v451 = vunpack.c.l.b16 %v198
    %v452 = vunpack.c.h.b16 %v198
    %v453 = vunpack.c.l.b16 %v199
    %v454 = vunpack.c.h.b16 %v199
    %v455 = vunpack.c.l.b16 %v200
    %v456 = vunpack.c.h.b16 %v200
    %v457 = vpack.c.b16 %v395, %v393
    %v458 = vpack.c.b16 %v396, %v394
    %v459 = vpack.c.b16 %v399, %v397
    %v460 = vpack.c.b16 %v400, %v398
    %v461 = vpack.c.b16 %v403, %v401
    %v462 = vpack.c.b16 %v404, %v402
    %v463 = vpack.c.b16 %v407, %v405
    %v464 = vpack.c.b16 %v408, %v406
    %v465 = vpack.c.b16 %v411, %v409
    %v466 = vpack.c.b16 %v412, %v410
    %v467 = vpack.c.b16 %v415, %v413
    %v468 = vpack.c.b16 %v416, %v414
    %v469 = vpack.c.b16 %v419, %v417
    %v470 = vpack.c.b16 %v420, %v418
    %v471 = vpack.c.b16 %v423, %v421
    %v472 = vpack.c.b16 %v424, %v422
    %v473 = vpack.c.b16 %v427, %v425
    %v474 = vpack.c.b16 %v428, %v426
    %v475 = vpack.c.b16 %v431, %v429
    %v476 = vpack.c.b16 %v432, %v430
    %v477 = vpack.c.b16 %v435, %v433
    %v478 = vpack.c.b16 %v436, %v434
    %v479 = vpack.c.b16 %v439, %v437
    %v480 = vpack.c.b16 %v440, %v438
    %v481 = vpack.c.b16 %v443, %v441
    %v482 = vpack.c.b16 %v444, %v442
    %v483 = vpack.c.b16 %v447, %v445
    %v484 = vpack.c.b16 %v448, %v446
    %v485 = vpack.c.b16 %v451, %v449
    %v486 = vpack.c.b16 %v452, %v450
    %v487 = vpack.c.b16 %v455, %v453
    %v488 = vpack.c.b16 %v456, %v454
    %521 = vmatprep.subr.bf16.mxu0 %v472
    %522 = vmatpush1.bf16.msra.mxu0 %v471
    %523 = vmatprep.subr.bf16.mxu0 %v470
    %524 = vmatpush1.bf16.msra.mxu0 %v469
    %525 = vmatprep.subr.bf16.mxu0 %v468
    %526 = vmatpush1.bf16.msra.mxu0 %v467
    %527 = vmatprep.subr.bf16.mxu0 %v466
    %528 = vmatpush1.bf16.msra.mxu0 %v465
    %529 = vmatprep.subr.bf16.mxu0 %v464
    %530 = vmatpush1.bf16.msra.mxu0 %v463
    %531 = vmatprep.subr.bf16.mxu0 %v462
    %532 = vmatpush1.bf16.msra.mxu0 %v461
    %533 = vmatprep.subr.bf16.mxu0 %v460
    %534 = vmatpush1.bf16.msra.mxu0 %v459
    %535 = vmatprep.subr.bf16.mxu0 %v458
    %536 = vmatpush1.bf16.msra.mxu0 %v457
    %537 = vmatprep.subr.bf16.mxu0 %v488
    %538 = vmatpush2.bf16.msra.mxu0 %v487
    %539 = vmatprep.subr.bf16.mxu0 %v486
    %540 = vmatpush2.bf16.msra.mxu0 %v485
    %541 = vmatprep.subr.bf16.mxu0 %v484
    %542 = vmatpush2.bf16.msra.mxu0 %v483
    %543 = vmatprep.subr.bf16.mxu0 %v482
    %544 = vmatpush2.bf16.msra.mxu0 %v481
    %545 = vmatprep.subr.bf16.mxu0 %v480
    %546 = vmatpush2.bf16.msra.mxu0 %v479
    %547 = vmatprep.subr.bf16.mxu0 %v478
    %548 = vmatpush2.bf16.msra.mxu0 %v477
    %549 = vmatprep.subr.bf16.mxu0 %v476
    %550 = vmatpush2.bf16.msra.mxu0 %v475
    %551 = vmatprep.subr.bf16.mxu0 %v474
    %552 = vmatpush2.bf16.msra.mxu0 %v473
    %553 = vmatprep.mubr.bf16.mxu0 %v298
    %554 = vmatmul.mubr.bf16.gmra.mxu0 %v297
    %v555 = vpop.f32.mrf.mxu0
    %v556 = vadd.f32 0.0, %v555
    %v557 = vpop.f32.mrf.mxu0
    %v558 = vadd.f32 0.0, %v557
    %v559 = vpop.f32.mrf.mxu0
    %v560 = vadd.f32 0.0, %v559
    %v561 = vpop.f32.mrf.mxu0
    %v562 = vadd.f32 0.0, %v561
    %563 = vmatprep.mubr.bf16.mxu0 %v300
    %564 = vmatmul.mubr.bf16.gmra.mxu0 %v299
    %v565 = vpop.f32.mrf.mxu0
    %v566 = vadd.f32 0.0, %v565
    %v567 = vpop.f32.mrf.mxu0
    %v568 = vadd.f32 0.0, %v567
    %v569 = vpop.f32.mrf.mxu0
    %v570 = vadd.f32 0.0, %v569
    %v571 = vpop.f32.mrf.mxu0
    %v572 = vadd.f32 0.0, %v571
    %573 = vmatprep.mubr.bf16.mxu0 %v302
    %574 = vmatmul.mubr.bf16.gmra.mxu0 %v301
    %v575 = vpop.f32.mrf.mxu0
    %v576 = vadd.f32 0.0, %v575
    %v577 = vpop.f32.mrf.mxu0
    %v578 = vadd.f32 0.0, %v577
    %v579 = vpop.f32.mrf.mxu0
    %v580 = vadd.f32 0.0, %v579
    %v581 = vpop.f32.mrf.mxu0
    %v582 = vadd.f32 0.0, %v581
    %583 = vmatprep.mubr.bf16.mxu0 %v304
    %584 = vmatmul.mubr.bf16.gmra.mxu0 %v303
    %v585 = vpop.f32.mrf.mxu0
    %v586 = vadd.f32 0.0, %v585
    %v587 = vpop.f32.mrf.mxu0
    %v588 = vadd.f32 0.0, %v587
    %v589 = vpop.f32.mrf.mxu0
    %v590 = vadd.f32 0.0, %v589
    %v591 = vpop.f32.mrf.mxu0
    %v592 = vadd.f32 0.0, %v591
    %593 = vmatprep.mubr.bf16.mxu0 %v306
    %594 = vmatmul.mubr.bf16.gmra.mxu0 %v305
    %v595 = vpop.f32.mrf.mxu0
    %v596 = vadd.f32 0.0, %v595
    %v597 = vpop.f32.mrf.mxu0
    %v598 = vadd.f32 0.0, %v597
    %v599 = vpop.f32.mrf.mxu0
    %v600 = vadd.f32 0.0, %v599
    %v601 = vpop.f32.mrf.mxu0
    %v602 = vadd.f32 0.0, %v601
    %603 = vmatprep.mubr.bf16.mxu0 %v308
    %604 = vmatmul.mubr.bf16.gmra.mxu0 %v307
    %v605 = vpop.f32.mrf.mxu0
    %v606 = vadd.f32 0.0, %v605
    %v607 = vpop.f32.mrf.mxu0
    %v608 = vadd.f32 0.0, %v607
    %v609 = vpop.f32.mrf.mxu0
    %v610 = vadd.f32 0.0, %v609
    %v611 = vpop.f32.mrf.mxu0
    %v612 = vadd.f32 0.0, %v611
    %613 = vmatprep.mubr.bf16.mxu0 %v310
    %614 = vmatmul.mubr.bf16.gmra.mxu0 %v309
    %v615 = vpop.f32.mrf.mxu0
    %v616 = vadd.f32 0.0, %v615
    %v617 = vpop.f32.mrf.mxu0
    %v618 = vadd.f32 0.0, %v617
    %v619 = vpop.f32.mrf.mxu0
    %v620 = vadd.f32 0.0, %v619
    %v621 = vpop.f32.mrf.mxu0
    %v622 = vadd.f32 0.0, %v621
    %623 = vmatprep.mubr.bf16.mxu0 %v312
    %624 = vmatmul.mubr.bf16.gmra.mxu0 %v311
    %v625 = vpop.f32.mrf.mxu0
    %v626 = vadd.f32 0.0, %v625
    %v627 = vpop.f32.mrf.mxu0
    %v628 = vadd.f32 0.0, %v627
    %v629 = vpop.f32.mrf.mxu0
    %v630 = vadd.f32 0.0, %v629
    %v631 = vpop.f32.mrf.mxu0
    %v632 = vadd.f32 0.0, %v631
    %633 = vmatprep.mubr.bf16.mxu0 %v314
    %634 = vmatmul.mubr.bf16.gmra.mxu0 %v313
    %v635 = vpop.f32.mrf.mxu0
    %v636 = vadd.f32 0.0, %v635
    %v637 = vpop.f32.mrf.mxu0
    %v638 = vadd.f32 0.0, %v637
    %v639 = vpop.f32.mrf.mxu0
    %v640 = vadd.f32 0.0, %v639
    %v641 = vpop.f32.mrf.mxu0
    %v642 = vadd.f32 0.0, %v641
    %643 = vmatprep.mubr.bf16.mxu0 %v316
    %644 = vmatmul.mubr.bf16.gmra.mxu0 %v315
    %v645 = vpop.f32.mrf.mxu0
    %v646 = vadd.f32 0.0, %v645
    %v647 = vpop.f32.mrf.mxu0
    %v648 = vadd.f32 0.0, %v647
    %v649 = vpop.f32.mrf.mxu0
    %v650 = vadd.f32 0.0, %v649
    %v651 = vpop.f32.mrf.mxu0
    %v652 = vadd.f32 0.0, %v651
    %653 = vmatprep.mubr.bf16.mxu0 %v318
    %654 = vmatmul.mubr.bf16.gmra.mxu0 %v317
    %v655 = vpop.f32.mrf.mxu0
    %v656 = vadd.f32 0.0, %v655
    %v657 = vpop.f32.mrf.mxu0
    %v658 = vadd.f32 0.0, %v657
    %v659 = vpop.f32.mrf.mxu0
    %v660 = vadd.f32 0.0, %v659
    %v661 = vpop.f32.mrf.mxu0
    %v662 = vadd.f32 0.0, %v661
    %663 = vmatprep.mubr.bf16.mxu0 %v320
    %664 = vmatmul.mubr.bf16.gmra.mxu0 %v319
    %v665 = vpop.f32.mrf.mxu0
    %v666 = vadd.f32 0.0, %v665
    %v667 = vpop.f32.mrf.mxu0
    %v668 = vadd.f32 0.0, %v667
    %v669 = vpop.f32.mrf.mxu0
    %v670 = vadd.f32 0.0, %v669
    %v671 = vpop.f32.mrf.mxu0
    %v672 = vadd.f32 0.0, %v671
    %673 = vmatprep.mubr.bf16.mxu0 %v322
    %674 = vmatmul.mubr.bf16.gmra.mxu0 %v321
    %v675 = vpop.f32.mrf.mxu0
    %v676 = vadd.f32 0.0, %v675
    %v677 = vpop.f32.mrf.mxu0
    %v678 = vadd.f32 0.0, %v677
    %v679 = vpop.f32.mrf.mxu0
    %v680 = vadd.f32 0.0, %v679
    %v681 = vpop.f32.mrf.mxu0
    %v682 = vadd.f32 0.0, %v681
    %683 = vmatprep.mubr.bf16.mxu0 %v324
    %684 = vmatmul.mubr.bf16.gmra.mxu0 %v323
    %v685 = vpop.f32.mrf.mxu0
    %v686 = vadd.f32 0.0, %v685
    %v687 = vpop.f32.mrf.mxu0
    %v688 = vadd.f32 0.0, %v687
    %v689 = vpop.f32.mrf.mxu0
    %v690 = vadd.f32 0.0, %v689
    %v691 = vpop.f32.mrf.mxu0
    %v692 = vadd.f32 0.0, %v691
    %693 = vmatprep.mubr.bf16.mxu0 %v326
    %694 = vmatmul.mubr.bf16.gmra.mxu0 %v325
    %v695 = vpop.f32.mrf.mxu0
    %v696 = vadd.f32 0.0, %v695
    %v697 = vpop.f32.mrf.mxu0
    %v698 = vadd.f32 0.0, %v697
    %v699 = vpop.f32.mrf.mxu0
    %v700 = vadd.f32 0.0, %v699
    %v701 = vpop.f32.mrf.mxu0
    %v702 = vadd.f32 0.0, %v701
    %703 = vmatprep.mubr.bf16.mxu0 %v328
    %704 = vmatmul.mubr.bf16.gmra.mxu0 %v327
    %v705 = vpop.f32.mrf.mxu0
    %v706 = vadd.f32 0.0, %v705
    %v707 = vpop.f32.mrf.mxu0
    %v708 = vadd.f32 0.0, %v707
    %v709 = vpop.f32.mrf.mxu0
    %v710 = vadd.f32 0.0, %v709
    %v711 = vpop.f32.mrf.mxu0
    %v712 = vadd.f32 0.0, %v711
    %713 = vdwg.mxu0
    %v714 = vpack.c.bf16 %v560, %v556
    %v715 = vpack.c.bf16 %v562, %v558
    %v716 = vpack.c.bf16 %v570, %v566
    %v717 = vpack.c.bf16 %v572, %v568
    %v718 = vpack.c.bf16 %v580, %v576
    %v719 = vpack.c.bf16 %v582, %v578
    %v720 = vpack.c.bf16 %v590, %v586
    %v721 = vpack.c.bf16 %v592, %v588
    %v722 = vpack.c.bf16 %v600, %v596
    %v723 = vpack.c.bf16 %v602, %v598
    %v724 = vpack.c.bf16 %v610, %v606
    %v725 = vpack.c.bf16 %v612, %v608
    %v726 = vpack.c.bf16 %v620, %v616
    %v727 = vpack.c.bf16 %v622, %v618
    %v728 = vpack.c.bf16 %v630, %v626
    %v729 = vpack.c.bf16 %v632, %v628
    %v730 = vpack.c.bf16 %v640, %v636
    %v731 = vpack.c.bf16 %v642, %v638
    %v732 = vpack.c.bf16 %v650, %v646
    %v733 = vpack.c.bf16 %v652, %v648
    %v734 = vpack.c.bf16 %v660, %v656
    %v735 = vpack.c.bf16 %v662, %v658
    %v736 = vpack.c.bf16 %v670, %v666
    %v737 = vpack.c.bf16 %v672, %v668
    %v738 = vpack.c.bf16 %v680, %v676
    %v739 = vpack.c.bf16 %v682, %v678
    %v740 = vpack.c.bf16 %v690, %v686
    %v741 = vpack.c.bf16 %v692, %v688
    %v742 = vpack.c.bf16 %v700, %v696
    %v743 = vpack.c.bf16 %v702, %v698
    %v744 = vpack.c.bf16 %v710, %v706
    %v745 = vpack.c.bf16 %v712, %v708
    %v746 = vld [vmem:[#allocation8] sm:$0xff]
    %v747 = vld [vmem:[#allocation8 + $0x8] sm:$0xff]
    %v748 = vld [vmem:[#allocation8 + $0x10] sm:$0xff]
    %v749 = vld [vmem:[#allocation8 + $0x18] sm:$0xff]
    %v750 = vld [vmem:[#allocation8 + $0x20] sm:$0xff]
    %v751 = vld [vmem:[#allocation8 + $0x28] sm:$0xff]
    %v752 = vld [vmem:[#allocation8 + $0x30] sm:$0xff]
    %v753 = vld [vmem:[#allocation8 + $0x38] sm:$0xff]
    %v754 = vld [vmem:[#allocation8 + $0x40] sm:$0xff]
    %v755 = vld [vmem:[#allocation8 + $0x48] sm:$0xff]
    %v756 = vld [vmem:[#allocation8 + $0x50] sm:$0xff]
    %v757 = vld [vmem:[#allocation8 + $0x58] sm:$0xff]
    %v758 = vld [vmem:[#allocation8 + $0x60] sm:$0xff]
    %v759 = vld [vmem:[#allocation8 + $0x68] sm:$0xff]
    %v760 = vld [vmem:[#allocation8 + $0x70] sm:$0xff]
    %v761 = vld [vmem:[#allocation8 + $0x78] sm:$0xff]
    %v762 = vld [vmem:[#allocation8 + $0x80] sm:$0xff]
    %v763 = vld [vmem:[#allocation8 + $0x88] sm:$0xff]
    %v764 = vld [vmem:[#allocation8 + $0x90] sm:$0xff]
    %v765 = vld [vmem:[#allocation8 + $0x98] sm:$0xff]
    %v766 = vld [vmem:[#allocation8 + $0xa0] sm:$0xff]
    %v767 = vld [vmem:[#allocation8 + $0xa8] sm:$0xff]
    %v768 = vld [vmem:[#allocation8 + $0xb0] sm:$0xff]
    %v769 = vld [vmem:[#allocation8 + $0xb8] sm:$0xff]
    %v770 = vld [vmem:[#allocation8 + $0xc0] sm:$0xff]
    %v771 = vld [vmem:[#allocation8 + $0xc8] sm:$0xff]
    %v772 = vld [vmem:[#allocation8 + $0xd0] sm:$0xff]
    %v773 = vld [vmem:[#allocation8 + $0xd8] sm:$0xff]
    %v774 = vld [vmem:[#allocation8 + $0xe0] sm:$0xff]
    %v775 = vld [vmem:[#allocation8 + $0xe8] sm:$0xff]
    %v776 = vld [vmem:[#allocation8 + $0xf0] sm:$0xff]
    %v777 = vld [vmem:[#allocation8 + $0xf8] sm:$0xff]
    %v778 = vld [vmem:[#allocation9] sm:$0x3]
    %v780 = vlaneseq
    %v781 = vshrl.u32 %v780, 7
    %v782 = vsub.s32 0, %v781
    %v783 = vrot.slane %v778, %v782
    %v784 = vlaneseq
    %v785 = vshrl.u32 %v784, 7
    %v786 = vsub.s32 1, %v785
    %v787 = vrot.slane %v778, %v786
    %v822 = vunpack.c.l.b16 %v746
    %v823 = vunpack.c.h.b16 %v746
    %v824 = vunpack.c.l.b16 %v747
    %v825 = vunpack.c.h.b16 %v747
    %v826 = vunpack.c.l.b16 %v748
    %v827 = vunpack.c.h.b16 %v748
    %v828 = vunpack.c.l.b16 %v749
    %v829 = vunpack.c.h.b16 %v749
    %v830 = vunpack.c.l.b16 %v750
    %v831 = vunpack.c.h.b16 %v750
    %v832 = vunpack.c.l.b16 %v751
    %v833 = vunpack.c.h.b16 %v751
    %v834 = vunpack.c.l.b16 %v752
    %v835 = vunpack.c.h.b16 %v752
    %v836 = vunpack.c.l.b16 %v753
    %v837 = vunpack.c.h.b16 %v753
    %v838 = vunpack.c.l.b16 %v754
    %v839 = vunpack.c.h.b16 %v754
    %v840 = vunpack.c.l.b16 %v755
    %v841 = vunpack.c.h.b16 %v755
    %v842 = vunpack.c.l.b16 %v756
    %v843 = vunpack.c.h.b16 %v756
    %v844 = vunpack.c.l.b16 %v757
    %v845 = vunpack.c.h.b16 %v757
    %v846 = vunpack.c.l.b16 %v758
    %v847 = vunpack.c.h.b16 %v758
    %v848 = vunpack.c.l.b16 %v759
    %v849 = vunpack.c.h.b16 %v759
    %v850 = vunpack.c.l.b16 %v760
    %v851 = vunpack.c.h.b16 %v760
    %v852 = vunpack.c.l.b16 %v761
    %v853 = vunpack.c.h.b16 %v761
    %v854 = vunpack.c.l.b16 %v762
    %v855 = vunpack.c.h.b16 %v762
    %v856 = vunpack.c.l.b16 %v763
    %v857 = vunpack.c.h.b16 %v763
    %v858 = vunpack.c.l.b16 %v764
    %v859 = vunpack.c.h.b16 %v764
    %v860 = vunpack.c.l.b16 %v765
    %v861 = vunpack.c.h.b16 %v765
    %v862 = vunpack.c.l.b16 %v766
    %v863 = vunpack.c.h.b16 %v766
    %v864 = vunpack.c.l.b16 %v767
    %v865 = vunpack.c.h.b16 %v767
    %v866 = vunpack.c.l.b16 %v768
    %v867 = vunpack.c.h.b16 %v768
    %v868 = vunpack.c.l.b16 %v769
    %v869 = vunpack.c.h.b16 %v769
    %v870 = vunpack.c.l.b16 %v770
    %v871 = vunpack.c.h.b16 %v770
    %v872 = vunpack.c.l.b16 %v771
    %v873 = vunpack.c.h.b16 %v771
    %v874 = vunpack.c.l.b16 %v772
    %v875 = vunpack.c.h.b16 %v772
    %v876 = vunpack.c.l.b16 %v773
    %v877 = vunpack.c.h.b16 %v773
    %v878 = vunpack.c.l.b16 %v774
    %v879 = vunpack.c.h.b16 %v774
    %v880 = vunpack.c.l.b16 %v775
    %v881 = vunpack.c.h.b16 %v775
    %v882 = vunpack.c.l.b16 %v776
    %v883 = vunpack.c.h.b16 %v776
    %v884 = vunpack.c.l.b16 %v777
    %v885 = vunpack.c.h.b16 %v777
    %v886 = vpack.c.b16 %v824, %v822
    %v887 = vpack.c.b16 %v825, %v823
    %v888 = vpack.c.b16 %v828, %v826
    %v889 = vpack.c.b16 %v829, %v827
    %v890 = vpack.c.b16 %v832, %v830
    %v891 = vpack.c.b16 %v833, %v831
    %v892 = vpack.c.b16 %v836, %v834
    %v893 = vpack.c.b16 %v837, %v835
    %v894 = vpack.c.b16 %v840, %v838
    %v895 = vpack.c.b16 %v841, %v839
    %v896 = vpack.c.b16 %v844, %v842
    %v897 = vpack.c.b16 %v845, %v843
    %v898 = vpack.c.b16 %v848, %v846
    %v899 = vpack.c.b16 %v849, %v847
    %v900 = vpack.c.b16 %v852, %v850
    %v901 = vpack.c.b16 %v853, %v851
    %v902 = vpack.c.b16 %v856, %v854
    %v903 = vpack.c.b16 %v857, %v855
    %v904 = vpack.c.b16 %v860, %v858
    %v905 = vpack.c.b16 %v861, %v859
    %v906 = vpack.c.b16 %v864, %v862
    %v907 = vpack.c.b16 %v865, %v863
    %v908 = vpack.c.b16 %v868, %v866
    %v909 = vpack.c.b16 %v869, %v867
    %v910 = vpack.c.b16 %v872, %v870
    %v911 = vpack.c.b16 %v873, %v871
    %v912 = vpack.c.b16 %v876, %v874
    %v913 = vpack.c.b16 %v877, %v875
    %v914 = vpack.c.b16 %v880, %v878
    %v915 = vpack.c.b16 %v881, %v879
    %v916 = vpack.c.b16 %v884, %v882
    %v917 = vpack.c.b16 %v885, %v883
    %950 = vmatprep.subr.bf16.mxu0 %v901
    %951 = vmatpush1.bf16.msra.mxu0 %v900
    %952 = vmatprep.subr.bf16.mxu0 %v899
    %953 = vmatpush1.bf16.msra.mxu0 %v898
    %954 = vmatprep.subr.bf16.mxu0 %v897
    %955 = vmatpush1.bf16.msra.mxu0 %v896
    %956 = vmatprep.subr.bf16.mxu0 %v895
    %957 = vmatpush1.bf16.msra.mxu0 %v894
    %958 = vmatprep.subr.bf16.mxu0 %v893
    %959 = vmatpush1.bf16.msra.mxu0 %v892
    %960 = vmatprep.subr.bf16.mxu0 %v891
    %961 = vmatpush1.bf16.msra.mxu0 %v890
    %962 = vmatprep.subr.bf16.mxu0 %v889
    %963 = vmatpush1.bf16.msra.mxu0 %v888
    %964 = vmatprep.subr.bf16.mxu0 %v887
    %965 = vmatpush1.bf16.msra.mxu0 %v886
    %966 = vmatprep.subr.bf16.mxu0 %v917
    %967 = vmatpush2.bf16.msra.mxu0 %v916
    %968 = vmatprep.subr.bf16.mxu0 %v915
    %969 = vmatpush2.bf16.msra.mxu0 %v914
    %970 = vmatprep.subr.bf16.mxu0 %v913
    %971 = vmatpush2.bf16.msra.mxu0 %v912
    %972 = vmatprep.subr.bf16.mxu0 %v911
    %973 = vmatpush2.bf16.msra.mxu0 %v910
    %974 = vmatprep.subr.bf16.mxu0 %v909
    %975 = vmatpush2.bf16.msra.mxu0 %v908
    %976 = vmatprep.subr.bf16.mxu0 %v907
    %977 = vmatpush2.bf16.msra.mxu0 %v906
    %978 = vmatprep.subr.bf16.mxu0 %v905
    %979 = vmatpush2.bf16.msra.mxu0 %v904
    %980 = vmatprep.subr.bf16.mxu0 %v903
    %981 = vmatpush2.bf16.msra.mxu0 %v902
    %982 = vmatprep.mubr.bf16.mxu0 %v715
    %983 = vmatmul.mubr.bf16.gmra.mxu0 %v714
    %v984 = vpop.f32.mrf.mxu0
    %v985 = vadd.f32 %v783, %v984
    %v986 = vpop.f32.mrf.mxu0
    %v987 = vadd.f32 %v787, %v986
    %v988 = vpop.f32.mrf.mxu0
    %v989 = vadd.f32 %v783, %v988
    %v990 = vpop.f32.mrf.mxu0
    %v991 = vadd.f32 %v787, %v990
    %992 = vmatprep.mubr.bf16.mxu0 %v717
    %993 = vmatmul.mubr.bf16.gmra.mxu0 %v716
    %v994 = vpop.f32.mrf.mxu0
    %v995 = vadd.f32 %v783, %v994
    %v996 = vpop.f32.mrf.mxu0
    %v997 = vadd.f32 %v787, %v996
    %v998 = vpop.f32.mrf.mxu0
    %v999 = vadd.f32 %v783, %v998
    %v1000 = vpop.f32.mrf.mxu0
    %v1001 = vadd.f32 %v787, %v1000
    %1002 = vmatprep.mubr.bf16.mxu0 %v719
    %1003 = vmatmul.mubr.bf16.gmra.mxu0 %v718
    %v1004 = vpop.f32.mrf.mxu0
    %v1005 = vadd.f32 %v783, %v1004
    %v1006 = vpop.f32.mrf.mxu0
    %v1007 = vadd.f32 %v787, %v1006
    %v1008 = vpop.f32.mrf.mxu0
    %v1009 = vadd.f32 %v783, %v1008
    %v1010 = vpop.f32.mrf.mxu0
    %v1011 = vadd.f32 %v787, %v1010
    %1012 = vmatprep.mubr.bf16.mxu0 %v721
    %1013 = vmatmul.mubr.bf16.gmra.mxu0 %v720
    %v1014 = vpop.f32.mrf.mxu0
    %v1015 = vadd.f32 %v783, %v1014
    %v1016 = vpop.f32.mrf.mxu0
    %v1017 = vadd.f32 %v787, %v1016
    %v1018 = vpop.f32.mrf.mxu0
    %v1019 = vadd.f32 %v783, %v1018
    %v1020 = vpop.f32.mrf.mxu0
    %v1021 = vadd.f32 %v787, %v1020
    %1022 = vmatprep.mubr.bf16.mxu0 %v723
    %1023 = vmatmul.mubr.bf16.gmra.mxu0 %v722
    %v1024 = vpop.f32.mrf.mxu0
    %v1025 = vadd.f32 %v783, %v1024
    %v1026 = vpop.f32.mrf.mxu0
    %v1027 = vadd.f32 %v787, %v1026
    %v1028 = vpop.f32.mrf.mxu0
    %v1029 = vadd.f32 %v783, %v1028
    %v1030 = vpop.f32.mrf.mxu0
    %v1031 = vadd.f32 %v787, %v1030
    %1032 = vmatprep.mubr.bf16.mxu0 %v725
    %1033 = vmatmul.mubr.bf16.gmra.mxu0 %v724
    %v1034 = vpop.f32.mrf.mxu0
    %v1035 = vadd.f32 %v783, %v1034
    %v1036 = vpop.f32.mrf.mxu0
    %v1037 = vadd.f32 %v787, %v1036
    %v1038 = vpop.f32.mrf.mxu0
    %v1039 = vadd.f32 %v783, %v1038
    %v1040 = vpop.f32.mrf.mxu0
    %v1041 = vadd.f32 %v787, %v1040
    %1042 = vmatprep.mubr.bf16.mxu0 %v727
    %1043 = vmatmul.mubr.bf16.gmra.mxu0 %v726
    %v1044 = vpop.f32.mrf.mxu0
    %v1045 = vadd.f32 %v783, %v1044
    %v1046 = vpop.f32.mrf.mxu0
    %v1047 = vadd.f32 %v787, %v1046
    %v1048 = vpop.f32.mrf.mxu0
    %v1049 = vadd.f32 %v783, %v1048
    %v1050 = vpop.f32.mrf.mxu0
    %v1051 = vadd.f32 %v787, %v1050
    %1052 = vmatprep.mubr.bf16.mxu0 %v729
    %1053 = vmatmul.mubr.bf16.gmra.mxu0 %v728
    %v1054 = vpop.f32.mrf.mxu0
    %v1055 = vadd.f32 %v783, %v1054
    %v1056 = vpop.f32.mrf.mxu0
    %v1057 = vadd.f32 %v787, %v1056
    %v1058 = vpop.f32.mrf.mxu0
    %v1059 = vadd.f32 %v783, %v1058
    %v1060 = vpop.f32.mrf.mxu0
    %v1061 = vadd.f32 %v787, %v1060
    %1062 = vmatprep.mubr.bf16.mxu0 %v731
    %1063 = vmatmul.mubr.bf16.gmra.mxu0 %v730
    %v1064 = vpop.f32.mrf.mxu0
    %v1065 = vadd.f32 %v783, %v1064
    %v1066 = vpop.f32.mrf.mxu0
    %v1067 = vadd.f32 %v787, %v1066
    %v1068 = vpop.f32.mrf.mxu0
    %v1069 = vadd.f32 %v783, %v1068
    %v1070 = vpop.f32.mrf.mxu0
    %v1071 = vadd.f32 %v787, %v1070
    %1072 = vmatprep.mubr.bf16.mxu0 %v733
    %1073 = vmatmul.mubr.bf16.gmra.mxu0 %v732
    %v1074 = vpop.f32.mrf.mxu0
    %v1075 = vadd.f32 %v783, %v1074
    %v1076 = vpop.f32.mrf.mxu0
    %v1077 = vadd.f32 %v787, %v1076
    %v1078 = vpop.f32.mrf.mxu0
    %v1079 = vadd.f32 %v783, %v1078
    %v1080 = vpop.f32.mrf.mxu0
    %v1081 = vadd.f32 %v787, %v1080
    %1082 = vmatprep.mubr.bf16.mxu0 %v735
    %1083 = vmatmul.mubr.bf16.gmra.mxu0 %v734
    %v1084 = vpop.f32.mrf.mxu0
    %v1085 = vadd.f32 %v783, %v1084
    %v1086 = vpop.f32.mrf.mxu0
    %v1087 = vadd.f32 %v787, %v1086
    %v1088 = vpop.f32.mrf.mxu0
    %v1089 = vadd.f32 %v783, %v1088
    %v1090 = vpop.f32.mrf.mxu0
    %v1091 = vadd.f32 %v787, %v1090
    %1092 = vmatprep.mubr.bf16.mxu0 %v737
    %1093 = vmatmul.mubr.bf16.gmra.mxu0 %v736
    %v1094 = vpop.f32.mrf.mxu0
    %v1095 = vadd.f32 %v783, %v1094
    %v1096 = vpop.f32.mrf.mxu0
    %v1097 = vadd.f32 %v787, %v1096
    %v1098 = vpop.f32.mrf.mxu0
    %v1099 = vadd.f32 %v783, %v1098
    %v1100 = vpop.f32.mrf.mxu0
    %v1101 = vadd.f32 %v787, %v1100
    %1102 = vmatprep.mubr.bf16.mxu0 %v739
    %1103 = vmatmul.mubr.bf16.gmra.mxu0 %v738
    %v1104 = vpop.f32.mrf.mxu0
    %v1105 = vadd.f32 %v783, %v1104
    %v1106 = vpop.f32.mrf.mxu0
    %v1107 = vadd.f32 %v787, %v1106
    %v1108 = vpop.f32.mrf.mxu0
    %v1109 = vadd.f32 %v783, %v1108
    %v1110 = vpop.f32.mrf.mxu0
    %v1111 = vadd.f32 %v787, %v1110
    %1112 = vmatprep.mubr.bf16.mxu0 %v741
    %1113 = vmatmul.mubr.bf16.gmra.mxu0 %v740
    %v1114 = vpop.f32.mrf.mxu0
    %v1115 = vadd.f32 %v783, %v1114
    %v1116 = vpop.f32.mrf.mxu0
    %v1117 = vadd.f32 %v787, %v1116
    %v1118 = vpop.f32.mrf.mxu0
    %v1119 = vadd.f32 %v783, %v1118
    %v1120 = vpop.f32.mrf.mxu0
    %v1121 = vadd.f32 %v787, %v1120
    %1122 = vmatprep.mubr.bf16.mxu0 %v743
    %1123 = vmatmul.mubr.bf16.gmra.mxu0 %v742
    %v1124 = vpop.f32.mrf.mxu0
    %v1125 = vadd.f32 %v783, %v1124
    %v1126 = vpop.f32.mrf.mxu0
    %v1127 = vadd.f32 %v787, %v1126
    %v1128 = vpop.f32.mrf.mxu0
    %v1129 = vadd.f32 %v783, %v1128
    %v1130 = vpop.f32.mrf.mxu0
    %v1131 = vadd.f32 %v787, %v1130
    %1132 = vmatprep.mubr.bf16.mxu0 %v745
    %1133 = vmatmul.mubr.bf16.gmra.mxu0 %v744
    %v1134 = vpop.f32.mrf.mxu0
    %v1135 = vadd.f32 %v783, %v1134
    %v1136 = vpop.f32.mrf.mxu0
    %v1137 = vadd.f32 %v787, %v1136
    %v1138 = vpop.f32.mrf.mxu0
    %v1139 = vadd.f32 %v783, %v1138
    %v1140 = vpop.f32.mrf.mxu0
    %v1141 = vadd.f32 %v787, %v1140
    %1142 = vdwg.mxu0
    %v1143 = vmax.f32 %v985, 0.0
    %v1144 = vmax.f32 %v987, 0.0
    %v1145 = vmax.f32 %v989, 0.0
    %v1146 = vmax.f32 %v991, 0.0
    %v1147 = vmax.f32 %v995, 0.0
    %v1148 = vmax.f32 %v997, 0.0
    %v1149 = vmax.f32 %v999, 0.0
    %v1150 = vmax.f32 %v1001, 0.0
    %v1151 = vmax.f32 %v1005, 0.0
    %v1152 = vmax.f32 %v1007, 0.0
    %v1153 = vmax.f32 %v1009, 0.0
    %v1154 = vmax.f32 %v1011, 0.0
    %v1155 = vmax.f32 %v1015, 0.0
    %v1156 = vmax.f32 %v1017, 0.0
    %v1157 = vmax.f32 %v1019, 0.0
    %v1158 = vmax.f32 %v1021, 0.0
    %v1159 = vmax.f32 %v1025, 0.0
    %v1160 = vmax.f32 %v1027, 0.0
    %v1161 = vmax.f32 %v1029, 0.0
    %v1162 = vmax.f32 %v1031, 0.0
    %v1163 = vmax.f32 %v1035, 0.0
    %v1164 = vmax.f32 %v1037, 0.0
    %v1165 = vmax.f32 %v1039, 0.0
    %v1166 = vmax.f32 %v1041, 0.0
    %v1167 = vmax.f32 %v1045, 0.0
    %v1168 = vmax.f32 %v1047, 0.0
    %v1169 = vmax.f32 %v1049, 0.0
    %v1170 = vmax.f32 %v1051, 0.0
    %v1171 = vmax.f32 %v1055, 0.0
    %v1172 = vmax.f32 %v1057, 0.0
    %v1173 = vmax.f32 %v1059, 0.0
    %v1174 = vmax.f32 %v1061, 0.0
    %v1175 = vmax.f32 %v1065, 0.0
    %v1176 = vmax.f32 %v1067, 0.0
    %v1177 = vmax.f32 %v1069, 0.0
    %v1178 = vmax.f32 %v1071, 0.0
    %v1179 = vmax.f32 %v1075, 0.0
    %v1180 = vmax.f32 %v1077, 0.0
    %v1181 = vmax.f32 %v1079, 0.0
    %v1182 = vmax.f32 %v1081, 0.0
    %v1183 = vmax.f32 %v1085, 0.0
    %v1184 = vmax.f32 %v1087, 0.0
    %v1185 = vmax.f32 %v1089, 0.0
    %v1186 = vmax.f32 %v1091, 0.0
    %v1187 = vmax.f32 %v1095, 0.0
    %v1188 = vmax.f32 %v1097, 0.0
    %v1189 = vmax.f32 %v1099, 0.0
    %v1190 = vmax.f32 %v1101, 0.0
    %v1191 = vmax.f32 %v1105, 0.0
    %v1192 = vmax.f32 %v1107, 0.0
    %v1193 = vmax.f32 %v1109, 0.0
    %v1194 = vmax.f32 %v1111, 0.0
    %v1195 = vmax.f32 %v1115, 0.0
    %v1196 = vmax.f32 %v1117, 0.0
    %v1197 = vmax.f32 %v1119, 0.0
    %v1198 = vmax.f32 %v1121, 0.0
    %v1199 = vmax.f32 %v1125, 0.0
    %v1200 = vmax.f32 %v1127, 0.0
    %v1201 = vmax.f32 %v1129, 0.0
    %v1202 = vmax.f32 %v1131, 0.0
    %v1203 = vmax.f32 %v1135, 0.0
    %v1204 = vmax.f32 %v1137, 0.0
    %v1205 = vmax.f32 %v1139, 0.0
    %v1206 = vmax.f32 %v1141, 0.0
    %v1207 = vpack.c.bf16 %v1145, %v1143
    %v1208 = vpack.c.bf16 %v1146, %v1144
    %v1209 = vpack.c.bf16 %v1149, %v1147
    %v1210 = vpack.c.bf16 %v1150, %v1148
    %v1211 = vpack.c.bf16 %v1153, %v1151
    %v1212 = vpack.c.bf16 %v1154, %v1152
    %v1213 = vpack.c.bf16 %v1157, %v1155
    %v1214 = vpack.c.bf16 %v1158, %v1156
    %v1215 = vpack.c.bf16 %v1161, %v1159
    %v1216 = vpack.c.bf16 %v1162, %v1160
    %v1217 = vpack.c.bf16 %v1165, %v1163
    %v1218 = vpack.c.bf16 %v1166, %v1164
    %v1219 = vpack.c.bf16 %v1169, %v1167
    %v1220 = vpack.c.bf16 %v1170, %v1168
    %v1221 = vpack.c.bf16 %v1173, %v1171
    %v1222 = vpack.c.bf16 %v1174, %v1172
    %v1223 = vpack.c.bf16 %v1177, %v1175
    %v1224 = vpack.c.bf16 %v1178, %v1176
    %v1225 = vpack.c.bf16 %v1181, %v1179
    %v1226 = vpack.c.bf16 %v1182, %v1180
    %v1227 = vpack.c.bf16 %v1185, %v1183
    %v1228 = vpack.c.bf16 %v1186, %v1184
    %v1229 = vpack.c.bf16 %v1189, %v1187
    %v1230 = vpack.c.bf16 %v1190, %v1188
    %v1231 = vpack.c.bf16 %v1193, %v1191
    %v1232 = vpack.c.bf16 %v1194, %v1192
    %v1233 = vpack.c.bf16 %v1197, %v1195
    %v1234 = vpack.c.bf16 %v1198, %v1196
    %v1235 = vpack.c.bf16 %v1201, %v1199
    %v1236 = vpack.c.bf16 %v1202, %v1200
    %v1237 = vpack.c.bf16 %v1205, %v1203
    %v1238 = vpack.c.bf16 %v1206, %v1204
    %v1271 = vunpack.c.l.b16 %v1207
    %v1272 = vunpack.c.l.b16 %v1208
    %v1273 = vunpack.c.h.b16 %v1207
    %v1274 = vunpack.c.h.b16 %v1208
    %v1275 = vunpack.c.l.b16 %v1209
    %v1276 = vunpack.c.l.b16 %v1210
    %v1277 = vunpack.c.h.b16 %v1209
    %v1278 = vunpack.c.h.b16 %v1210
    %v1279 = vunpack.c.l.b16 %v1211
    %v1280 = vunpack.c.l.b16 %v1212
    %v1281 = vunpack.c.h.b16 %v1211
    %v1282 = vunpack.c.h.b16 %v1212
    %v1283 = vunpack.c.l.b16 %v1213
    %v1284 = vunpack.c.l.b16 %v1214
    %v1285 = vunpack.c.h.b16 %v1213
    %v1286 = vunpack.c.h.b16 %v1214
    %v1287 = vunpack.c.l.b16 %v1215
    %v1288 = vunpack.c.l.b16 %v1216
    %v1289 = vunpack.c.h.b16 %v1215
    %v1290 = vunpack.c.h.b16 %v1216
    %v1291 = vunpack.c.l.b16 %v1217
    %v1292 = vunpack.c.l.b16 %v1218
    %v1293 = vunpack.c.h.b16 %v1217
    %v1294 = vunpack.c.h.b16 %v1218
    %v1295 = vunpack.c.l.b16 %v1219
    %v1296 = vunpack.c.l.b16 %v1220
    %v1297 = vunpack.c.h.b16 %v1219
    %v1298 = vunpack.c.h.b16 %v1220
    %v1299 = vunpack.c.l.b16 %v1221
    %v1300 = vunpack.c.l.b16 %v1222
    %v1301 = vunpack.c.h.b16 %v1221
    %v1302 = vunpack.c.h.b16 %v1222
    %v1303 = vunpack.c.l.b16 %v1223
    %v1304 = vunpack.c.l.b16 %v1224
    %v1305 = vunpack.c.h.b16 %v1223
    %v1306 = vunpack.c.h.b16 %v1224
    %v1307 = vunpack.c.l.b16 %v1225
    %v1308 = vunpack.c.l.b16 %v1226
    %v1309 = vunpack.c.h.b16 %v1225
    %v1310 = vunpack.c.h.b16 %v1226
    %v1311 = vunpack.c.l.b16 %v1227
    %v1312 = vunpack.c.l.b16 %v1228
    %v1313 = vunpack.c.h.b16 %v1227
    %v1314 = vunpack.c.h.b16 %v1228
    %v1315 = vunpack.c.l.b16 %v1229
    %v1316 = vunpack.c.l.b16 %v1230
    %v1317 = vunpack.c.h.b16 %v1229
    %v1318 = vunpack.c.h.b16 %v1230
    %v1319 = vunpack.c.l.b16 %v1231
    %v1320 = vunpack.c.l.b16 %v1232
    %v1321 = vunpack.c.h.b16 %v1231
    %v1322 = vunpack.c.h.b16 %v1232
    %v1323 = vunpack.c.l.b16 %v1233
    %v1324 = vunpack.c.l.b16 %v1234
    %v1325 = vunpack.c.h.b16 %v1233
    %v1326 = vunpack.c.h.b16 %v1234
    %v1327 = vunpack.c.l.b16 %v1235
    %v1328 = vunpack.c.l.b16 %v1236
    %v1329 = vunpack.c.h.b16 %v1235
    %v1330 = vunpack.c.h.b16 %v1236
    %v1331 = vunpack.c.l.b16 %v1237
    %v1332 = vunpack.c.l.b16 %v1238
    %v1333 = vunpack.c.h.b16 %v1237
    %v1334 = vunpack.c.h.b16 %v1238
    %v1335 = vpack.c.b16 %v1272, %v1271
    %v1336 = vpack.c.b16 %v1274, %v1273
    %v1337 = vpack.c.b16 %v1276, %v1275
    %v1338 = vpack.c.b16 %v1278, %v1277
    %v1339 = vpack.c.b16 %v1280, %v1279
    %v1340 = vpack.c.b16 %v1282, %v1281
    %v1341 = vpack.c.b16 %v1284, %v1283
    %v1342 = vpack.c.b16 %v1286, %v1285
    %v1343 = vpack.c.b16 %v1288, %v1287
    %v1344 = vpack.c.b16 %v1290, %v1289
    %v1345 = vpack.c.b16 %v1292, %v1291
    %v1346 = vpack.c.b16 %v1294, %v1293
    %v1347 = vpack.c.b16 %v1296, %v1295
    %v1348 = vpack.c.b16 %v1298, %v1297
    %v1349 = vpack.c.b16 %v1300, %v1299
    %v1350 = vpack.c.b16 %v1302, %v1301
    %v1351 = vpack.c.b16 %v1304, %v1303
    %v1352 = vpack.c.b16 %v1306, %v1305
    %v1353 = vpack.c.b16 %v1308, %v1307
    %v1354 = vpack.c.b16 %v1310, %v1309
    %v1355 = vpack.c.b16 %v1312, %v1311
    %v1356 = vpack.c.b16 %v1314, %v1313
    %v1357 = vpack.c.b16 %v1316, %v1315
    %v1358 = vpack.c.b16 %v1318, %v1317
    %v1359 = vpack.c.b16 %v1320, %v1319
    %v1360 = vpack.c.b16 %v1322, %v1321
    %v1361 = vpack.c.b16 %v1324, %v1323
    %v1362 = vpack.c.b16 %v1326, %v1325
    %v1363 = vpack.c.b16 %v1328, %v1327
    %v1364 = vpack.c.b16 %v1330, %v1329
    %v1365 = vpack.c.b16 %v1332, %v1331
    %v1366 = vpack.c.b16 %v1334, %v1333
    %1399 = vst [vmem:[#allocation2] sm:$0xff] %v1335
    %1400 = vst [vmem:[#allocation2 + $0x8] sm:$0xff] %v1336
    %1401 = vst [vmem:[#allocation2 + $0x10] sm:$0xff] %v1337
    %1402 = vst [vmem:[#allocation2 + $0x18] sm:$0xff] %v1338
    %1403 = vst [vmem:[#allocation2 + $0x20] sm:$0xff] %v1339
    %1404 = vst [vmem:[#allocation2 + $0x28] sm:$0xff] %v1340
    %1405 = vst [vmem:[#allocation2 + $0x30] sm:$0xff] %v1341
    %1406 = vst [vmem:[#allocation2 + $0x38] sm:$0xff] %v1342
    %1407 = vst [vmem:[#allocation2 + $0x40] sm:$0xff] %v1343
    %1408 = vst [vmem:[#allocation2 + $0x48] sm:$0xff] %v1344
    %1409 = vst [vmem:[#allocation2 + $0x50] sm:$0xff] %v1345
    %1410 = vst [vmem:[#allocation2 + $0x58] sm:$0xff] %v1346
    %1411 = vst [vmem:[#allocation2 + $0x60] sm:$0xff] %v1347
    %1412 = vst [vmem:[#allocation2 + $0x68] sm:$0xff] %v1348
    %1413 = vst [vmem:[#allocation2 + $0x70] sm:$0xff] %v1349
    %1414 = vst [vmem:[#allocation2 + $0x78] sm:$0xff] %v1350
    %1415 = vst [vmem:[#allocation2 + $0x80] sm:$0xff] %v1351
    %1416 = vst [vmem:[#allocation2 + $0x88] sm:$0xff] %v1352
    %1417 = vst [vmem:[#allocation2 + $0x90] sm:$0xff] %v1353
    %1418 = vst [vmem:[#allocation2 + $0x98] sm:$0xff] %v1354
    %1419 = vst [vmem:[#allocation2 + $0xa0] sm:$0xff] %v1355
    %1420 = vst [vmem:[#allocation2 + $0xa8] sm:$0xff] %v1356
    %1421 = vst [vmem:[#allocation2 + $0xb0] sm:$0xff] %v1357
    %1422 = vst [vmem:[#allocation2 + $0xb8] sm:$0xff] %v1358
    %1423 = vst [vmem:[#allocation2 + $0xc0] sm:$0xff] %v1359
    %1424 = vst [vmem:[#allocation2 + $0xc8] sm:$0xff] %v1360
    %1425 = vst [vmem:[#allocation2 + $0xd0] sm:$0xff] %v1361
    %1426 = vst [vmem:[#allocation2 + $0xd8] sm:$0xff] %v1362
    %1427 = vst [vmem:[#allocation2 + $0xe0] sm:$0xff] %v1363
    %1428 = vst [vmem:[#allocation2 + $0xe8] sm:$0xff] %v1364
    %1429 = vst [vmem:[#allocation2 + $0xf0] sm:$0xff] %v1365
    %1430 = vst [vmem:[#allocation2 + $0xf8] sm:$0xff] %v1366
    %v1431 = vld [vmem:[#allocation2] sm:$0xff]
    %v1432 = vld [vmem:[#allocation2 + $0x8] sm:$0xff]
    %v1433 = vld [vmem:[#allocation2 + $0x10] sm:$0xff]
    %v1434 = vld [vmem:[#allocation2 + $0x18] sm:$0xff]
    %v1435 = vld [vmem:[#allocation2 + $0x20] sm:$0xff]
    %v1436 = vld [vmem:[#allocation2 + $0x28] sm:$0xff]
    %v1437 = vld [vmem:[#allocation2 + $0x30] sm:$0xff]
    %v1438 = vld [vmem:[#allocation2 + $0x38] sm:$0xff]
    %v1439 = vld [vmem:[#allocation2 + $0x40] sm:$0xff]
    %v1440 = vld [vmem:[#allocation2 + $0x48] sm:$0xff]
    %v1441 = vld [vmem:[#allocation2 + $0x50] sm:$0xff]
    %v1442 = vld [vmem:[#allocation2 + $0x58] sm:$0xff]
    %v1443 = vld [vmem:[#allocation2 + $0x60] sm:$0xff]
    %v1444 = vld [vmem:[#allocation2 + $0x68] sm:$0xff]
    %v1445 = vld [vmem:[#allocation2 + $0x70] sm:$0xff]
    %v1446 = vld [vmem:[#allocation2 + $0x78] sm:$0xff]
    %v1447 = vld [vmem:[#allocation2 + $0x80] sm:$0xff]
    %v1448 = vld [vmem:[#allocation2 + $0x88] sm:$0xff]
    %v1449 = vld [vmem:[#allocation2 + $0x90] sm:$0xff]
    %v1450 = vld [vmem:[#allocation2 + $0x98] sm:$0xff]
    %v1451 = vld [vmem:[#allocation2 + $0xa0] sm:$0xff]
    %v1452 = vld [vmem:[#allocation2 + $0xa8] sm:$0xff]
    %v1453 = vld [vmem:[#allocation2 + $0xb0] sm:$0xff]
    %v1454 = vld [vmem:[#allocation2 + $0xb8] sm:$0xff]
    %v1455 = vld [vmem:[#allocation2 + $0xc0] sm:$0xff]
    %v1456 = vld [vmem:[#allocation2 + $0xc8] sm:$0xff]
    %v1457 = vld [vmem:[#allocation2 + $0xd0] sm:$0xff]
    %v1458 = vld [vmem:[#allocation2 + $0xd8] sm:$0xff]
    %v1459 = vld [vmem:[#allocation2 + $0xe0] sm:$0xff]
    %v1460 = vld [vmem:[#allocation2 + $0xe8] sm:$0xff]
    %v1461 = vld [vmem:[#allocation2 + $0xf0] sm:$0xff]
    %v1462 = vld [vmem:[#allocation2 + $0xf8] sm:$0xff]
    %v1495 = vunpack.c.l.b16 %v1431
    %v1496 = vunpack.c.h.b16 %v1431
    %v1497 = vunpack.c.l.b16 %v1432
    %v1498 = vunpack.c.h.b16 %v1432
    %v1499 = vunpack.c.l.b16 %v1433
    %v1500 = vunpack.c.h.b16 %v1433
    %v1501 = vunpack.c.l.b16 %v1434
    %v1502 = vunpack.c.h.b16 %v1434
    %v1503 = vunpack.c.l.b16 %v1435
    %v1504 = vunpack.c.h.b16 %v1435
    %v1505 = vunpack.c.l.b16 %v1436
    %v1506 = vunpack.c.h.b16 %v1436
    %v1507 = vunpack.c.l.b16 %v1437
    %v1508 = vunpack.c.h.b16 %v1437
    %v1509 = vunpack.c.l.b16 %v1438
    %v1510 = vunpack.c.h.b16 %v1438
    %v1511 = vunpack.c.l.b16 %v1439
    %v1512 = vunpack.c.h.b16 %v1439
    %v1513 = vunpack.c.l.b16 %v1440
    %v1514 = vunpack.c.h.b16 %v1440
    %v1515 = vunpack.c.l.b16 %v1441
    %v1516 = vunpack.c.h.b16 %v1441
    %v1517 = vunpack.c.l.b16 %v1442
    %v1518 = vunpack.c.h.b16 %v1442
    %v1519 = vunpack.c.l.b16 %v1443
    %v1520 = vunpack.c.h.b16 %v1443
    %v1521 = vunpack.c.l.b16 %v1444
    %v1522 = vunpack.c.h.b16 %v1444
    %v1523 = vunpack.c.l.b16 %v1445
    %v1524 = vunpack.c.h.b16 %v1445
    %v1525 = vunpack.c.l.b16 %v1446
    %v1526 = vunpack.c.h.b16 %v1446
    %v1527 = vunpack.c.l.b16 %v1447
    %v1528 = vunpack.c.h.b16 %v1447
    %v1529 = vunpack.c.l.b16 %v1448
    %v1530 = vunpack.c.h.b16 %v1448
    %v1531 = vunpack.c.l.b16 %v1449
    %v1532 = vunpack.c.h.b16 %v1449
    %v1533 = vunpack.c.l.b16 %v1450
    %v1534 = vunpack.c.h.b16 %v1450
    %v1535 = vunpack.c.l.b16 %v1451
    %v1536 = vunpack.c.h.b16 %v1451
    %v1537 = vunpack.c.l.b16 %v1452
    %v1538 = vunpack.c.h.b16 %v1452
    %v1539 = vunpack.c.l.b16 %v1453
    %v1540 = vunpack.c.h.b16 %v1453
    %v1541 = vunpack.c.l.b16 %v1454
    %v1542 = vunpack.c.h.b16 %v1454
    %v1543 = vunpack.c.l.b16 %v1455
    %v1544 = vunpack.c.h.b16 %v1455
    %v1545 = vunpack.c.l.b16 %v1456
    %v1546 = vunpack.c.h.b16 %v1456
    %v1547 = vunpack.c.l.b16 %v1457
    %v1548 = vunpack.c.h.b16 %v1457
    %v1549 = vunpack.c.l.b16 %v1458
    %v1550 = vunpack.c.h.b16 %v1458
    %v1551 = vunpack.c.l.b16 %v1459
    %v1552 = vunpack.c.h.b16 %v1459
    %v1553 = vunpack.c.l.b16 %v1460
    %v1554 = vunpack.c.h.b16 %v1460
    %v1555 = vunpack.c.l.b16 %v1461
    %v1556 = vunpack.c.h.b16 %v1461
    %v1557 = vunpack.c.l.b16 %v1462
    %v1558 = vunpack.c.h.b16 %v1462
    %v1559 = vpack.c.b16 %v1497, %v1495
    %v1560 = vpack.c.b16 %v1498, %v1496
    %v1561 = vpack.c.b16 %v1501, %v1499
    %v1562 = vpack.c.b16 %v1502, %v1500
    %v1563 = vpack.c.b16 %v1505, %v1503
    %v1564 = vpack.c.b16 %v1506, %v1504
    %v1565 = vpack.c.b16 %v1509, %v1507
    %v1566 = vpack.c.b16 %v1510, %v1508
    %v1567 = vpack.c.b16 %v1513, %v1511
    %v1568 = vpack.c.b16 %v1514, %v1512
    %v1569 = vpack.c.b16 %v1517, %v1515
    %v1570 = vpack.c.b16 %v1518, %v1516
    %v1571 = vpack.c.b16 %v1521, %v1519
    %v1572 = vpack.c.b16 %v1522, %v1520
    %v1573 = vpack.c.b16 %v1525, %v1523
    %v1574 = vpack.c.b16 %v1526, %v1524
    %v1575 = vpack.c.b16 %v1529, %v1527
    %v1576 = vpack.c.b16 %v1530, %v1528
    %v1577 = vpack.c.b16 %v1533, %v1531
    %v1578 = vpack.c.b16 %v1534, %v1532
    %v1579 = vpack.c.b16 %v1537, %v1535
    %v1580 = vpack.c.b16 %v1538, %v1536
    %v1581 = vpack.c.b16 %v1541, %v1539
    %v1582 = vpack.c.b16 %v1542, %v1540
    %v1583 = vpack.c.b16 %v1545, %v1543
    %v1584 = vpack.c.b16 %v1546, %v1544
    %v1585 = vpack.c.b16 %v1549, %v1547
    %v1586 = vpack.c.b16 %v1550, %v1548
    %v1587 = vpack.c.b16 %v1553, %v1551
    %v1588 = vpack.c.b16 %v1554, %v1552
    %v1589 = vpack.c.b16 %v1557, %v1555
    %v1590 = vpack.c.b16 %v1558, %v1556
    %1623 = vmatprep.subr.bf16.mxu0 %v1574
    %1624 = vmatpush1.bf16.msra.mxu0 %v1573
    %1625 = vmatprep.subr.bf16.mxu0 %v1572
    %1626 = vmatpush1.bf16.msra.mxu0 %v1571
    %1627 = vmatprep.subr.bf16.mxu0 %v1570
    %1628 = vmatpush1.bf16.msra.mxu0 %v1569
    %1629 = vmatprep.subr.bf16.mxu0 %v1568
    %1630 = vmatpush1.bf16.msra.mxu0 %v1567
    %1631 = vmatprep.subr.bf16.mxu0 %v1566
    %1632 = vmatpush1.bf16.msra.mxu0 %v1565
    %1633 = vmatprep.subr.bf16.mxu0 %v1564
    %1634 = vmatpush1.bf16.msra.mxu0 %v1563
    %1635 = vmatprep.subr.bf16.mxu0 %v1562
    %1636 = vmatpush1.bf16.msra.mxu0 %v1561
    %1637 = vmatprep.subr.bf16.mxu0 %v1560
    %1638 = vmatpush1.bf16.msra.mxu0 %v1559
    %1639 = vmatprep.subr.bf16.mxu0 %v1590
    %1640 = vmatpush2.bf16.msra.mxu0 %v1589
    %1641 = vmatprep.subr.bf16.mxu0 %v1588
    %1642 = vmatpush2.bf16.msra.mxu0 %v1587
    %1643 = vmatprep.subr.bf16.mxu0 %v1586
    %1644 = vmatpush2.bf16.msra.mxu0 %v1585
    %1645 = vmatprep.subr.bf16.mxu0 %v1584
    %1646 = vmatpush2.bf16.msra.mxu0 %v1583
    %1647 = vmatprep.subr.bf16.mxu0 %v1582
    %1648 = vmatpush2.bf16.msra.mxu0 %v1581
    %1649 = vmatprep.subr.bf16.mxu0 %v1580
    %1650 = vmatpush2.bf16.msra.mxu0 %v1579
    %1651 = vmatprep.subr.bf16.mxu0 %v1578
    %1652 = vmatpush2.bf16.msra.mxu0 %v1577
    %1653 = vmatprep.subr.bf16.mxu0 %v1576
    %1654 = vmatpush2.bf16.msra.mxu0 %v1575
    %1655 = vmatprep.mubr.bf16.mxu0 %v298
    %1656 = vmatmul.mubr.bf16.gmra.mxu0 %v297
    %v1657 = vpop.f32.mrf.mxu0
    %v1658 = vadd.f32 0.0, %v1657
    %v1659 = vpop.f32.mrf.mxu0
    %v1660 = vadd.f32 0.0, %v1659
    %v1661 = vpop.f32.mrf.mxu0
    %v1662 = vadd.f32 0.0, %v1661
    %v1663 = vpop.f32.mrf.mxu0
    %v1664 = vadd.f32 0.0, %v1663
    %1665 = vmatprep.mubr.bf16.mxu0 %v300
    %1666 = vmatmul.mubr.bf16.gmra.mxu0 %v299
    %v1667 = vpop.f32.mrf.mxu0
    %v1668 = vadd.f32 0.0, %v1667
    %v1669 = vpop.f32.mrf.mxu0
    %v1670 = vadd.f32 0.0, %v1669
    %v1671 = vpop.f32.mrf.mxu0
    %v1672 = vadd.f32 0.0, %v1671
    %v1673 = vpop.f32.mrf.mxu0
    %v1674 = vadd.f32 0.0, %v1673
    %1675 = vmatprep.mubr.bf16.mxu0 %v302
    %1676 = vmatmul.mubr.bf16.gmra.mxu0 %v301
    %v1677 = vpop.f32.mrf.mxu0
    %v1678 = vadd.f32 0.0, %v1677
    %v1679 = vpop.f32.mrf.mxu0
    %v1680 = vadd.f32 0.0, %v1679
    %v1681 = vpop.f32.mrf.mxu0
    %v1682 = vadd.f32 0.0, %v1681
    %v1683 = vpop.f32.mrf.mxu0
    %v1684 = vadd.f32 0.0, %v1683
    %1685 = vmatprep.mubr.bf16.mxu0 %v304
    %1686 = vmatmul.mubr.bf16.gmra.mxu0 %v303
    %v1687 = vpop.f32.mrf.mxu0
    %v1688 = vadd.f32 0.0, %v1687
    %v1689 = vpop.f32.mrf.mxu0
    %v1690 = vadd.f32 0.0, %v1689
    %v1691 = vpop.f32.mrf.mxu0
    %v1692 = vadd.f32 0.0, %v1691
    %v1693 = vpop.f32.mrf.mxu0
    %v1694 = vadd.f32 0.0, %v1693
    %1695 = vmatprep.mubr.bf16.mxu0 %v306
    %1696 = vmatmul.mubr.bf16.gmra.mxu0 %v305
    %v1697 = vpop.f32.mrf.mxu0
    %v1698 = vadd.f32 0.0, %v1697
    %v1699 = vpop.f32.mrf.mxu0
    %v1700 = vadd.f32 0.0, %v1699
    %v1701 = vpop.f32.mrf.mxu0
    %v1702 = vadd.f32 0.0, %v1701
    %v1703 = vpop.f32.mrf.mxu0
    %v1704 = vadd.f32 0.0, %v1703
    %1705 = vmatprep.mubr.bf16.mxu0 %v308
    %1706 = vmatmul.mubr.bf16.gmra.mxu0 %v307
    %v1707 = vpop.f32.mrf.mxu0
    %v1708 = vadd.f32 0.0, %v1707
    %v1709 = vpop.f32.mrf.mxu0
    %v1710 = vadd.f32 0.0, %v1709
    %v1711 = vpop.f32.mrf.mxu0
    %v1712 = vadd.f32 0.0, %v1711
    %v1713 = vpop.f32.mrf.mxu0
    %v1714 = vadd.f32 0.0, %v1713
    %1715 = vmatprep.mubr.bf16.mxu0 %v310
    %1716 = vmatmul.mubr.bf16.gmra.mxu0 %v309
    %v1717 = vpop.f32.mrf.mxu0
    %v1718 = vadd.f32 0.0, %v1717
    %v1719 = vpop.f32.mrf.mxu0
    %v1720 = vadd.f32 0.0, %v1719
    %v1721 = vpop.f32.mrf.mxu0
    %v1722 = vadd.f32 0.0, %v1721
    %v1723 = vpop.f32.mrf.mxu0
    %v1724 = vadd.f32 0.0, %v1723
    %1725 = vmatprep.mubr.bf16.mxu0 %v312
    %1726 = vmatmul.mubr.bf16.gmra.mxu0 %v311
    %v1727 = vpop.f32.mrf.mxu0
    %v1728 = vadd.f32 0.0, %v1727
    %v1729 = vpop.f32.mrf.mxu0
    %v1730 = vadd.f32 0.0, %v1729
    %v1731 = vpop.f32.mrf.mxu0
    %v1732 = vadd.f32 0.0, %v1731
    %v1733 = vpop.f32.mrf.mxu0
    %v1734 = vadd.f32 0.0, %v1733
    %1735 = vmatprep.mubr.bf16.mxu0 %v314
    %1736 = vmatmul.mubr.bf16.gmra.mxu0 %v313
    %v1737 = vpop.f32.mrf.mxu0
    %v1738 = vadd.f32 0.0, %v1737
    %v1739 = vpop.f32.mrf.mxu0
    %v1740 = vadd.f32 0.0, %v1739
    %v1741 = vpop.f32.mrf.mxu0
    %v1742 = vadd.f32 0.0, %v1741
    %v1743 = vpop.f32.mrf.mxu0
    %v1744 = vadd.f32 0.0, %v1743
    %1745 = vmatprep.mubr.bf16.mxu0 %v316
    %1746 = vmatmul.mubr.bf16.gmra.mxu0 %v315
    %v1747 = vpop.f32.mrf.mxu0
    %v1748 = vadd.f32 0.0, %v1747
    %v1749 = vpop.f32.mrf.mxu0
    %v1750 = vadd.f32 0.0, %v1749
    %v1751 = vpop.f32.mrf.mxu0
    %v1752 = vadd.f32 0.0, %v1751
    %v1753 = vpop.f32.mrf.mxu0
    %v1754 = vadd.f32 0.0, %v1753
    %1755 = vmatprep.mubr.bf16.mxu0 %v318
    %1756 = vmatmul.mubr.bf16.gmra.mxu0 %v317
    %v1757 = vpop.f32.mrf.mxu0
    %v1758 = vadd.f32 0.0, %v1757
    %v1759 = vpop.f32.mrf.mxu0
    %v1760 = vadd.f32 0.0, %v1759
    %v1761 = vpop.f32.mrf.mxu0
    %v1762 = vadd.f32 0.0, %v1761
    %v1763 = vpop.f32.mrf.mxu0
    %v1764 = vadd.f32 0.0, %v1763
    %1765 = vmatprep.mubr.bf16.mxu0 %v320
    %1766 = vmatmul.mubr.bf16.gmra.mxu0 %v319
    %v1767 = vpop.f32.mrf.mxu0
    %v1768 = vadd.f32 0.0, %v1767
    %v1769 = vpop.f32.mrf.mxu0
    %v1770 = vadd.f32 0.0, %v1769
    %v1771 = vpop.f32.mrf.mxu0
    %v1772 = vadd.f32 0.0, %v1771
    %v1773 = vpop.f32.mrf.mxu0
    %v1774 = vadd.f32 0.0, %v1773
    %1775 = vmatprep.mubr.bf16.mxu0 %v322
    %1776 = vmatmul.mubr.bf16.gmra.mxu0 %v321
    %v1777 = vpop.f32.mrf.mxu0
    %v1778 = vadd.f32 0.0, %v1777
    %v1779 = vpop.f32.mrf.mxu0
    %v1780 = vadd.f32 0.0, %v1779
    %v1781 = vpop.f32.mrf.mxu0
    %v1782 = vadd.f32 0.0, %v1781
    %v1783 = vpop.f32.mrf.mxu0
    %v1784 = vadd.f32 0.0, %v1783
    %1785 = vmatprep.mubr.bf16.mxu0 %v324
    %1786 = vmatmul.mubr.bf16.gmra.mxu0 %v323
    %v1787 = vpop.f32.mrf.mxu0
    %v1788 = vadd.f32 0.0, %v1787
    %v1789 = vpop.f32.mrf.mxu0
    %v1790 = vadd.f32 0.0, %v1789
    %v1791 = vpop.f32.mrf.mxu0
    %v1792 = vadd.f32 0.0, %v1791
    %v1793 = vpop.f32.mrf.mxu0
    %v1794 = vadd.f32 0.0, %v1793
    %1795 = vmatprep.mubr.bf16.mxu0 %v326
    %1796 = vmatmul.mubr.bf16.gmra.mxu0 %v325
    %v1797 = vpop.f32.mrf.mxu0
    %v1798 = vadd.f32 0.0, %v1797
    %v1799 = vpop.f32.mrf.mxu0
    %v1800 = vadd.f32 0.0, %v1799
    %v1801 = vpop.f32.mrf.mxu0
    %v1802 = vadd.f32 0.0, %v1801
    %v1803 = vpop.f32.mrf.mxu0
    %v1804 = vadd.f32 0.0, %v1803
    %1805 = vmatprep.mubr.bf16.mxu0 %v328
    %1806 = vmatmul.mubr.bf16.gmra.mxu0 %v327
    %v1807 = vpop.f32.mrf.mxu0
    %v1808 = vadd.f32 0.0, %v1807
    %v1809 = vpop.f32.mrf.mxu0
    %v1810 = vadd.f32 0.0, %v1809
    %v1811 = vpop.f32.mrf.mxu0
    %v1812 = vadd.f32 0.0, %v1811
    %v1813 = vpop.f32.mrf.mxu0
    %v1814 = vadd.f32 0.0, %v1813
    %1815 = vdwg.mxu0
    %v1816 = vpack.c.bf16 %v1662, %v1658
    %v1817 = vpack.c.bf16 %v1664, %v1660
    %v1818 = vpack.c.bf16 %v1672, %v1668
    %v1819 = vpack.c.bf16 %v1674, %v1670
    %v1820 = vpack.c.bf16 %v1682, %v1678
    %v1821 = vpack.c.bf16 %v1684, %v1680
    %v1822 = vpack.c.bf16 %v1692, %v1688
    %v1823 = vpack.c.bf16 %v1694, %v1690
    %v1824 = vpack.c.bf16 %v1702, %v1698
    %v1825 = vpack.c.bf16 %v1704, %v1700
    %v1826 = vpack.c.bf16 %v1712, %v1708
    %v1827 = vpack.c.bf16 %v1714, %v1710
    %v1828 = vpack.c.bf16 %v1722, %v1718
    %v1829 = vpack.c.bf16 %v1724, %v1720
    %v1830 = vpack.c.bf16 %v1732, %v1728
    %v1831 = vpack.c.bf16 %v1734, %v1730
    %v1832 = vpack.c.bf16 %v1742, %v1738
    %v1833 = vpack.c.bf16 %v1744, %v1740
    %v1834 = vpack.c.bf16 %v1752, %v1748
    %v1835 = vpack.c.bf16 %v1754, %v1750
    %v1836 = vpack.c.bf16 %v1762, %v1758
    %v1837 = vpack.c.bf16 %v1764, %v1760
    %v1838 = vpack.c.bf16 %v1772, %v1768
    %v1839 = vpack.c.bf16 %v1774, %v1770
    %v1840 = vpack.c.bf16 %v1782, %v1778
    %v1841 = vpack.c.bf16 %v1784, %v1780
    %v1842 = vpack.c.bf16 %v1792, %v1788
    %v1843 = vpack.c.bf16 %v1794, %v1790
    %v1844 = vpack.c.bf16 %v1802, %v1798
    %v1845 = vpack.c.bf16 %v1804, %v1800
    %v1846 = vpack.c.bf16 %v1812, %v1808
    %v1847 = vpack.c.bf16 %v1814, %v1810
    %s1848 = scalar_lea.vmem [#allocation8], 256
    %v1849 = vld [vmem:[%s1848] sm:$0xff]
    %v1850 = vld [vmem:[%s1848 + $0x8] sm:$0xff]
    %v1851 = vld [vmem:[%s1848 + $0x10] sm:$0xff]
    %v1852 = vld [vmem:[%s1848 + $0x18] sm:$0xff]
    %v1853 = vld [vmem:[%s1848 + $0x20] sm:$0xff]
    %v1854 = vld [vmem:[%s1848 + $0x28] sm:$0xff]
    %v1855 = vld [vmem:[%s1848 + $0x30] sm:$0xff]
    %v1856 = vld [vmem:[%s1848 + $0x38] sm:$0xff]
    %v1857 = vld [vmem:[%s1848 + $0x40] sm:$0xff]
    %v1858 = vld [vmem:[%s1848 + $0x48] sm:$0xff]
    %v1859 = vld [vmem:[%s1848 + $0x50] sm:$0xff]
    %v1860 = vld [vmem:[%s1848 + $0x58] sm:$0xff]
    %v1861 = vld [vmem:[%s1848 + $0x60] sm:$0xff]
    %v1862 = vld [vmem:[%s1848 + $0x68] sm:$0xff]
    %v1863 = vld [vmem:[%s1848 + $0x70] sm:$0xff]
    %v1864 = vld [vmem:[%s1848 + $0x78] sm:$0xff]
    %v1865 = vld [vmem:[%s1848 + $0x80] sm:$0xff]
    %v1866 = vld [vmem:[%s1848 + $0x88] sm:$0xff]
    %v1867 = vld [vmem:[%s1848 + $0x90] sm:$0xff]
    %v1868 = vld [vmem:[%s1848 + $0x98] sm:$0xff]
    %v1869 = vld [vmem:[%s1848 + $0xa0] sm:$0xff]
    %v1870 = vld [vmem:[%s1848 + $0xa8] sm:$0xff]
    %v1871 = vld [vmem:[%s1848 + $0xb0] sm:$0xff]
    %v1872 = vld [vmem:[%s1848 + $0xb8] sm:$0xff]
    %v1873 = vld [vmem:[%s1848 + $0xc0] sm:$0xff]
    %v1874 = vld [vmem:[%s1848 + $0xc8] sm:$0xff]
    %v1875 = vld [vmem:[%s1848 + $0xd0] sm:$0xff]
    %v1876 = vld [vmem:[%s1848 + $0xd8] sm:$0xff]
    %v1877 = vld [vmem:[%s1848 + $0xe0] sm:$0xff]
    %v1878 = vld [vmem:[%s1848 + $0xe8] sm:$0xff]
    %v1879 = vld [vmem:[%s1848 + $0xf0] sm:$0xff]
    %v1880 = vld [vmem:[%s1848 + $0xf8] sm:$0xff]
    %s1881 = scalar_lea.vmem [#allocation9], 2
    %v1882 = vld [vmem:[%s1881] sm:$0x3]
    %v1884 = vlaneseq
    %v1885 = vshrl.u32 %v1884, 7
    %v1886 = vsub.s32 0, %v1885
    %v1887 = vrot.slane %v1882, %v1886
    %v1888 = vlaneseq
    %v1889 = vshrl.u32 %v1888, 7
    %v1890 = vsub.s32 1, %v1889
    %v1891 = vrot.slane %v1882, %v1890
    %v1926 = vunpack.c.l.b16 %v1849
    %v1927 = vunpack.c.h.b16 %v1849
    %v1928 = vunpack.c.l.b16 %v1850
    %v1929 = vunpack.c.h.b16 %v1850
    %v1930 = vunpack.c.l.b16 %v1851
    %v1931 = vunpack.c.h.b16 %v1851
    %v1932 = vunpack.c.l.b16 %v1852
    %v1933 = vunpack.c.h.b16 %v1852
    %v1934 = vunpack.c.l.b16 %v1853
    %v1935 = vunpack.c.h.b16 %v1853
    %v1936 = vunpack.c.l.b16 %v1854
    %v1937 = vunpack.c.h.b16 %v1854
    %v1938 = vunpack.c.l.b16 %v1855
    %v1939 = vunpack.c.h.b16 %v1855
    %v1940 = vunpack.c.l.b16 %v1856
    %v1941 = vunpack.c.h.b16 %v1856
    %v1942 = vunpack.c.l.b16 %v1857
    %v1943 = vunpack.c.h.b16 %v1857
    %v1944 = vunpack.c.l.b16 %v1858
    %v1945 = vunpack.c.h.b16 %v1858
    %v1946 = vunpack.c.l.b16 %v1859
    %v1947 = vunpack.c.h.b16 %v1859
    %v1948 = vunpack.c.l.b16 %v1860
    %v1949 = vunpack.c.h.b16 %v1860
    %v1950 = vunpack.c.l.b16 %v1861
    %v1951 = vunpack.c.h.b16 %v1861
    %v1952 = vunpack.c.l.b16 %v1862
    %v1953 = vunpack.c.h.b16 %v1862
    %v1954 = vunpack.c.l.b16 %v1863
    %v1955 = vunpack.c.h.b16 %v1863
    %v1956 = vunpack.c.l.b16 %v1864
    %v1957 = vunpack.c.h.b16 %v1864
    %v1958 = vunpack.c.l.b16 %v1865
    %v1959 = vunpack.c.h.b16 %v1865
    %v1960 = vunpack.c.l.b16 %v1866
    %v1961 = vunpack.c.h.b16 %v1866
    %v1962 = vunpack.c.l.b16 %v1867
    %v1963 = vunpack.c.h.b16 %v1867
    %v1964 = vunpack.c.l.b16 %v1868
    %v1965 = vunpack.c.h.b16 %v1868
    %v1966 = vunpack.c.l.b16 %v1869
    %v1967 = vunpack.c.h.b16 %v1869
    %v1968 = vunpack.c.l.b16 %v1870
    %v1969 = vunpack.c.h.b16 %v1870
    %v1970 = vunpack.c.l.b16 %v1871
    %v1971 = vunpack.c.h.b16 %v1871
    %v1972 = vunpack.c.l.b16 %v1872
    %v1973 = vunpack.c.h.b16 %v1872
    %v1974 = vunpack.c.l.b16 %v1873
    %v1975 = vunpack.c.h.b16 %v1873
    %v1976 = vunpack.c.l.b16 %v1874
    %v1977 = vunpack.c.h.b16 %v1874
    %v1978 = vunpack.c.l.b16 %v1875
    %v1979 = vunpack.c.h.b16 %v1875
    %v1980 = vunpack.c.l.b16 %v1876
    %v1981 = vunpack.c.h.b16 %v1876
    %v1982 = vunpack.c.l.b16 %v1877
    %v1983 = vunpack.c.h.b16 %v1877
    %v1984 = vunpack.c.l.b16 %v1878
    %v1985 = vunpack.c.h.b16 %v1878
    %v1986 = vunpack.c.l.b16 %v1879
    %v1987 = vunpack.c.h.b16 %v1879
    %v1988 = vunpack.c.l.b16 %v1880
    %v1989 = vunpack.c.h.b16 %v1880
    %v1990 = vpack.c.b16 %v1928, %v1926
    %v1991 = vpack.c.b16 %v1929, %v1927
    %v1992 = vpack.c.b16 %v1932, %v1930
    %v1993 = vpack.c.b16 %v1933, %v1931
    %v1994 = vpack.c.b16 %v1936, %v1934
    %v1995 = vpack.c.b16 %v1937, %v1935
    %v1996 = vpack.c.b16 %v1940, %v1938
    %v1997 = vpack.c.b16 %v1941, %v1939
    %v1998 = vpack.c.b16 %v1944, %v1942
    %v1999 = vpack.c.b16 %v1945, %v1943
    %v2000 = vpack.c.b16 %v1948, %v1946
    %v2001 = vpack.c.b16 %v1949, %v1947
    %v2002 = vpack.c.b16 %v1952, %v1950
    %v2003 = vpack.c.b16 %v1953, %v1951
    %v2004 = vpack.c.b16 %v1956, %v1954
    %v2005 = vpack.c.b16 %v1957, %v1955
    %v2006 = vpack.c.b16 %v1960, %v1958
    %v2007 = vpack.c.b16 %v1961, %v1959
    %v2008 = vpack.c.b16 %v1964, %v1962
    %v2009 = vpack.c.b16 %v1965, %v1963
    %v2010 = vpack.c.b16 %v1968, %v1966
    %v2011 = vpack.c.b16 %v1969, %v1967
    %v2012 = vpack.c.b16 %v1972, %v1970
    %v2013 = vpack.c.b16 %v1973, %v1971
    %v2014 = vpack.c.b16 %v1976, %v1974
    %v2015 = vpack.c.b16 %v1977, %v1975
    %v2016 = vpack.c.b16 %v1980, %v1978
    %v2017 = vpack.c.b16 %v1981, %v1979
    %v2018 = vpack.c.b16 %v1984, %v1982
    %v2019 = vpack.c.b16 %v1985, %v1983
    %v2020 = vpack.c.b16 %v1988, %v1986
    %v2021 = vpack.c.b16 %v1989, %v1987
    %2054 = vmatprep.subr.bf16.mxu0 %v2005
    %2055 = vmatpush1.bf16.msra.mxu0 %v2004
    %2056 = vmatprep.subr.bf16.mxu0 %v2003
    %2057 = vmatpush1.bf16.msra.mxu0 %v2002
    %2058 = vmatprep.subr.bf16.mxu0 %v2001
    %2059 = vmatpush1.bf16.msra.mxu0 %v2000
    %2060 = vmatprep.subr.bf16.mxu0 %v1999
    %2061 = vmatpush1.bf16.msra.mxu0 %v1998
    %2062 = vmatprep.subr.bf16.mxu0 %v1997
    %2063 = vmatpush1.bf16.msra.mxu0 %v1996
    %2064 = vmatprep.subr.bf16.mxu0 %v1995
    %2065 = vmatpush1.bf16.msra.mxu0 %v1994
    %2066 = vmatprep.subr.bf16.mxu0 %v1993
    %2067 = vmatpush1.bf16.msra.mxu0 %v1992
    %2068 = vmatprep.subr.bf16.mxu0 %v1991
    %2069 = vmatpush1.bf16.msra.mxu0 %v1990
    %2070 = vmatprep.subr.bf16.mxu0 %v2021
    %2071 = vmatpush2.bf16.msra.mxu0 %v2020
    %2072 = vmatprep.subr.bf16.mxu0 %v2019
    %2073 = vmatpush2.bf16.msra.mxu0 %v2018
    %2074 = vmatprep.subr.bf16.mxu0 %v2017
    %2075 = vmatpush2.bf16.msra.mxu0 %v2016
    %2076 = vmatprep.subr.bf16.mxu0 %v2015
    %2077 = vmatpush2.bf16.msra.mxu0 %v2014
    %2078 = vmatprep.subr.bf16.mxu0 %v2013
    %2079 = vmatpush2.bf16.msra.mxu0 %v2012
    %2080 = vmatprep.subr.bf16.mxu0 %v2011
    %2081 = vmatpush2.bf16.msra.mxu0 %v2010
    %2082 = vmatprep.subr.bf16.mxu0 %v2009
    %2083 = vmatpush2.bf16.msra.mxu0 %v2008
    %2084 = vmatprep.subr.bf16.mxu0 %v2007
    %2085 = vmatpush2.bf16.msra.mxu0 %v2006
    %2086 = vmatprep.mubr.bf16.mxu0 %v1817
    %2087 = vmatmul.mubr.bf16.gmra.mxu0 %v1816
    %v2088 = vpop.f32.mrf.mxu0
    %v2089 = vadd.f32 %v1887, %v2088
    %v2090 = vpop.f32.mrf.mxu0
    %v2091 = vadd.f32 %v1891, %v2090
    %v2092 = vpop.f32.mrf.mxu0
    %v2093 = vadd.f32 %v1887, %v2092
    %v2094 = vpop.f32.mrf.mxu0
    %v2095 = vadd.f32 %v1891, %v2094
    %2096 = vmatprep.mubr.bf16.mxu0 %v1819
    %2097 = vmatmul.mubr.bf16.gmra.mxu0 %v1818
    %v2098 = vpop.f32.mrf.mxu0
    %v2099 = vadd.f32 %v1887, %v2098
    %v2100 = vpop.f32.mrf.mxu0
    %v2101 = vadd.f32 %v1891, %v2100
    %v2102 = vpop.f32.mrf.mxu0
    %v2103 = vadd.f32 %v1887, %v2102
    %v2104 = vpop.f32.mrf.mxu0
    %v2105 = vadd.f32 %v1891, %v2104
    %2106 = vmatprep.mubr.bf16.mxu0 %v1821
    %2107 = vmatmul.mubr.bf16.gmra.mxu0 %v1820
    %v2108 = vpop.f32.mrf.mxu0
    %v2109 = vadd.f32 %v1887, %v2108
    %v2110 = vpop.f32.mrf.mxu0
    %v2111 = vadd.f32 %v1891, %v2110
    %v2112 = vpop.f32.mrf.mxu0
    %v2113 = vadd.f32 %v1887, %v2112
    %v2114 = vpop.f32.mrf.mxu0
    %v2115 = vadd.f32 %v1891, %v2114
    %2116 = vmatprep.mubr.bf16.mxu0 %v1823
    %2117 = vmatmul.mubr.bf16.gmra.mxu0 %v1822
    %v2118 = vpop.f32.mrf.mxu0
    %v2119 = vadd.f32 %v1887, %v2118
    %v2120 = vpop.f32.mrf.mxu0
    %v2121 = vadd.f32 %v1891, %v2120
    %v2122 = vpop.f32.mrf.mxu0
    %v2123 = vadd.f32 %v1887, %v2122
    %v2124 = vpop.f32.mrf.mxu0
    %v2125 = vadd.f32 %v1891, %v2124
    %2126 = vmatprep.mubr.bf16.mxu0 %v1825
    %2127 = vmatmul.mubr.bf16.gmra.mxu0 %v1824
    %v2128 = vpop.f32.mrf.mxu0
    %v2129 = vadd.f32 %v1887, %v2128
    %v2130 = vpop.f32.mrf.mxu0
    %v2131 = vadd.f32 %v1891, %v2130
    %v2132 = vpop.f32.mrf.mxu0
    %v2133 = vadd.f32 %v1887, %v2132
    %v2134 = vpop.f32.mrf.mxu0
    %v2135 = vadd.f32 %v1891, %v2134
    %2136 = vmatprep.mubr.bf16.mxu0 %v1827
    %2137 = vmatmul.mubr.bf16.gmra.mxu0 %v1826
    %v2138 = vpop.f32.mrf.mxu0
    %v2139 = vadd.f32 %v1887, %v2138
    %v2140 = vpop.f32.mrf.mxu0
    %v2141 = vadd.f32 %v1891, %v2140
    %v2142 = vpop.f32.mrf.mxu0
    %v2143 = vadd.f32 %v1887, %v2142
    %v2144 = vpop.f32.mrf.mxu0
    %v2145 = vadd.f32 %v1891, %v2144
    %2146 = vmatprep.mubr.bf16.mxu0 %v1829
    %2147 = vmatmul.mubr.bf16.gmra.mxu0 %v1828
    %v2148 = vpop.f32.mrf.mxu0
    %v2149 = vadd.f32 %v1887, %v2148
    %v2150 = vpop.f32.mrf.mxu0
    %v2151 = vadd.f32 %v1891, %v2150
    %v2152 = vpop.f32.mrf.mxu0
    %v2153 = vadd.f32 %v1887, %v2152
    %v2154 = vpop.f32.mrf.mxu0
    %v2155 = vadd.f32 %v1891, %v2154
    %2156 = vmatprep.mubr.bf16.mxu0 %v1831
    %2157 = vmatmul.mubr.bf16.gmra.mxu0 %v1830
    %v2158 = vpop.f32.mrf.mxu0
    %v2159 = vadd.f32 %v1887, %v2158
    %v2160 = vpop.f32.mrf.mxu0
    %v2161 = vadd.f32 %v1891, %v2160
    %v2162 = vpop.f32.mrf.mxu0
    %v2163 = vadd.f32 %v1887, %v2162
    %v2164 = vpop.f32.mrf.mxu0
    %v2165 = vadd.f32 %v1891, %v2164
    %2166 = vmatprep.mubr.bf16.mxu0 %v1833
    %2167 = vmatmul.mubr.bf16.gmra.mxu0 %v1832
    %v2168 = vpop.f32.mrf.mxu0
    %v2169 = vadd.f32 %v1887, %v2168
    %v2170 = vpop.f32.mrf.mxu0
    %v2171 = vadd.f32 %v1891, %v2170
    %v2172 = vpop.f32.mrf.mxu0
    %v2173 = vadd.f32 %v1887, %v2172
    %v2174 = vpop.f32.mrf.mxu0
    %v2175 = vadd.f32 %v1891, %v2174
    %2176 = vmatprep.mubr.bf16.mxu0 %v1835
    %2177 = vmatmul.mubr.bf16.gmra.mxu0 %v1834
    %v2178 = vpop.f32.mrf.mxu0
    %v2179 = vadd.f32 %v1887, %v2178
    %v2180 = vpop.f32.mrf.mxu0
    %v2181 = vadd.f32 %v1891, %v2180
    %v2182 = vpop.f32.mrf.mxu0
    %v2183 = vadd.f32 %v1887, %v2182
    %v2184 = vpop.f32.mrf.mxu0
    %v2185 = vadd.f32 %v1891, %v2184
    %2186 = vmatprep.mubr.bf16.mxu0 %v1837
    %2187 = vmatmul.mubr.bf16.gmra.mxu0 %v1836
    %v2188 = vpop.f32.mrf.mxu0
    %v2189 = vadd.f32 %v1887, %v2188
    %v2190 = vpop.f32.mrf.mxu0
    %v2191 = vadd.f32 %v1891, %v2190
    %v2192 = vpop.f32.mrf.mxu0
    %v2193 = vadd.f32 %v1887, %v2192
    %v2194 = vpop.f32.mrf.mxu0
    %v2195 = vadd.f32 %v1891, %v2194
    %2196 = vmatprep.mubr.bf16.mxu0 %v1839
    %2197 = vmatmul.mubr.bf16.gmra.mxu0 %v1838
    %v2198 = vpop.f32.mrf.mxu0
    %v2199 = vadd.f32 %v1887, %v2198
    %v2200 = vpop.f32.mrf.mxu0
    %v2201 = vadd.f32 %v1891, %v2200
    %v2202 = vpop.f32.mrf.mxu0
    %v2203 = vadd.f32 %v1887, %v2202
    %v2204 = vpop.f32.mrf.mxu0
    %v2205 = vadd.f32 %v1891, %v2204
    %2206 = vmatprep.mubr.bf16.mxu0 %v1841
    %2207 = vmatmul.mubr.bf16.gmra.mxu0 %v1840
    %v2208 = vpop.f32.mrf.mxu0
    %v2209 = vadd.f32 %v1887, %v2208
    %v2210 = vpop.f32.mrf.mxu0
    %v2211 = vadd.f32 %v1891, %v2210
    %v2212 = vpop.f32.mrf.mxu0
    %v2213 = vadd.f32 %v1887, %v2212
    %v2214 = vpop.f32.mrf.mxu0
    %v2215 = vadd.f32 %v1891, %v2214
    %2216 = vmatprep.mubr.bf16.mxu0 %v1843
    %2217 = vmatmul.mubr.bf16.gmra.mxu0 %v1842
    %v2218 = vpop.f32.mrf.mxu0
    %v2219 = vadd.f32 %v1887, %v2218
    %v2220 = vpop.f32.mrf.mxu0
    %v2221 = vadd.f32 %v1891, %v2220
    %v2222 = vpop.f32.mrf.mxu0
    %v2223 = vadd.f32 %v1887, %v2222
    %v2224 = vpop.f32.mrf.mxu0
    %v2225 = vadd.f32 %v1891, %v2224
    %2226 = vmatprep.mubr.bf16.mxu0 %v1845
    %2227 = vmatmul.mubr.bf16.gmra.mxu0 %v1844
    %v2228 = vpop.f32.mrf.mxu0
    %v2229 = vadd.f32 %v1887, %v2228
    %v2230 = vpop.f32.mrf.mxu0
    %v2231 = vadd.f32 %v1891, %v2230
    %v2232 = vpop.f32.mrf.mxu0
    %v2233 = vadd.f32 %v1887, %v2232
    %v2234 = vpop.f32.mrf.mxu0
    %v2235 = vadd.f32 %v1891, %v2234
    %2236 = vmatprep.mubr.bf16.mxu0 %v1847
    %2237 = vmatmul.mubr.bf16.gmra.mxu0 %v1846
    %v2238 = vpop.f32.mrf.mxu0
    %v2239 = vadd.f32 %v1887, %v2238
    %v2240 = vpop.f32.mrf.mxu0
    %v2241 = vadd.f32 %v1891, %v2240
    %v2242 = vpop.f32.mrf.mxu0
    %v2243 = vadd.f32 %v1887, %v2242
    %v2244 = vpop.f32.mrf.mxu0
    %v2245 = vadd.f32 %v1891, %v2244
    %2246 = vdwg.mxu0
    %v2247 = vmax.f32 %v2089, 0.0
    %v2248 = vmax.f32 %v2091, 0.0
    %v2249 = vmax.f32 %v2093, 0.0
    %v2250 = vmax.f32 %v2095, 0.0
    %v2251 = vmax.f32 %v2099, 0.0
    %v2252 = vmax.f32 %v2101, 0.0
    %v2253 = vmax.f32 %v2103, 0.0
    %v2254 = vmax.f32 %v2105, 0.0
    %v2255 = vmax.f32 %v2109, 0.0
    %v2256 = vmax.f32 %v2111, 0.0
    %v2257 = vmax.f32 %v2113, 0.0
    %v2258 = vmax.f32 %v2115, 0.0
    %v2259 = vmax.f32 %v2119, 0.0
    %v2260 = vmax.f32 %v2121, 0.0
    %v2261 = vmax.f32 %v2123, 0.0
    %v2262 = vmax.f32 %v2125, 0.0
    %v2263 = vmax.f32 %v2129, 0.0
    %v2264 = vmax.f32 %v2131, 0.0
    %v2265 = vmax.f32 %v2133, 0.0
    %v2266 = vmax.f32 %v2135, 0.0
    %v2267 = vmax.f32 %v2139, 0.0
    %v2268 = vmax.f32 %v2141, 0.0
    %v2269 = vmax.f32 %v2143, 0.0
    %v2270 = vmax.f32 %v2145, 0.0
    %v2271 = vmax.f32 %v2149, 0.0
    %v2272 = vmax.f32 %v2151, 0.0
    %v2273 = vmax.f32 %v2153, 0.0
    %v2274 = vmax.f32 %v2155, 0.0
    %v2275 = vmax.f32 %v2159, 0.0
    %v2276 = vmax.f32 %v2161, 0.0
    %v2277 = vmax.f32 %v2163, 0.0
    %v2278 = vmax.f32 %v2165, 0.0
    %v2279 = vmax.f32 %v2169, 0.0
    %v2280 = vmax.f32 %v2171, 0.0
    %v2281 = vmax.f32 %v2173, 0.0
    %v2282 = vmax.f32 %v2175, 0.0
    %v2283 = vmax.f32 %v2179, 0.0
    %v2284 = vmax.f32 %v2181, 0.0
    %v2285 = vmax.f32 %v2183, 0.0
    %v2286 = vmax.f32 %v2185, 0.0
    %v2287 = vmax.f32 %v2189, 0.0
    %v2288 = vmax.f32 %v2191, 0.0
    %v2289 = vmax.f32 %v2193, 0.0
    %v2290 = vmax.f32 %v2195, 0.0
    %v2291 = vmax.f32 %v2199, 0.0
    %v2292 = vmax.f32 %v2201, 0.0
    %v2293 = vmax.f32 %v2203, 0.0
    %v2294 = vmax.f32 %v2205, 0.0
    %v2295 = vmax.f32 %v2209, 0.0
    %v2296 = vmax.f32 %v2211, 0.0
    %v2297 = vmax.f32 %v2213, 0.0
    %v2298 = vmax.f32 %v2215, 0.0
    %v2299 = vmax.f32 %v2219, 0.0
    %v2300 = vmax.f32 %v2221, 0.0
    %v2301 = vmax.f32 %v2223, 0.0
    %v2302 = vmax.f32 %v2225, 0.0
    %v2303 = vmax.f32 %v2229, 0.0
    %v2304 = vmax.f32 %v2231, 0.0
    %v2305 = vmax.f32 %v2233, 0.0
    %v2306 = vmax.f32 %v2235, 0.0
    %v2307 = vmax.f32 %v2239, 0.0
    %v2308 = vmax.f32 %v2241, 0.0
    %v2309 = vmax.f32 %v2243, 0.0
    %v2310 = vmax.f32 %v2245, 0.0
    %v2311 = vpack.c.bf16 %v2249, %v2247
    %v2312 = vpack.c.bf16 %v2250, %v2248
    %v2313 = vpack.c.bf16 %v2253, %v2251
    %v2314 = vpack.c.bf16 %v2254, %v2252
    %v2315 = vpack.c.bf16 %v2257, %v2255
    %v2316 = vpack.c.bf16 %v2258, %v2256
    %v2317 = vpack.c.bf16 %v2261, %v2259
    %v2318 = vpack.c.bf16 %v2262, %v2260
    %v2319 = vpack.c.bf16 %v2265, %v2263
    %v2320 = vpack.c.bf16 %v2266, %v2264
    %v2321 = vpack.c.bf16 %v2269, %v2267
    %v2322 = vpack.c.bf16 %v2270, %v2268
    %v2323 = vpack.c.bf16 %v2273, %v2271
    %v2324 = vpack.c.bf16 %v2274, %v2272
    %v2325 = vpack.c.bf16 %v2277, %v2275
    %v2326 = vpack.c.bf16 %v2278, %v2276
    %v2327 = vpack.c.bf16 %v2281, %v2279
    %v2328 = vpack.c.bf16 %v2282, %v2280
    %v2329 = vpack.c.bf16 %v2285, %v2283
    %v2330 = vpack.c.bf16 %v2286, %v2284
    %v2331 = vpack.c.bf16 %v2289, %v2287
    %v2332 = vpack.c.bf16 %v2290, %v2288
    %v2333 = vpack.c.bf16 %v2293, %v2291
    %v2334 = vpack.c.bf16 %v2294, %v2292
    %v2335 = vpack.c.bf16 %v2297, %v2295
    %v2336 = vpack.c.bf16 %v2298, %v2296
    %v2337 = vpack.c.bf16 %v2301, %v2299
    %v2338 = vpack.c.bf16 %v2302, %v2300
    %v2339 = vpack.c.bf16 %v2305, %v2303
    %v2340 = vpack.c.bf16 %v2306, %v2304
    %v2341 = vpack.c.bf16 %v2309, %v2307
    %v2342 = vpack.c.bf16 %v2310, %v2308
    %v2375 = vunpack.c.l.b16 %v2311
    %v2376 = vunpack.c.l.b16 %v2312
    %v2377 = vunpack.c.h.b16 %v2311
    %v2378 = vunpack.c.h.b16 %v2312
    %v2379 = vunpack.c.l.b16 %v2313
    %v2380 = vunpack.c.l.b16 %v2314
    %v2381 = vunpack.c.h.b16 %v2313
    %v2382 = vunpack.c.h.b16 %v2314
    %v2383 = vunpack.c.l.b16 %v2315
    %v2384 = vunpack.c.l.b16 %v2316
    %v2385 = vunpack.c.h.b16 %v2315
    %v2386 = vunpack.c.h.b16 %v2316
    %v2387 = vunpack.c.l.b16 %v2317
    %v2388 = vunpack.c.l.b16 %v2318
    %v2389 = vunpack.c.h.b16 %v2317
    %v2390 = vunpack.c.h.b16 %v2318
    %v2391 = vunpack.c.l.b16 %v2319
    %v2392 = vunpack.c.l.b16 %v2320
    %v2393 = vunpack.c.h.b16 %v2319
    %v2394 = vunpack.c.h.b16 %v2320
    %v2395 = vunpack.c.l.b16 %v2321
    %v2396 = vunpack.c.l.b16 %v2322
    %v2397 = vunpack.c.h.b16 %v2321
    %v2398 = vunpack.c.h.b16 %v2322
    %v2399 = vunpack.c.l.b16 %v2323
    %v2400 = vunpack.c.l.b16 %v2324
    %v2401 = vunpack.c.h.b16 %v2323
    %v2402 = vunpack.c.h.b16 %v2324
    %v2403 = vunpack.c.l.b16 %v2325
    %v2404 = vunpack.c.l.b16 %v2326
    %v2405 = vunpack.c.h.b16 %v2325
    %v2406 = vunpack.c.h.b16 %v2326
    %v2407 = vunpack.c.l.b16 %v2327
    %v2408 = vunpack.c.l.b16 %v2328
    %v2409 = vunpack.c.h.b16 %v2327
    %v2410 = vunpack.c.h.b16 %v2328
    %v2411 = vunpack.c.l.b16 %v2329
    %v2412 = vunpack.c.l.b16 %v2330
    %v2413 = vunpack.c.h.b16 %v2329
    %v2414 = vunpack.c.h.b16 %v2330
    %v2415 = vunpack.c.l.b16 %v2331
    %v2416 = vunpack.c.l.b16 %v2332
    %v2417 = vunpack.c.h.b16 %v2331
    %v2418 = vunpack.c.h.b16 %v2332
    %v2419 = vunpack.c.l.b16 %v2333
    %v2420 = vunpack.c.l.b16 %v2334
    %v2421 = vunpack.c.h.b16 %v2333
    %v2422 = vunpack.c.h.b16 %v2334
    %v2423 = vunpack.c.l.b16 %v2335
    %v2424 = vunpack.c.l.b16 %v2336
    %v2425 = vunpack.c.h.b16 %v2335
    %v2426 = vunpack.c.h.b16 %v2336
    %v2427 = vunpack.c.l.b16 %v2337
    %v2428 = vunpack.c.l.b16 %v2338
    %v2429 = vunpack.c.h.b16 %v2337
    %v2430 = vunpack.c.h.b16 %v2338
    %v2431 = vunpack.c.l.b16 %v2339
    %v2432 = vunpack.c.l.b16 %v2340
    %v2433 = vunpack.c.h.b16 %v2339
    %v2434 = vunpack.c.h.b16 %v2340
    %v2435 = vunpack.c.l.b16 %v2341
    %v2436 = vunpack.c.l.b16 %v2342
    %v2437 = vunpack.c.h.b16 %v2341
    %v2438 = vunpack.c.h.b16 %v2342
    %v2439 = vpack.c.b16 %v2376, %v2375
    %v2440 = vpack.c.b16 %v2378, %v2377
    %v2441 = vpack.c.b16 %v2380, %v2379
    %v2442 = vpack.c.b16 %v2382, %v2381
    %v2443 = vpack.c.b16 %v2384, %v2383
    %v2444 = vpack.c.b16 %v2386, %v2385
    %v2445 = vpack.c.b16 %v2388, %v2387
    %v2446 = vpack.c.b16 %v2390, %v2389
    %v2447 = vpack.c.b16 %v2392, %v2391
    %v2448 = vpack.c.b16 %v2394, %v2393
    %v2449 = vpack.c.b16 %v2396, %v2395
    %v2450 = vpack.c.b16 %v2398, %v2397
    %v2451 = vpack.c.b16 %v2400, %v2399
    %v2452 = vpack.c.b16 %v2402, %v2401
    %v2453 = vpack.c.b16 %v2404, %v2403
    %v2454 = vpack.c.b16 %v2406, %v2405
    %v2455 = vpack.c.b16 %v2408, %v2407
    %v2456 = vpack.c.b16 %v2410, %v2409
    %v2457 = vpack.c.b16 %v2412, %v2411
    %v2458 = vpack.c.b16 %v2414, %v2413
    %v2459 = vpack.c.b16 %v2416, %v2415
    %v2460 = vpack.c.b16 %v2418, %v2417
    %v2461 = vpack.c.b16 %v2420, %v2419
    %v2462 = vpack.c.b16 %v2422, %v2421
    %v2463 = vpack.c.b16 %v2424, %v2423
    %v2464 = vpack.c.b16 %v2426, %v2425
    %v2465 = vpack.c.b16 %v2428, %v2427
    %v2466 = vpack.c.b16 %v2430, %v2429
    %v2467 = vpack.c.b16 %v2432, %v2431
    %v2468 = vpack.c.b16 %v2434, %v2433
    %v2469 = vpack.c.b16 %v2436, %v2435
    %v2470 = vpack.c.b16 %v2438, %v2437
    %2503 = vst [vmem:[#allocation2] sm:$0xff] %v2439
    %2504 = vst [vmem:[#allocation2 + $0x8] sm:$0xff] %v2440
    %2505 = vst [vmem:[#allocation2 + $0x10] sm:$0xff] %v2441
    %2506 = vst [vmem:[#allocation2 + $0x18] sm:$0xff] %v2442
    %2507 = vst [vmem:[#allocation2 + $0x20] sm:$0xff] %v2443
    %2508 = vst [vmem:[#allocation2 + $0x28] sm:$0xff] %v2444
    %2509 = vst [vmem:[#allocation2 + $0x30] sm:$0xff] %v2445
    %2510 = vst [vmem:[#allocation2 + $0x38] sm:$0xff] %v2446
    %2511 = vst [vmem:[#allocation2 + $0x40] sm:$0xff] %v2447
    %2512 = vst [vmem:[#allocation2 + $0x48] sm:$0xff] %v2448
    %2513 = vst [vmem:[#allocation2 + $0x50] sm:$0xff] %v2449
    %2514 = vst [vmem:[#allocation2 + $0x58] sm:$0xff] %v2450
    %2515 = vst [vmem:[#allocation2 + $0x60] sm:$0xff] %v2451
    %2516 = vst [vmem:[#allocation2 + $0x68] sm:$0xff] %v2452
    %2517 = vst [vmem:[#allocation2 + $0x70] sm:$0xff] %v2453
    %2518 = vst [vmem:[#allocation2 + $0x78] sm:$0xff] %v2454
    %2519 = vst [vmem:[#allocation2 + $0x80] sm:$0xff] %v2455
    %2520 = vst [vmem:[#allocation2 + $0x88] sm:$0xff] %v2456
    %2521 = vst [vmem:[#allocation2 + $0x90] sm:$0xff] %v2457
    %2522 = vst [vmem:[#allocation2 + $0x98] sm:$0xff] %v2458
    %2523 = vst [vmem:[#allocation2 + $0xa0] sm:$0xff] %v2459
    %2524 = vst [vmem:[#allocation2 + $0xa8] sm:$0xff] %v2460
    %2525 = vst [vmem:[#allocation2 + $0xb0] sm:$0xff] %v2461
    %2526 = vst [vmem:[#allocation2 + $0xb8] sm:$0xff] %v2462
    %2527 = vst [vmem:[#allocation2 + $0xc0] sm:$0xff] %v2463
    %2528 = vst [vmem:[#allocation2 + $0xc8] sm:$0xff] %v2464
    %2529 = vst [vmem:[#allocation2 + $0xd0] sm:$0xff] %v2465
    %2530 = vst [vmem:[#allocation2 + $0xd8] sm:$0xff] %v2466
    %2531 = vst [vmem:[#allocation2 + $0xe0] sm:$0xff] %v2467
    %2532 = vst [vmem:[#allocation2 + $0xe8] sm:$0xff] %v2468
    %2533 = vst [vmem:[#allocation2 + $0xf0] sm:$0xff] %v2469
    %2534 = vst [vmem:[#allocation2 + $0xf8] sm:$0xff] %v2470
    %v2535 = vld [vmem:[#allocation2] sm:$0xff]
    %v2536 = vld [vmem:[#allocation2 + $0x8] sm:$0xff]
    %v2537 = vld [vmem:[#allocation2 + $0x10] sm:$0xff]
    %v2538 = vld [vmem:[#allocation2 + $0x18] sm:$0xff]
    %v2539 = vld [vmem:[#allocation2 + $0x20] sm:$0xff]
    %v2540 = vld [vmem:[#allocation2 + $0x28] sm:$0xff]
    %v2541 = vld [vmem:[#allocation2 + $0x30] sm:$0xff]
    %v2542 = vld [vmem:[#allocation2 + $0x38] sm:$0xff]
    %v2543 = vld [vmem:[#allocation2 + $0x40] sm:$0xff]
    %v2544 = vld [vmem:[#allocation2 + $0x48] sm:$0xff]
    %v2545 = vld [vmem:[#allocation2 + $0x50] sm:$0xff]
    %v2546 = vld [vmem:[#allocation2 + $0x58] sm:$0xff]
    %v2547 = vld [vmem:[#allocation2 + $0x60] sm:$0xff]
    %v2548 = vld [vmem:[#allocation2 + $0x68] sm:$0xff]
    %v2549 = vld [vmem:[#allocation2 + $0x70] sm:$0xff]
    %v2550 = vld [vmem:[#allocation2 + $0x78] sm:$0xff]
    %v2551 = vld [vmem:[#allocation2 + $0x80] sm:$0xff]
    %v2552 = vld [vmem:[#allocation2 + $0x88] sm:$0xff]
    %v2553 = vld [vmem:[#allocation2 + $0x90] sm:$0xff]
    %v2554 = vld [vmem:[#allocation2 + $0x98] sm:$0xff]
    %v2555 = vld [vmem:[#allocation2 + $0xa0] sm:$0xff]
    %v2556 = vld [vmem:[#allocation2 + $0xa8] sm:$0xff]
    %v2557 = vld [vmem:[#allocation2 + $0xb0] sm:$0xff]
    %v2558 = vld [vmem:[#allocation2 + $0xb8] sm:$0xff]
    %v2559 = vld [vmem:[#allocation2 + $0xc0] sm:$0xff]
    %v2560 = vld [vmem:[#allocation2 + $0xc8] sm:$0xff]
    %v2561 = vld [vmem:[#allocation2 + $0xd0] sm:$0xff]
    %v2562 = vld [vmem:[#allocation2 + $0xd8] sm:$0xff]
    %v2563 = vld [vmem:[#allocation2 + $0xe0] sm:$0xff]
    %v2564 = vld [vmem:[#allocation2 + $0xe8] sm:$0xff]
    %v2565 = vld [vmem:[#allocation2 + $0xf0] sm:$0xff]
    %v2566 = vld [vmem:[#allocation2 + $0xf8] sm:$0xff]
    %v2599 = vunpack.c.l.b16 %v2535
    %v2600 = vunpack.c.h.b16 %v2535
    %v2601 = vunpack.c.l.b16 %v2536
    %v2602 = vunpack.c.h.b16 %v2536
    %v2603 = vunpack.c.l.b16 %v2537
    %v2604 = vunpack.c.h.b16 %v2537
    %v2605 = vunpack.c.l.b16 %v2538
    %v2606 = vunpack.c.h.b16 %v2538
    %v2607 = vunpack.c.l.b16 %v2539
    %v2608 = vunpack.c.h.b16 %v2539
    %v2609 = vunpack.c.l.b16 %v2540
    %v2610 = vunpack.c.h.b16 %v2540
    %v2611 = vunpack.c.l.b16 %v2541
    %v2612 = vunpack.c.h.b16 %v2541
    %v2613 = vunpack.c.l.b16 %v2542
    %v2614 = vunpack.c.h.b16 %v2542
    %v2615 = vunpack.c.l.b16 %v2543
    %v2616 = vunpack.c.h.b16 %v2543
    %v2617 = vunpack.c.l.b16 %v2544
    %v2618 = vunpack.c.h.b16 %v2544
    %v2619 = vunpack.c.l.b16 %v2545
    %v2620 = vunpack.c.h.b16 %v2545
    %v2621 = vunpack.c.l.b16 %v2546
    %v2622 = vunpack.c.h.b16 %v2546
    %v2623 = vunpack.c.l.b16 %v2547
    %v2624 = vunpack.c.h.b16 %v2547
    %v2625 = vunpack.c.l.b16 %v2548
    %v2626 = vunpack.c.h.b16 %v2548
    %v2627 = vunpack.c.l.b16 %v2549
    %v2628 = vunpack.c.h.b16 %v2549
    %v2629 = vunpack.c.l.b16 %v2550
    %v2630 = vunpack.c.h.b16 %v2550
    %v2631 = vunpack.c.l.b16 %v2551
    %v2632 = vunpack.c.h.b16 %v2551
    %v2633 = vunpack.c.l.b16 %v2552
    %v2634 = vunpack.c.h.b16 %v2552
    %v2635 = vunpack.c.l.b16 %v2553
    %v2636 = vunpack.c.h.b16 %v2553
    %v2637 = vunpack.c.l.b16 %v2554
    %v2638 = vunpack.c.h.b16 %v2554
    %v2639 = vunpack.c.l.b16 %v2555
    %v2640 = vunpack.c.h.b16 %v2555
    %v2641 = vunpack.c.l.b16 %v2556
    %v2642 = vunpack.c.h.b16 %v2556
    %v2643 = vunpack.c.l.b16 %v2557
    %v2644 = vunpack.c.h.b16 %v2557
    %v2645 = vunpack.c.l.b16 %v2558
    %v2646 = vunpack.c.h.b16 %v2558
    %v2647 = vunpack.c.l.b16 %v2559
    %v2648 = vunpack.c.h.b16 %v2559
    %v2649 = vunpack.c.l.b16 %v2560
    %v2650 = vunpack.c.h.b16 %v2560
    %v2651 = vunpack.c.l.b16 %v2561
    %v2652 = vunpack.c.h.b16 %v2561
    %v2653 = vunpack.c.l.b16 %v2562
    %v2654 = vunpack.c.h.b16 %v2562
    %v2655 = vunpack.c.l.b16 %v2563
    %v2656 = vunpack.c.h.b16 %v2563
    %v2657 = vunpack.c.l.b16 %v2564
    %v2658 = vunpack.c.h.b16 %v2564
    %v2659 = vunpack.c.l.b16 %v2565
    %v2660 = vunpack.c.h.b16 %v2565
    %v2661 = vunpack.c.l.b16 %v2566
    %v2662 = vunpack.c.h.b16 %v2566
    %v2663 = vpack.c.b16 %v2601, %v2599
    %v2664 = vpack.c.b16 %v2602, %v2600
    %v2665 = vpack.c.b16 %v2605, %v2603
    %v2666 = vpack.c.b16 %v2606, %v2604
    %v2667 = vpack.c.b16 %v2609, %v2607
    %v2668 = vpack.c.b16 %v2610, %v2608
    %v2669 = vpack.c.b16 %v2613, %v2611
    %v2670 = vpack.c.b16 %v2614, %v2612
    %v2671 = vpack.c.b16 %v2617, %v2615
    %v2672 = vpack.c.b16 %v2618, %v2616
    %v2673 = vpack.c.b16 %v2621, %v2619
    %v2674 = vpack.c.b16 %v2622, %v2620
    %v2675 = vpack.c.b16 %v2625, %v2623
    %v2676 = vpack.c.b16 %v2626, %v2624
    %v2677 = vpack.c.b16 %v2629, %v2627
    %v2678 = vpack.c.b16 %v2630, %v2628
    %v2679 = vpack.c.b16 %v2633, %v2631
    %v2680 = vpack.c.b16 %v2634, %v2632
    %v2681 = vpack.c.b16 %v2637, %v2635
    %v2682 = vpack.c.b16 %v2638, %v2636
    %v2683 = vpack.c.b16 %v2641, %v2639
    %v2684 = vpack.c.b16 %v2642, %v2640
    %v2685 = vpack.c.b16 %v2645, %v2643
    %v2686 = vpack.c.b16 %v2646, %v2644
    %v2687 = vpack.c.b16 %v2649, %v2647
    %v2688 = vpack.c.b16 %v2650, %v2648
    %v2689 = vpack.c.b16 %v2653, %v2651
    %v2690 = vpack.c.b16 %v2654, %v2652
    %v2691 = vpack.c.b16 %v2657, %v2655
    %v2692 = vpack.c.b16 %v2658, %v2656
    %v2693 = vpack.c.b16 %v2661, %v2659
    %v2694 = vpack.c.b16 %v2662, %v2660
    %2727 = vmatprep.subr.bf16.mxu0 %v2678
    %2728 = vmatpush1.bf16.msra.mxu0 %v2677
    %2729 = vmatprep.subr.bf16.mxu0 %v2676
    %2730 = vmatpush1.bf16.msra.mxu0 %v2675
    %2731 = vmatprep.subr.bf16.mxu0 %v2674
    %2732 = vmatpush1.bf16.msra.mxu0 %v2673
    %2733 = vmatprep.subr.bf16.mxu0 %v2672
    %2734 = vmatpush1.bf16.msra.mxu0 %v2671
    %2735 = vmatprep.subr.bf16.mxu0 %v2670
    %2736 = vmatpush1.bf16.msra.mxu0 %v2669
    %2737 = vmatprep.subr.bf16.mxu0 %v2668
    %2738 = vmatpush1.bf16.msra.mxu0 %v2667
    %2739 = vmatprep.subr.bf16.mxu0 %v2666
    %2740 = vmatpush1.bf16.msra.mxu0 %v2665
    %2741 = vmatprep.subr.bf16.mxu0 %v2664
    %2742 = vmatpush1.bf16.msra.mxu0 %v2663
    %2743 = vmatprep.subr.bf16.mxu0 %v2694
    %2744 = vmatpush2.bf16.msra.mxu0 %v2693
    %2745 = vmatprep.subr.bf16.mxu0 %v2692
    %2746 = vmatpush2.bf16.msra.mxu0 %v2691
    %2747 = vmatprep.subr.bf16.mxu0 %v2690
    %2748 = vmatpush2.bf16.msra.mxu0 %v2689
    %2749 = vmatprep.subr.bf16.mxu0 %v2688
    %2750 = vmatpush2.bf16.msra.mxu0 %v2687
    %2751 = vmatprep.subr.bf16.mxu0 %v2686
    %2752 = vmatpush2.bf16.msra.mxu0 %v2685
    %2753 = vmatprep.subr.bf16.mxu0 %v2684
    %2754 = vmatpush2.bf16.msra.mxu0 %v2683
    %2755 = vmatprep.subr.bf16.mxu0 %v2682
    %2756 = vmatpush2.bf16.msra.mxu0 %v2681
    %2757 = vmatprep.subr.bf16.mxu0 %v2680
    %2758 = vmatpush2.bf16.msra.mxu0 %v2679
    %2759 = vmatprep.mubr.bf16.mxu0 %v298
    %2760 = vmatmul.mubr.bf16.gmra.mxu0 %v297
    %v2761 = vpop.f32.mrf.mxu0
    %v2762 = vadd.f32 0.0, %v2761
    %v2763 = vpop.f32.mrf.mxu0
    %v2764 = vadd.f32 0.0, %v2763
    %v2765 = vpop.f32.mrf.mxu0
    %v2766 = vadd.f32 0.0, %v2765
    %v2767 = vpop.f32.mrf.mxu0
    %v2768 = vadd.f32 0.0, %v2767
    %2769 = vmatprep.mubr.bf16.mxu0 %v300
    %2770 = vmatmul.mubr.bf16.gmra.mxu0 %v299
    %v2771 = vpop.f32.mrf.mxu0
    %v2772 = vadd.f32 0.0, %v2771
    %v2773 = vpop.f32.mrf.mxu0
    %v2774 = vadd.f32 0.0, %v2773
    %v2775 = vpop.f32.mrf.mxu0
    %v2776 = vadd.f32 0.0, %v2775
    %v2777 = vpop.f32.mrf.mxu0
    %v2778 = vadd.f32 0.0, %v2777
    %2779 = vmatprep.mubr.bf16.mxu0 %v302
    %2780 = vmatmul.mubr.bf16.gmra.mxu0 %v301
    %v2781 = vpop.f32.mrf.mxu0
    %v2782 = vadd.f32 0.0, %v2781
    %v2783 = vpop.f32.mrf.mxu0
    %v2784 = vadd.f32 0.0, %v2783
    %v2785 = vpop.f32.mrf.mxu0
    %v2786 = vadd.f32 0.0, %v2785
    %v2787 = vpop.f32.mrf.mxu0
    %v2788 = vadd.f32 0.0, %v2787
    %2789 = vmatprep.mubr.bf16.mxu0 %v304
    %2790 = vmatmul.mubr.bf16.gmra.mxu0 %v303
    %v2791 = vpop.f32.mrf.mxu0
    %v2792 = vadd.f32 0.0, %v2791
    %v2793 = vpop.f32.mrf.mxu0
    %v2794 = vadd.f32 0.0, %v2793
    %v2795 = vpop.f32.mrf.mxu0
    %v2796 = vadd.f32 0.0, %v2795
    %v2797 = vpop.f32.mrf.mxu0
    %v2798 = vadd.f32 0.0, %v2797
    %2799 = vmatprep.mubr.bf16.mxu0 %v306
    %2800 = vmatmul.mubr.bf16.gmra.mxu0 %v305
    %v2801 = vpop.f32.mrf.mxu0
    %v2802 = vadd.f32 0.0, %v2801
    %v2803 = vpop.f32.mrf.mxu0
    %v2804 = vadd.f32 0.0, %v2803
    %v2805 = vpop.f32.mrf.mxu0
    %v2806 = vadd.f32 0.0, %v2805
    %v2807 = vpop.f32.mrf.mxu0
    %v2808 = vadd.f32 0.0, %v2807
    %2809 = vmatprep.mubr.bf16.mxu0 %v308
    %2810 = vmatmul.mubr.bf16.gmra.mxu0 %v307
    %v2811 = vpop.f32.mrf.mxu0
    %v2812 = vadd.f32 0.0, %v2811
    %v2813 = vpop.f32.mrf.mxu0
    %v2814 = vadd.f32 0.0, %v2813
    %v2815 = vpop.f32.mrf.mxu0
    %v2816 = vadd.f32 0.0, %v2815
    %v2817 = vpop.f32.mrf.mxu0
    %v2818 = vadd.f32 0.0, %v2817
    %2819 = vmatprep.mubr.bf16.mxu0 %v310
    %2820 = vmatmul.mubr.bf16.gmra.mxu0 %v309
    %v2821 = vpop.f32.mrf.mxu0
    %v2822 = vadd.f32 0.0, %v2821
    %v2823 = vpop.f32.mrf.mxu0
    %v2824 = vadd.f32 0.0, %v2823
    %v2825 = vpop.f32.mrf.mxu0
    %v2826 = vadd.f32 0.0, %v2825
    %v2827 = vpop.f32.mrf.mxu0
    %v2828 = vadd.f32 0.0, %v2827
    %2829 = vmatprep.mubr.bf16.mxu0 %v312
    %2830 = vmatmul.mubr.bf16.gmra.mxu0 %v311
    %v2831 = vpop.f32.mrf.mxu0
    %v2832 = vadd.f32 0.0, %v2831
    %v2833 = vpop.f32.mrf.mxu0
    %v2834 = vadd.f32 0.0, %v2833
    %v2835 = vpop.f32.mrf.mxu0
    %v2836 = vadd.f32 0.0, %v2835
    %v2837 = vpop.f32.mrf.mxu0
    %v2838 = vadd.f32 0.0, %v2837
    %2839 = vmatprep.mubr.bf16.mxu0 %v314
    %2840 = vmatmul.mubr.bf16.gmra.mxu0 %v313
    %v2841 = vpop.f32.mrf.mxu0
    %v2842 = vadd.f32 0.0, %v2841
    %v2843 = vpop.f32.mrf.mxu0
    %v2844 = vadd.f32 0.0, %v2843
    %v2845 = vpop.f32.mrf.mxu0
    %v2846 = vadd.f32 0.0, %v2845
    %v2847 = vpop.f32.mrf.mxu0
    %v2848 = vadd.f32 0.0, %v2847
    %2849 = vmatprep.mubr.bf16.mxu0 %v316
    %2850 = vmatmul.mubr.bf16.gmra.mxu0 %v315
    %v2851 = vpop.f32.mrf.mxu0
    %v2852 = vadd.f32 0.0, %v2851
    %v2853 = vpop.f32.mrf.mxu0
    %v2854 = vadd.f32 0.0, %v2853
    %v2855 = vpop.f32.mrf.mxu0
    %v2856 = vadd.f32 0.0, %v2855
    %v2857 = vpop.f32.mrf.mxu0
    %v2858 = vadd.f32 0.0, %v2857
    %2859 = vmatprep.mubr.bf16.mxu0 %v318
    %2860 = vmatmul.mubr.bf16.gmra.mxu0 %v317
    %v2861 = vpop.f32.mrf.mxu0
    %v2862 = vadd.f32 0.0, %v2861
    %v2863 = vpop.f32.mrf.mxu0
    %v2864 = vadd.f32 0.0, %v2863
    %v2865 = vpop.f32.mrf.mxu0
    %v2866 = vadd.f32 0.0, %v2865
    %v2867 = vpop.f32.mrf.mxu0
    %v2868 = vadd.f32 0.0, %v2867
    %2869 = vmatprep.mubr.bf16.mxu0 %v320
    %2870 = vmatmul.mubr.bf16.gmra.mxu0 %v319
    %v2871 = vpop.f32.mrf.mxu0
    %v2872 = vadd.f32 0.0, %v2871
    %v2873 = vpop.f32.mrf.mxu0
    %v2874 = vadd.f32 0.0, %v2873
    %v2875 = vpop.f32.mrf.mxu0
    %v2876 = vadd.f32 0.0, %v2875
    %v2877 = vpop.f32.mrf.mxu0
    %v2878 = vadd.f32 0.0, %v2877
    %2879 = vmatprep.mubr.bf16.mxu0 %v322
    %2880 = vmatmul.mubr.bf16.gmra.mxu0 %v321
    %v2881 = vpop.f32.mrf.mxu0
    %v2882 = vadd.f32 0.0, %v2881
    %v2883 = vpop.f32.mrf.mxu0
    %v2884 = vadd.f32 0.0, %v2883
    %v2885 = vpop.f32.mrf.mxu0
    %v2886 = vadd.f32 0.0, %v2885
    %v2887 = vpop.f32.mrf.mxu0
    %v2888 = vadd.f32 0.0, %v2887
    %2889 = vmatprep.mubr.bf16.mxu0 %v324
    %2890 = vmatmul.mubr.bf16.gmra.mxu0 %v323
    %v2891 = vpop.f32.mrf.mxu0
    %v2892 = vadd.f32 0.0, %v2891
    %v2893 = vpop.f32.mrf.mxu0
    %v2894 = vadd.f32 0.0, %v2893
    %v2895 = vpop.f32.mrf.mxu0
    %v2896 = vadd.f32 0.0, %v2895
    %v2897 = vpop.f32.mrf.mxu0
    %v2898 = vadd.f32 0.0, %v2897
    %2899 = vmatprep.mubr.bf16.mxu0 %v326
    %2900 = vmatmul.mubr.bf16.gmra.mxu0 %v325
    %v2901 = vpop.f32.mrf.mxu0
    %v2902 = vadd.f32 0.0, %v2901
    %v2903 = vpop.f32.mrf.mxu0
    %v2904 = vadd.f32 0.0, %v2903
    %v2905 = vpop.f32.mrf.mxu0
    %v2906 = vadd.f32 0.0, %v2905
    %v2907 = vpop.f32.mrf.mxu0
    %v2908 = vadd.f32 0.0, %v2907
    %2909 = vmatprep.mubr.bf16.mxu0 %v328
    %2910 = vmatmul.mubr.bf16.gmra.mxu0 %v327
    %v2911 = vpop.f32.mrf.mxu0
    %v2912 = vadd.f32 0.0, %v2911
    %v2913 = vpop.f32.mrf.mxu0
    %v2914 = vadd.f32 0.0, %v2913
    %v2915 = vpop.f32.mrf.mxu0
    %v2916 = vadd.f32 0.0, %v2915
    %v2917 = vpop.f32.mrf.mxu0
    %v2918 = vadd.f32 0.0, %v2917
    %2919 = vdwg.mxu0
    %v2920 = vpack.c.bf16 %v2766, %v2762
    %v2921 = vpack.c.bf16 %v2768, %v2764
    %v2922 = vpack.c.bf16 %v2776, %v2772
    %v2923 = vpack.c.bf16 %v2778, %v2774
    %v2924 = vpack.c.bf16 %v2786, %v2782
    %v2925 = vpack.c.bf16 %v2788, %v2784
    %v2926 = vpack.c.bf16 %v2796, %v2792
    %v2927 = vpack.c.bf16 %v2798, %v2794
    %v2928 = vpack.c.bf16 %v2806, %v2802
    %v2929 = vpack.c.bf16 %v2808, %v2804
    %v2930 = vpack.c.bf16 %v2816, %v2812
    %v2931 = vpack.c.bf16 %v2818, %v2814
    %v2932 = vpack.c.bf16 %v2826, %v2822
    %v2933 = vpack.c.bf16 %v2828, %v2824
    %v2934 = vpack.c.bf16 %v2836, %v2832
    %v2935 = vpack.c.bf16 %v2838, %v2834
    %v2936 = vpack.c.bf16 %v2846, %v2842
    %v2937 = vpack.c.bf16 %v2848, %v2844
    %v2938 = vpack.c.bf16 %v2856, %v2852
    %v2939 = vpack.c.bf16 %v2858, %v2854
    %v2940 = vpack.c.bf16 %v2866, %v2862
    %v2941 = vpack.c.bf16 %v2868, %v2864
    %v2942 = vpack.c.bf16 %v2876, %v2872
    %v2943 = vpack.c.bf16 %v2878, %v2874
    %v2944 = vpack.c.bf16 %v2886, %v2882
    %v2945 = vpack.c.bf16 %v2888, %v2884
    %v2946 = vpack.c.bf16 %v2896, %v2892
    %v2947 = vpack.c.bf16 %v2898, %v2894
    %v2948 = vpack.c.bf16 %v2906, %v2902
    %v2949 = vpack.c.bf16 %v2908, %v2904
    %v2950 = vpack.c.bf16 %v2916, %v2912
    %v2951 = vpack.c.bf16 %v2918, %v2914
    %s2952 = scalar_lea.vmem [#allocation8], 512
    %v2953 = vld [vmem:[%s2952] sm:$0xff]
    %v2954 = vld [vmem:[%s2952 + $0x8] sm:$0xff]
    %v2955 = vld [vmem:[%s2952 + $0x10] sm:$0xff]
    %v2956 = vld [vmem:[%s2952 + $0x18] sm:$0xff]
    %v2957 = vld [vmem:[%s2952 + $0x20] sm:$0xff]
    %v2958 = vld [vmem:[%s2952 + $0x28] sm:$0xff]
    %v2959 = vld [vmem:[%s2952 + $0x30] sm:$0xff]
    %v2960 = vld [vmem:[%s2952 + $0x38] sm:$0xff]
    %v2961 = vld [vmem:[%s2952 + $0x40] sm:$0xff]
    %v2962 = vld [vmem:[%s2952 + $0x48] sm:$0xff]
    %v2963 = vld [vmem:[%s2952 + $0x50] sm:$0xff]
    %v2964 = vld [vmem:[%s2952 + $0x58] sm:$0xff]
    %v2965 = vld [vmem:[%s2952 + $0x60] sm:$0xff]
    %v2966 = vld [vmem:[%s2952 + $0x68] sm:$0xff]
    %v2967 = vld [vmem:[%s2952 + $0x70] sm:$0xff]
    %v2968 = vld [vmem:[%s2952 + $0x78] sm:$0xff]
    %v2969 = vld [vmem:[%s2952 + $0x80] sm:$0xff]
    %v2970 = vld [vmem:[%s2952 + $0x88] sm:$0xff]
    %v2971 = vld [vmem:[%s2952 + $0x90] sm:$0xff]
    %v2972 = vld [vmem:[%s2952 + $0x98] sm:$0xff]
    %v2973 = vld [vmem:[%s2952 + $0xa0] sm:$0xff]
    %v2974 = vld [vmem:[%s2952 + $0xa8] sm:$0xff]
    %v2975 = vld [vmem:[%s2952 + $0xb0] sm:$0xff]
    %v2976 = vld [vmem:[%s2952 + $0xb8] sm:$0xff]
    %v2977 = vld [vmem:[%s2952 + $0xc0] sm:$0xff]
    %v2978 = vld [vmem:[%s2952 + $0xc8] sm:$0xff]
    %v2979 = vld [vmem:[%s2952 + $0xd0] sm:$0xff]
    %v2980 = vld [vmem:[%s2952 + $0xd8] sm:$0xff]
    %v2981 = vld [vmem:[%s2952 + $0xe0] sm:$0xff]
    %v2982 = vld [vmem:[%s2952 + $0xe8] sm:$0xff]
    %v2983 = vld [vmem:[%s2952 + $0xf0] sm:$0xff]
    %v2984 = vld [vmem:[%s2952 + $0xf8] sm:$0xff]
    %s2985 = scalar_lea.vmem [#allocation9], 4
    %v2986 = vld [vmem:[%s2985] sm:$0x3]
    %v2988 = vlaneseq
    %v2989 = vshrl.u32 %v2988, 7
    %v2990 = vsub.s32 0, %v2989
    %v2991 = vrot.slane %v2986, %v2990
    %v3025 = vunpack.c.l.b16 %v2953
    %v3026 = vunpack.c.h.b16 %v2953
    %v3027 = vunpack.c.l.b16 %v2954
    %v3028 = vunpack.c.h.b16 %v2954
    %v3029 = vunpack.c.l.b16 %v2955
    %v3030 = vunpack.c.h.b16 %v2955
    %v3031 = vunpack.c.l.b16 %v2956
    %v3032 = vunpack.c.h.b16 %v2956
    %v3033 = vunpack.c.l.b16 %v2957
    %v3034 = vunpack.c.h.b16 %v2957
    %v3035 = vunpack.c.l.b16 %v2958
    %v3036 = vunpack.c.h.b16 %v2958
    %v3037 = vunpack.c.l.b16 %v2959
    %v3038 = vunpack.c.h.b16 %v2959
    %v3039 = vunpack.c.l.b16 %v2960
    %v3040 = vunpack.c.h.b16 %v2960
    %v3041 = vunpack.c.l.b16 %v2961
    %v3042 = vunpack.c.h.b16 %v2961
    %v3043 = vunpack.c.l.b16 %v2962
    %v3044 = vunpack.c.h.b16 %v2962
    %v3045 = vunpack.c.l.b16 %v2963
    %v3046 = vunpack.c.h.b16 %v2963
    %v3047 = vunpack.c.l.b16 %v2964
    %v3048 = vunpack.c.h.b16 %v2964
    %v3049 = vunpack.c.l.b16 %v2965
    %v3050 = vunpack.c.h.b16 %v2965
    %v3051 = vunpack.c.l.b16 %v2966
    %v3052 = vunpack.c.h.b16 %v2966
    %v3053 = vunpack.c.l.b16 %v2967
    %v3054 = vunpack.c.h.b16 %v2967
    %v3055 = vunpack.c.l.b16 %v2968
    %v3056 = vunpack.c.h.b16 %v2968
    %v3057 = vunpack.c.l.b16 %v2969
    %v3058 = vunpack.c.h.b16 %v2969
    %v3059 = vunpack.c.l.b16 %v2970
    %v3060 = vunpack.c.h.b16 %v2970
    %v3061 = vunpack.c.l.b16 %v2971
    %v3062 = vunpack.c.h.b16 %v2971
    %v3063 = vunpack.c.l.b16 %v2972
    %v3064 = vunpack.c.h.b16 %v2972
    %v3065 = vunpack.c.l.b16 %v2973
    %v3066 = vunpack.c.h.b16 %v2973
    %v3067 = vunpack.c.l.b16 %v2974
    %v3068 = vunpack.c.h.b16 %v2974
    %v3069 = vunpack.c.l.b16 %v2975
    %v3070 = vunpack.c.h.b16 %v2975
    %v3071 = vunpack.c.l.b16 %v2976
    %v3072 = vunpack.c.h.b16 %v2976
    %v3073 = vunpack.c.l.b16 %v2977
    %v3074 = vunpack.c.h.b16 %v2977
    %v3075 = vunpack.c.l.b16 %v2978
    %v3076 = vunpack.c.h.b16 %v2978
    %v3077 = vunpack.c.l.b16 %v2979
    %v3078 = vunpack.c.h.b16 %v2979
    %v3079 = vunpack.c.l.b16 %v2980
    %v3080 = vunpack.c.h.b16 %v2980
    %v3081 = vunpack.c.l.b16 %v2981
    %v3082 = vunpack.c.h.b16 %v2981
    %v3083 = vunpack.c.l.b16 %v2982
    %v3084 = vunpack.c.h.b16 %v2982
    %v3085 = vunpack.c.l.b16 %v2983
    %v3086 = vunpack.c.h.b16 %v2983
    %v3087 = vunpack.c.l.b16 %v2984
    %v3088 = vunpack.c.h.b16 %v2984
    %v3089 = vpack.c.b16 %v3027, %v3025
    %v3090 = vpack.c.b16 %v3028, %v3026
    %v3091 = vpack.c.b16 %v3031, %v3029
    %v3092 = vpack.c.b16 %v3032, %v3030
    %v3093 = vpack.c.b16 %v3035, %v3033
    %v3094 = vpack.c.b16 %v3036, %v3034
    %v3095 = vpack.c.b16 %v3039, %v3037
    %v3096 = vpack.c.b16 %v3040, %v3038
    %v3097 = vpack.c.b16 %v3043, %v3041
    %v3098 = vpack.c.b16 %v3044, %v3042
    %v3099 = vpack.c.b16 %v3047, %v3045
    %v3100 = vpack.c.b16 %v3048, %v3046
    %v3101 = vpack.c.b16 %v3051, %v3049
    %v3102 = vpack.c.b16 %v3052, %v3050
    %v3103 = vpack.c.b16 %v3055, %v3053
    %v3104 = vpack.c.b16 %v3056, %v3054
    %v3105 = vpack.c.b16 %v3059, %v3057
    %v3106 = vpack.c.b16 %v3060, %v3058
    %v3107 = vpack.c.b16 %v3063, %v3061
    %v3108 = vpack.c.b16 %v3064, %v3062
    %v3109 = vpack.c.b16 %v3067, %v3065
    %v3110 = vpack.c.b16 %v3068, %v3066
    %v3111 = vpack.c.b16 %v3071, %v3069
    %v3112 = vpack.c.b16 %v3072, %v3070
    %v3113 = vpack.c.b16 %v3075, %v3073
    %v3114 = vpack.c.b16 %v3076, %v3074
    %v3115 = vpack.c.b16 %v3079, %v3077
    %v3116 = vpack.c.b16 %v3080, %v3078
    %v3117 = vpack.c.b16 %v3083, %v3081
    %v3118 = vpack.c.b16 %v3084, %v3082
    %v3119 = vpack.c.b16 %v3087, %v3085
    %v3120 = vpack.c.b16 %v3088, %v3086
    %3153 = vmatprep.subr.bf16.mxu0 %v3104
    %3154 = vmatpush1.bf16.msra.mxu0 %v3103
    %3155 = vmatprep.subr.bf16.mxu0 %v3102
    %3156 = vmatpush1.bf16.msra.mxu0 %v3101
    %3157 = vmatprep.subr.bf16.mxu0 %v3100
    %3158 = vmatpush1.bf16.msra.mxu0 %v3099
    %3159 = vmatprep.subr.bf16.mxu0 %v3098
    %3160 = vmatpush1.bf16.msra.mxu0 %v3097
    %3161 = vmatprep.subr.bf16.mxu0 %v3096
    %3162 = vmatpush1.bf16.msra.mxu0 %v3095
    %3163 = vmatprep.subr.bf16.mxu0 %v3094
    %3164 = vmatpush1.bf16.msra.mxu0 %v3093
    %3165 = vmatprep.subr.bf16.mxu0 %v3092
    %3166 = vmatpush1.bf16.msra.mxu0 %v3091
    %3167 = vmatprep.subr.bf16.mxu0 %v3090
    %3168 = vmatpush1.bf16.msra.mxu0 %v3089
    %3169 = vmatprep.subr.bf16.mxu0 %v3120
    %3170 = vmatpush2.bf16.msra.mxu0 %v3119
    %3171 = vmatprep.subr.bf16.mxu0 %v3118
    %3172 = vmatpush2.bf16.msra.mxu0 %v3117
    %3173 = vmatprep.subr.bf16.mxu0 %v3116
    %3174 = vmatpush2.bf16.msra.mxu0 %v3115
    %3175 = vmatprep.subr.bf16.mxu0 %v3114
    %3176 = vmatpush2.bf16.msra.mxu0 %v3113
    %3177 = vmatprep.subr.bf16.mxu0 %v3112
    %3178 = vmatpush2.bf16.msra.mxu0 %v3111
    %3179 = vmatprep.subr.bf16.mxu0 %v3110
    %3180 = vmatpush2.bf16.msra.mxu0 %v3109
    %3181 = vmatprep.subr.bf16.mxu0 %v3108
    %3182 = vmatpush2.bf16.msra.mxu0 %v3107
    %3183 = vmatprep.subr.bf16.mxu0 %v3106
    %3184 = vmatpush2.bf16.msra.mxu0 %v3105
    %3185 = vmatprep.mubr.bf16.mxu0 %v2921
    %3186 = vmatmul.mubr.bf16.gmra.mxu0 %v2920
    %v3187 = vpop.f32.mrf.mxu0
    %v3188 = vadd.f32 %v2991, %v3187
    %v3189 = vpop.f32.mrf.mxu0
    %v3190 = vpop.f32.mrf.mxu0
    %v3191 = vadd.f32 %v2991, %v3190
    %v3192 = vpop.f32.mrf.mxu0
    %3193 = vmatprep.mubr.bf16.mxu0 %v2923
    %3194 = vmatmul.mubr.bf16.gmra.mxu0 %v2922
    %v3195 = vpop.f32.mrf.mxu0
    %v3196 = vadd.f32 %v2991, %v3195
    %v3197 = vpop.f32.mrf.mxu0
    %v3198 = vpop.f32.mrf.mxu0
    %v3199 = vadd.f32 %v2991, %v3198
    %v3200 = vpop.f32.mrf.mxu0
    %3201 = vmatprep.mubr.bf16.mxu0 %v2925
    %3202 = vmatmul.mubr.bf16.gmra.mxu0 %v2924
    %v3203 = vpop.f32.mrf.mxu0
    %v3204 = vadd.f32 %v2991, %v3203
    %v3205 = vpop.f32.mrf.mxu0
    %v3206 = vpop.f32.mrf.mxu0
    %v3207 = vadd.f32 %v2991, %v3206
    %v3208 = vpop.f32.mrf.mxu0
    %3209 = vmatprep.mubr.bf16.mxu0 %v2927
    %3210 = vmatmul.mubr.bf16.gmra.mxu0 %v2926
    %v3211 = vpop.f32.mrf.mxu0
    %v3212 = vadd.f32 %v2991, %v3211
    %v3213 = vpop.f32.mrf.mxu0
    %v3214 = vpop.f32.mrf.mxu0
    %v3215 = vadd.f32 %v2991, %v3214
    %v3216 = vpop.f32.mrf.mxu0
    %3217 = vmatprep.mubr.bf16.mxu0 %v2929
    %3218 = vmatmul.mubr.bf16.gmra.mxu0 %v2928
    %v3219 = vpop.f32.mrf.mxu0
    %v3220 = vadd.f32 %v2991, %v3219
    %v3221 = vpop.f32.mrf.mxu0
    %v3222 = vpop.f32.mrf.mxu0
    %v3223 = vadd.f32 %v2991, %v3222
    %v3224 = vpop.f32.mrf.mxu0
    %3225 = vmatprep.mubr.bf16.mxu0 %v2931
    %3226 = vmatmul.mubr.bf16.gmra.mxu0 %v2930
    %v3227 = vpop.f32.mrf.mxu0
    %v3228 = vadd.f32 %v2991, %v3227
    %v3229 = vpop.f32.mrf.mxu0
    %v3230 = vpop.f32.mrf.mxu0
    %v3231 = vadd.f32 %v2991, %v3230
    %v3232 = vpop.f32.mrf.mxu0
    %3233 = vmatprep.mubr.bf16.mxu0 %v2933
    %3234 = vmatmul.mubr.bf16.gmra.mxu0 %v2932
    %v3235 = vpop.f32.mrf.mxu0
    %v3236 = vadd.f32 %v2991, %v3235
    %v3237 = vpop.f32.mrf.mxu0
    %v3238 = vpop.f32.mrf.mxu0
    %v3239 = vadd.f32 %v2991, %v3238
    %v3240 = vpop.f32.mrf.mxu0
    %3241 = vmatprep.mubr.bf16.mxu0 %v2935
    %3242 = vmatmul.mubr.bf16.gmra.mxu0 %v2934
    %v3243 = vpop.f32.mrf.mxu0
    %v3244 = vadd.f32 %v2991, %v3243
    %v3245 = vpop.f32.mrf.mxu0
    %v3246 = vpop.f32.mrf.mxu0
    %v3247 = vadd.f32 %v2991, %v3246
    %v3248 = vpop.f32.mrf.mxu0
    %3249 = vmatprep.mubr.bf16.mxu0 %v2937
    %3250 = vmatmul.mubr.bf16.gmra.mxu0 %v2936
    %v3251 = vpop.f32.mrf.mxu0
    %v3252 = vadd.f32 %v2991, %v3251
    %v3253 = vpop.f32.mrf.mxu0
    %v3254 = vpop.f32.mrf.mxu0
    %v3255 = vadd.f32 %v2991, %v3254
    %v3256 = vpop.f32.mrf.mxu0
    %3257 = vmatprep.mubr.bf16.mxu0 %v2939
    %3258 = vmatmul.mubr.bf16.gmra.mxu0 %v2938
    %v3259 = vpop.f32.mrf.mxu0
    %v3260 = vadd.f32 %v2991, %v3259
    %v3261 = vpop.f32.mrf.mxu0
    %v3262 = vpop.f32.mrf.mxu0
    %v3263 = vadd.f32 %v2991, %v3262
    %v3264 = vpop.f32.mrf.mxu0
    %3265 = vmatprep.mubr.bf16.mxu0 %v2941
    %3266 = vmatmul.mubr.bf16.gmra.mxu0 %v2940
    %v3267 = vpop.f32.mrf.mxu0
    %v3268 = vadd.f32 %v2991, %v3267
    %v3269 = vpop.f32.mrf.mxu0
    %v3270 = vpop.f32.mrf.mxu0
    %v3271 = vadd.f32 %v2991, %v3270
    %v3272 = vpop.f32.mrf.mxu0
    %3273 = vmatprep.mubr.bf16.mxu0 %v2943
    %3274 = vmatmul.mubr.bf16.gmra.mxu0 %v2942
    %v3275 = vpop.f32.mrf.mxu0
    %v3276 = vadd.f32 %v2991, %v3275
    %v3277 = vpop.f32.mrf.mxu0
    %v3278 = vpop.f32.mrf.mxu0
    %v3279 = vadd.f32 %v2991, %v3278
    %v3280 = vpop.f32.mrf.mxu0
    %3281 = vmatprep.mubr.bf16.mxu0 %v2945
    %3282 = vmatmul.mubr.bf16.gmra.mxu0 %v2944
    %v3283 = vpop.f32.mrf.mxu0
    %v3284 = vadd.f32 %v2991, %v3283
    %v3285 = vpop.f32.mrf.mxu0
    %v3286 = vpop.f32.mrf.mxu0
    %v3287 = vadd.f32 %v2991, %v3286
    %v3288 = vpop.f32.mrf.mxu0
    %3289 = vmatprep.mubr.bf16.mxu0 %v2947
    %3290 = vmatmul.mubr.bf16.gmra.mxu0 %v2946
    %v3291 = vpop.f32.mrf.mxu0
    %v3292 = vadd.f32 %v2991, %v3291
    %v3293 = vpop.f32.mrf.mxu0
    %v3294 = vpop.f32.mrf.mxu0
    %v3295 = vadd.f32 %v2991, %v3294
    %v3296 = vpop.f32.mrf.mxu0
    %3297 = vmatprep.mubr.bf16.mxu0 %v2949
    %3298 = vmatmul.mubr.bf16.gmra.mxu0 %v2948
    %v3299 = vpop.f32.mrf.mxu0
    %v3300 = vadd.f32 %v2991, %v3299
    %v3301 = vpop.f32.mrf.mxu0
    %v3302 = vpop.f32.mrf.mxu0
    %v3303 = vadd.f32 %v2991, %v3302
    %v3304 = vpop.f32.mrf.mxu0
    %3305 = vmatprep.mubr.bf16.mxu0 %v2951
    %3306 = vmatmul.mubr.bf16.gmra.mxu0 %v2950
    %v3307 = vpop.f32.mrf.mxu0
    %v3308 = vadd.f32 %v2991, %v3307
    %v3309 = vpop.f32.mrf.mxu0
    %v3310 = vpop.f32.mrf.mxu0
    %v3311 = vadd.f32 %v2991, %v3310
    %v3312 = vpop.f32.mrf.mxu0
    %3313 = vdwg.mxu0
    %3314 = vst [vmem:[#allocation11] sm:$0xff] %v3188
    %3315 = vst [vmem:[#allocation11 + $0x8] sm:$0xff] %v3191
    %3316 = vst [vmem:[#allocation11 + $0x10] sm:$0xff] %v3196
    %3317 = vst [vmem:[#allocation11 + $0x18] sm:$0xff] %v3199
    %3318 = vst [vmem:[#allocation11 + $0x20] sm:$0xff] %v3204
    %3319 = vst [vmem:[#allocation11 + $0x28] sm:$0xff] %v3207
    %3320 = vst [vmem:[#allocation11 + $0x30] sm:$0xff] %v3212
    %3321 = vst [vmem:[#allocation11 + $0x38] sm:$0xff] %v3215
    %3322 = vst [vmem:[#allocation11 + $0x40] sm:$0xff] %v3220
    %3323 = vst [vmem:[#allocation11 + $0x48] sm:$0xff] %v3223
    %3324 = vst [vmem:[#allocation11 + $0x50] sm:$0xff] %v3228
    %3325 = vst [vmem:[#allocation11 + $0x58] sm:$0xff] %v3231
    %3326 = vst [vmem:[#allocation11 + $0x60] sm:$0xff] %v3236
    %3327 = vst [vmem:[#allocation11 + $0x68] sm:$0xff] %v3239
    %3328 = vst [vmem:[#allocation11 + $0x70] sm:$0xff] %v3244
    %3329 = vst [vmem:[#allocation11 + $0x78] sm:$0xff] %v3247
    %3330 = vst [vmem:[#allocation11 + $0x80] sm:$0xff] %v3252
    %3331 = vst [vmem:[#allocation11 + $0x88] sm:$0xff] %v3255
    %3332 = vst [vmem:[#allocation11 + $0x90] sm:$0xff] %v3260
    %3333 = vst [vmem:[#allocation11 + $0x98] sm:$0xff] %v3263
    %3334 = vst [vmem:[#allocation11 + $0xa0] sm:$0xff] %v3268
    %3335 = vst [vmem:[#allocation11 + $0xa8] sm:$0xff] %v3271
    %3336 = vst [vmem:[#allocation11 + $0xb0] sm:$0xff] %v3276
    %3337 = vst [vmem:[#allocation11 + $0xb8] sm:$0xff] %v3279
    %3338 = vst [vmem:[#allocation11 + $0xc0] sm:$0xff] %v3284
    %3339 = vst [vmem:[#allocation11 + $0xc8] sm:$0xff] %v3287
    %3340 = vst [vmem:[#allocation11 + $0xd0] sm:$0xff] %v3292
    %3341 = vst [vmem:[#allocation11 + $0xd8] sm:$0xff] %v3295
    %3342 = vst [vmem:[#allocation11 + $0xe0] sm:$0xff] %v3300
    %3343 = vst [vmem:[#allocation11 + $0xe8] sm:$0xff] %v3303
    %3344 = vst [vmem:[#allocation11 + $0xf0] sm:$0xff] %v3308
    %3345 = vst [vmem:[#allocation11 + $0xf8] sm:$0xff] %v3311
    // Predicated region
    $region34: #{tpu_custom_call.1} parent=1 // pred_check
      _
    $region35: #{tpu_custom_call.1} parent=1 // pred_check_branch
      %3347 = sbr.rel (0) target = $region37
    $region36: #{tpu_custom_call.1} parent=1 // pred_region
      %s3349 = ssub.s32 4096, 4096
      %3350 = vsyncadd [#allocation5], %s3349
      %s3351 = sshll.u32 [#allocation11], 4
      %s3352 = int_to_ptr.vmem [resolvable:$true] %s3351
      %3357 = dma.vmem_to_hbm [thread:$0]  %s3352, 4096, %s4, [#allocation5], 128, 128, 8
    $region37: #{tpu_custom_call.1} parent=1 // pred_fallthru
      _
    // Predicated region
    $region38: #{tpu_custom_call.1} parent=1 // pred_check
      _
    $region39: #{tpu_custom_call.1} parent=1 // pred_check_branch
      %3359 = sbr.rel (0) target = $region41
    $region40: #{tpu_custom_call.1} parent=1 // pred_region
      %3360 = dma.done [#allocation5], 4096
    $region41: #{tpu_custom_call.1} parent=1 // pred_fallthru
      _
    %3361 = vsyncpa [#allocation4], 1
    %3362 = vsyncpa [#allocation7], 1
    %3363 = vsyncpa [#allocation10], 1
    %3364 = vsyncpa [#allocation5], 1

</llo_original>
